<compile_context>
chip_gen: v5e
topology: v5e:2x2
jax: 0.10.0
libtpu: 0.0.40
codegen_flags: <defaults>
</compile_context>

<pallas_src>
import functools

import jax
import jax.numpy as jnp
from jax.experimental import pallas as pl
from jax.experimental.pallas import tpu as pltpu

LANE = 128


# ---------------------------------------------------------------------------
# Fused kernel: per batch element, all heads, projections + attention + out.
# ---------------------------------------------------------------------------
def _fused_mha_kernel(q_ref, k_ref, v_ref,
                      wq_ref, bq_ref, wk_ref, bk_ref, wo_ref, bo_ref,
                      o_ref, *, num_heads, nk_valid, scale):
    f32 = jnp.float32
    q_in = q_ref[...]   # (Cq, Nqp)
    k_in = k_ref[...]   # (Ck, Nkp)
    v_in = v_ref[...]   # (Cv, Nkp)

    nqp = q_in.shape[-1]
    nkp = k_in.shape[-1]
    cout = o_ref.shape[0]

    # Key-padding mask, hoisted out of the head loop (same for every head).
    need_mask = nk_valid < nkp
    if need_mask:
        key_pad = jax.lax.broadcasted_iota(jnp.int32, (nkp, nqp), 0) >= nk_valid

    acc = jnp.zeros((cout, nqp), f32)
    for h in range(num_heads):  # unrolled: tiny tiles, one straight-line window
        # 1x1 conv projections for this head; scale folded into q (D*Nq elems,
        # not Nk*Nq).
        qh = (jnp.dot(wq_ref[h], q_in, preferred_element_type=f32)
              + bq_ref[h]) * scale                                # (D, Nqp)
        kh = jnp.dot(wk_ref[h], k_in, preferred_element_type=f32) + bk_ref[h]
        # NOTE: values intentionally projected with the *key* projection
        # weights, matching the reference PyTorch module.
        vh = jnp.dot(wk_ref[h], v_in, preferred_element_type=f32) + bk_ref[h]

        # score[k, q] = sum_d kh[d, k] * qh[d, q]   (no materialized transpose)
        score = jax.lax.dot_general(
            kh, qh, dimension_numbers=(((0,), (0,)), ((), ())),
            preferred_element_type=f32)                           # (Nkp, Nqp)
        if need_mask:
            score = jnp.where(key_pad, jnp.float32(-1e30), score)

        # Softmax over keys (axis 0); normalization via EUP reciprocal.
        score = score - jnp.max(score, axis=0, keepdims=True)
        e = jnp.exp(score)
        w = e * pl.reciprocal(jnp.sum(e, axis=0, keepdims=True), approx=True)

        oh = jnp.dot(vh, w, preferred_element_type=f32)           # (D, Nqp)
        # Output projection folded into the head loop (accumulate, no concat).
        acc = acc + jnp.dot(wo_ref[h], oh, preferred_element_type=f32)

    o_ref[...] = (acc + bo_ref[...]).astype(o_ref.dtype)


# ---------------------------------------------------------------------------
# Module wrapper
# ---------------------------------------------------------------------------
def init_params(key, query_channels, key_channels, value_channels,
                total_hidden_channels, out_channels):
    ks = jax.random.split(key, 8)

    def conv_init(kw, kb, cout, cin):
        bound = 1.0 / (cin ** 0.5)  # PyTorch Conv1d default init bound (k=1)
        w = jax.random.uniform(kw, (cout, cin), jnp.float32, -bound, bound)
        b = jax.random.uniform(kb, (cout,), jnp.float32, -bound, bound)
        return w, b

    wq, bq = conv_init(ks[0], ks[1], total_hidden_channels, query_channels)
    wk, bk = conv_init(ks[2], ks[3], total_hidden_channels, key_channels)
    # projection_value exists in the module but is unused in its forward (bug
    # reproduced): keep the params for parity, they are never passed to the kernel.
    wv, bv = conv_init(ks[4], ks[5], total_hidden_channels, value_channels)
    wo, bo = conv_init(ks[6], ks[7], out_channels, total_hidden_channels)
    return dict(wq=wq, bq=bq, wk=wk, bk=bk, wv=wv, bv=bv, wo=wo, bo=bo)


def multihead_attention_forward(params, queries, keys, values, num_heads):
    B, Cq, Nq = queries.shape
    Ck, Nk = keys.shape[1], keys.shape[2]
    Cv = values.shape[1]
    assert keys.shape[-1] == values.shape[-1]
    TH = params["wq"].shape[0]
    assert TH % num_heads == 0
    D = TH // num_heads
    Cout = params["wo"].shape[0]
    scale = float(D) ** (-0.5)

    # Lane-dense padding of the sequence dims (masked stores -> full vst).
    Nqp = ((Nq + LANE - 1) // LANE) * LANE
    Nkp = ((Nk + LANE - 1) // LANE) * LANE
    q_pad = jnp.pad(queries, ((0, 0), (0, 0), (0, Nqp - Nq)))
    k_pad = jnp.pad(keys, ((0, 0), (0, 0), (0, Nkp - Nk)))
    v_pad = jnp.pad(values, ((0, 0), (0, 0), (0, Nkp - Nk)))

    # Pre-split weights per head outside the kernel (no in-kernel reshapes).
    wq3 = params["wq"].reshape(num_heads, D, Cq)
    bq3 = params["bq"].reshape(num_heads, D, 1)
    wk3 = params["wk"].reshape(num_heads, D, Ck)
    bk3 = params["bk"].reshape(num_heads, D, 1)
    wo3 = params["wo"].reshape(Cout, num_heads, D).transpose(1, 0, 2)  # (H, Cout, D)
    bo2 = params["bo"].reshape(Cout, 1)

    kern = functools.partial(_fused_mha_kernel, num_heads=num_heads,
                             nk_valid=Nk, scale=scale)

    out = pl.pallas_call(
        kern,
        out_shape=jax.ShapeDtypeStruct((B, Cout, Nqp), jnp.float32),
        grid=(B,),
        in_specs=[
            pl.BlockSpec((None, Cq, Nqp), lambda b: (b, 0, 0)),
            pl.BlockSpec((None, Ck, Nkp), lambda b: (b, 0, 0)),
            pl.BlockSpec((None, Cv, Nkp), lambda b: (b, 0, 0)),
            pl.BlockSpec((num_heads, D, Cq), lambda b: (0, 0, 0)),
            pl.BlockSpec((num_heads, D, 1), lambda b: (0, 0, 0)),
            pl.BlockSpec((num_heads, D, Ck), lambda b: (0, 0, 0)),
            pl.BlockSpec((num_heads, D, 1), lambda b: (0, 0, 0)),
            pl.BlockSpec((num_heads, Cout, D), lambda b: (0, 0, 0)),
            pl.BlockSpec((Cout, 1), lambda b: (0, 0)),
        ],
        out_specs=pl.BlockSpec((None, Cout, Nqp), lambda b: (b, 0, 0)),
        compiler_params=pltpu.CompilerParams(dimension_semantics=("parallel",)),
    )(q_pad, k_pad, v_pad, wq3, bq3, wk3, bk3, wo3, bo2)

    return out[:, :, :Nq]


# ---------------------------------------------------------------------------
# Pure-JAX reference (mirrors the PyTorch forward) for a correctness check.
# ---------------------------------------------------------------------------
def _reference_forward(params, queries, keys, values, num_heads):
    def conv(x, w, b):
        return jnp.einsum("oc,bcn->bon", w, x) + b[None, :, None]

    B, Nq = queries.shape[0], queries.shape[-1]
    Nk = keys.shape[-1]
    q = conv(queries, params["wq"], params["bq"]).reshape(B, num_heads, -1, Nq)
    k = conv(keys, params["wk"], params["bk"]).reshape(B, num_heads, -1, Nk)
    v = conv(values, params["wk"], params["bk"]).reshape(B, num_heads, -1, Nk)
    hidden = q.shape[2]
    score = jnp.einsum("bhdk,bhdq->bhkq", k, q) * hidden ** (-0.5)
    w = jax.nn.softmax(score, axis=2)
    o = jnp.einsum("bhdk,bhkq->bhdq", v, w).reshape(B, num_heads * hidden, Nq)
    return conv(o, params["wo"], params["bo"])


if __name__ == "__main__":
    # Small shapes consistent with the module.
    B = 2
    QUERY_CH = 4
    KEY_CH = 4
    VALUE_CH = 4          # must equal KEY_CH (module projects values with projection_key)
    TOTAL_HIDDEN = 32
    OUT_CH = 4
    NUM_HEADS = 8
    NQ = 16
    NK = 16

    root = jax.random.PRNGKey(0)
    kp, kq, kk, kv = jax.random.split(root, 4)
    params = init_params(kp, QUERY_CH, KEY_CH, VALUE_CH, TOTAL_HIDDEN, OUT_CH)

    queries = jax.random.normal(kq, (B, QUERY_CH, NQ), jnp.float32)
    keys = jax.random.normal(kk, (B, KEY_CH, NK), jnp.float32)
    values = jax.random.normal(kv, (B, VALUE_CH, NK), jnp.float32)

    fwd = jax.jit(multihead_attention_forward, static_argnums=(4,))
    out = fwd(params, queries, keys, values, NUM_HEADS)
    out = jax.block_until_ready(out)

    ref = _reference_forward(params, queries, keys, values, NUM_HEADS)
    assert out.shape == (B, OUT_CH, NQ), out.shape
    # Tolerance accounts for the approx (EUP) reciprocal in the softmax.
    assert jnp.allclose(out, ref, atol=3e-3, rtol=3e-3), (
        "mismatch vs reference: max abs err = "
        f"{float(jnp.max(jnp.abs(out - ref)))}")

    print("KERNEL_OK")
</pallas_src>

<mosaic_0001>
module attributes {stable_mosaic.version = 11 : i64} {
  func.func @_fused_mha_kernel(%arg0: i32, %arg1: memref<1x4x128xf32, #tpu.memory_space<vmem>>, %arg2: memref<1x4x128xf32, #tpu.memory_space<vmem>>, %arg3: memref<1x4x128xf32, #tpu.memory_space<vmem>>, %arg4: memref<8x4x4xf32, #tpu.memory_space<vmem>>, %arg5: memref<8x4x1xf32, #tpu.memory_space<vmem>>, %arg6: memref<8x4x4xf32, #tpu.memory_space<vmem>>, %arg7: memref<8x4x1xf32, #tpu.memory_space<vmem>>, %arg8: memref<8x4x4xf32, #tpu.memory_space<vmem>>, %arg9: memref<4x1xf32, #tpu.memory_space<vmem>>, %arg10: memref<1x4x128xf32, #tpu.memory_space<vmem>>) attributes {dimension_semantics = [#tpu.dimension_semantics<parallel>], iteration_bounds = array<i64: 2>, scalar_prefetch = 0 : i64, scratch_operands = 0 : i64, tpu.core_type = #tpu.core_type<tc>, window_params = [{transform_indices = @transform_0, window_bounds = array<i64: 1, 4, 128>}, {transform_indices = @transform_1, window_bounds = array<i64: 1, 4, 128>}, {transform_indices = @transform_2, window_bounds = array<i64: 1, 4, 128>}, {pipeline_mode = #tpu.pipeline_mode<synchronous>, transform_indices = @transform_3, window_bounds = array<i64: 8, 4, 4>}, {pipeline_mode = #tpu.pipeline_mode<synchronous>, transform_indices = @transform_4, window_bounds = array<i64: 8, 4, 1>}, {pipeline_mode = #tpu.pipeline_mode<synchronous>, transform_indices = @transform_5, window_bounds = array<i64: 8, 4, 4>}, {pipeline_mode = #tpu.pipeline_mode<synchronous>, transform_indices = @transform_6, window_bounds = array<i64: 8, 4, 1>}, {pipeline_mode = #tpu.pipeline_mode<synchronous>, transform_indices = @transform_7, window_bounds = array<i64: 8, 4, 4>}, {pipeline_mode = #tpu.pipeline_mode<synchronous>, transform_indices = @transform_8, window_bounds = array<i64: 4, 1>}, {transform_indices = @transform_9, window_bounds = array<i64: 1, 4, 128>}]} {
    %c0 = arith.constant 0 : index
    %c0_0 = arith.constant 0 : index
    %c0_1 = arith.constant 0 : index
    %0 = vector.load %arg1[%c0, %c0_0, %c0_1] : memref<1x4x128xf32, #tpu.memory_space<vmem>>, vector<1x4x128xf32>
    %1 = vector.shape_cast %0 : vector<1x4x128xf32> to vector<4x128xf32>
    %c0_2 = arith.constant 0 : index
    %c0_3 = arith.constant 0 : index
    %c0_4 = arith.constant 0 : index
    %2 = vector.load %arg2[%c0_2, %c0_3, %c0_4] : memref<1x4x128xf32, #tpu.memory_space<vmem>>, vector<1x4x128xf32>
    %3 = vector.shape_cast %2 : vector<1x4x128xf32> to vector<4x128xf32>
    %c0_5 = arith.constant 0 : index
    %c0_6 = arith.constant 0 : index
    %c0_7 = arith.constant 0 : index
    %4 = vector.load %arg3[%c0_5, %c0_6, %c0_7] : memref<1x4x128xf32, #tpu.memory_space<vmem>>, vector<1x4x128xf32>
    %5 = vector.shape_cast %4 : vector<1x4x128xf32> to vector<4x128xf32>
    %6 = tpu.iota {dimensions = array<i32: 0>} : vector<128x128xi32>
    %c16_i32 = arith.constant 16 : i32
    %7 = vector.broadcast %c16_i32 : i32 to vector<128x128xi32>
    %8 = arith.cmpi sge, %6, %7 : vector<128x128xi32>
    %cst = arith.constant 0.000000e+00 : f32
    %9 = vector.broadcast %cst : f32 to vector<4x128xf32>
    %c0_8 = arith.constant 0 : index
    %c0_9 = arith.constant 0 : index
    %c0_10 = arith.constant 0 : index
    %10 = vector.load %arg4[%c0_8, %c0_9, %c0_10] : memref<8x4x4xf32, #tpu.memory_space<vmem>>, vector<1x4x4xf32>
    %11 = vector.shape_cast %10 : vector<1x4x4xf32> to vector<4x4xf32>
    %cst_11 = arith.constant dense<0.000000e+00> : vector<4x128xf32>
    %12 = tpu.matmul %11, %1, %cst_11 {dimension_numbers = #tpu.dot_dimension_numbers<[1], [0], [0], [1], [0, 0, 1, 1], [], []>} : vector<4x4xf32>, vector<4x128xf32>, vector<4x128xf32> -> vector<4x128xf32>
    %c0_12 = arith.constant 0 : index
    %c0_13 = arith.constant 0 : index
    %c0_14 = arith.constant 0 : index
    %13 = vector.load %arg5[%c0_12, %c0_13, %c0_14] : memref<8x4x1xf32, #tpu.memory_space<vmem>>, vector<1x4x1xf32>
    %14 = vector.shape_cast %13 : vector<1x4x1xf32> to vector<4x1xf32>
    %15 = vector.broadcast %14 : vector<4x1xf32> to vector<4x128xf32>
    %16 = arith.addf %12, %15 : vector<4x128xf32>
    %cst_15 = arith.constant 5.000000e-01 : f32
    %17 = vector.broadcast %cst_15 : f32 to vector<4x128xf32>
    %18 = arith.mulf %16, %17 : vector<4x128xf32>
    %c0_16 = arith.constant 0 : index
    %c0_17 = arith.constant 0 : index
    %c0_18 = arith.constant 0 : index
    %19 = vector.load %arg6[%c0_16, %c0_17, %c0_18] : memref<8x4x4xf32, #tpu.memory_space<vmem>>, vector<1x4x4xf32>
    %20 = vector.shape_cast %19 : vector<1x4x4xf32> to vector<4x4xf32>
    %cst_19 = arith.constant dense<0.000000e+00> : vector<4x128xf32>
    %21 = tpu.matmul %20, %3, %cst_19 {dimension_numbers = #tpu.dot_dimension_numbers<[1], [0], [0], [1], [0, 0, 1, 1], [], []>} : vector<4x4xf32>, vector<4x128xf32>, vector<4x128xf32> -> vector<4x128xf32>
    %c0_20 = arith.constant 0 : index
    %c0_21 = arith.constant 0 : index
    %c0_22 = arith.constant 0 : index
    %22 = vector.load %arg7[%c0_20, %c0_21, %c0_22] : memref<8x4x1xf32, #tpu.memory_space<vmem>>, vector<1x4x1xf32>
    %23 = vector.shape_cast %22 : vector<1x4x1xf32> to vector<4x1xf32>
    %24 = vector.broadcast %23 : vector<4x1xf32> to vector<4x128xf32>
    %25 = arith.addf %21, %24 : vector<4x128xf32>
    %c0_23 = arith.constant 0 : index
    %c0_24 = arith.constant 0 : index
    %c0_25 = arith.constant 0 : index
    %26 = vector.load %arg6[%c0_23, %c0_24, %c0_25] : memref<8x4x4xf32, #tpu.memory_space<vmem>>, vector<1x4x4xf32>
    %27 = vector.shape_cast %26 : vector<1x4x4xf32> to vector<4x4xf32>
    %cst_26 = arith.constant dense<0.000000e+00> : vector<4x128xf32>
    %28 = tpu.matmul %27, %5, %cst_26 {dimension_numbers = #tpu.dot_dimension_numbers<[1], [0], [0], [1], [0, 0, 1, 1], [], []>} : vector<4x4xf32>, vector<4x128xf32>, vector<4x128xf32> -> vector<4x128xf32>
    %c0_27 = arith.constant 0 : index
    %c0_28 = arith.constant 0 : index
    %c0_29 = arith.constant 0 : index
    %29 = vector.load %arg7[%c0_27, %c0_28, %c0_29] : memref<8x4x1xf32, #tpu.memory_space<vmem>>, vector<1x4x1xf32>
    %30 = vector.shape_cast %29 : vector<1x4x1xf32> to vector<4x1xf32>
    %31 = vector.broadcast %30 : vector<4x1xf32> to vector<4x128xf32>
    %32 = arith.addf %28, %31 : vector<4x128xf32>
    %cst_30 = arith.constant dense<0.000000e+00> : vector<128x128xf32>
    %33 = tpu.matmul %25, %18, %cst_30 {dimension_numbers = #tpu.dot_dimension_numbers<[0], [0], [1], [1], [0, 1, 1, 1], [], []>} : vector<4x128xf32>, vector<4x128xf32>, vector<128x128xf32> -> vector<128x128xf32>
    %cst_31 = arith.constant -1.000000e+30 : f32
    %34 = vector.broadcast %cst_31 : f32 to vector<128x128xf32>
    %35 = arith.select %8, %34, %33 : vector<128x128xi1>, vector<128x128xf32>
    %cst_32 = arith.constant dense<0xFF800000> : vector<128xf32>
    %36 = vector.multi_reduction <maximumf>, %35, %cst_32 [0] : vector<128x128xf32> to vector<128xf32>
    %37 = vector.shape_cast %36 : vector<128xf32> to vector<1x128xf32>
    %38 = vector.broadcast %37 : vector<1x128xf32> to vector<128x128xf32>
    %39 = arith.subf %35, %38 : vector<128x128xf32>
    %40 = math.exp %39 : vector<128x128xf32>
    %cst_33 = arith.constant dense<0.000000e+00> : vector<128xf32>
    %41 = vector.multi_reduction <add>, %40, %cst_33 [0] : vector<128x128xf32> to vector<128xf32>
    %42 = vector.shape_cast %41 : vector<128xf32> to vector<1x128xf32>
    %43 = tpu.reciprocal %42 {approx = true} : vector<1x128xf32> -> vector<1x128xf32>
    %44 = vector.broadcast %43 : vector<1x128xf32> to vector<128x128xf32>
    %45 = arith.mulf %40, %44 : vector<128x128xf32>
    %cst_34 = arith.constant dense<0.000000e+00> : vector<4x128xf32>
    %46 = tpu.matmul %32, %45, %cst_34 {dimension_numbers = #tpu.dot_dimension_numbers<[1], [0], [0], [1], [0, 0, 1, 1], [], []>} : vector<4x128xf32>, vector<128x128xf32>, vector<4x128xf32> -> vector<4x128xf32>
    %c0_35 = arith.constant 0 : index
    %c0_36 = arith.constant 0 : index
    %c0_37 = arith.constant 0 : index
    %47 = vector.load %arg8[%c0_35, %c0_36, %c0_37] : memref<8x4x4xf32, #tpu.memory_space<vmem>>, vector<1x4x4xf32>
    %48 = vector.shape_cast %47 : vector<1x4x4xf32> to vector<4x4xf32>
    %cst_38 = arith.constant dense<0.000000e+00> : vector<4x128xf32>
    %49 = tpu.matmul %48, %46, %cst_38 {dimension_numbers = #tpu.dot_dimension_numbers<[1], [0], [0], [1], [0, 0, 1, 1], [], []>} : vector<4x4xf32>, vector<4x128xf32>, vector<4x128xf32> -> vector<4x128xf32>
    %50 = arith.addf %9, %49 : vector<4x128xf32>
    %c1 = arith.constant 1 : index
    %c0_39 = arith.constant 0 : index
    %c0_40 = arith.constant 0 : index
    %51 = vector.load %arg4[%c1, %c0_39, %c0_40] : memref<8x4x4xf32, #tpu.memory_space<vmem>>, vector<1x4x4xf32>
    %52 = vector.shape_cast %51 : vector<1x4x4xf32> to vector<4x4xf32>
    %cst_41 = arith.constant dense<0.000000e+00> : vector<4x128xf32>
    %53 = tpu.matmul %52, %1, %cst_41 {dimension_numbers = #tpu.dot_dimension_numbers<[1], [0], [0], [1], [0, 0, 1, 1], [], []>} : vector<4x4xf32>, vector<4x128xf32>, vector<4x128xf32> -> vector<4x128xf32>
    %c1_42 = arith.constant 1 : index
    %c0_43 = arith.constant 0 : index
    %c0_44 = arith.constant 0 : index
    %54 = vector.load %arg5[%c1_42, %c0_43, %c0_44] : memref<8x4x1xf32, #tpu.memory_space<vmem>>, vector<1x4x1xf32>
    %55 = vector.shape_cast %54 : vector<1x4x1xf32> to vector<4x1xf32>
    %56 = vector.broadcast %55 : vector<4x1xf32> to vector<4x128xf32>
    %57 = arith.addf %53, %56 : vector<4x128xf32>
    %cst_45 = arith.constant 5.000000e-01 : f32
    %58 = vector.broadcast %cst_45 : f32 to vector<4x128xf32>
    %59 = arith.mulf %57, %58 : vector<4x128xf32>
    %c1_46 = arith.constant 1 : index
    %c0_47 = arith.constant 0 : index
    %c0_48 = arith.constant 0 : index
    %60 = vector.load %arg6[%c1_46, %c0_47, %c0_48] : memref<8x4x4xf32, #tpu.memory_space<vmem>>, vector<1x4x4xf32>
    %61 = vector.shape_cast %60 : vector<1x4x4xf32> to vector<4x4xf32>
    %cst_49 = arith.constant dense<0.000000e+00> : vector<4x128xf32>
    %62 = tpu.matmul %61, %3, %cst_49 {dimension_numbers = #tpu.dot_dimension_numbers<[1], [0], [0], [1], [0, 0, 1, 1], [], []>} : vector<4x4xf32>, vector<4x128xf32>, vector<4x128xf32> -> vector<4x128xf32>
    %c1_50 = arith.constant 1 : index
    %c0_51 = arith.constant 0 : index
    %c0_52 = arith.constant 0 : index
    %63 = vector.load %arg7[%c1_50, %c0_51, %c0_52] : memref<8x4x1xf32, #tpu.memory_space<vmem>>, vector<1x4x1xf32>
    %64 = vector.shape_cast %63 : vector<1x4x1xf32> to vector<4x1xf32>
    %65 = vector.broadcast %64 : vector<4x1xf32> to vector<4x128xf32>
    %66 = arith.addf %62, %65 : vector<4x128xf32>
    %c1_53 = arith.constant 1 : index
    %c0_54 = arith.constant 0 : index
    %c0_55 = arith.constant 0 : index
    %67 = vector.load %arg6[%c1_53, %c0_54, %c0_55] : memref<8x4x4xf32, #tpu.memory_space<vmem>>, vector<1x4x4xf32>
    %68 = vector.shape_cast %67 : vector<1x4x4xf32> to vector<4x4xf32>
    %cst_56 = arith.constant dense<0.000000e+00> : vector<4x128xf32>
    %69 = tpu.matmul %68, %5, %cst_56 {dimension_numbers = #tpu.dot_dimension_numbers<[1], [0], [0], [1], [0, 0, 1, 1], [], []>} : vector<4x4xf32>, vector<4x128xf32>, vector<4x128xf32> -> vector<4x128xf32>
    %c1_57 = arith.constant 1 : index
    %c0_58 = arith.constant 0 : index
    %c0_59 = arith.constant 0 : index
    %70 = vector.load %arg7[%c1_57, %c0_58, %c0_59] : memref<8x4x1xf32, #tpu.memory_space<vmem>>, vector<1x4x1xf32>
    %71 = vector.shape_cast %70 : vector<1x4x1xf32> to vector<4x1xf32>
    %72 = vector.broadcast %71 : vector<4x1xf32> to vector<4x128xf32>
    %73 = arith.addf %69, %72 : vector<4x128xf32>
    %cst_60 = arith.constant dense<0.000000e+00> : vector<128x128xf32>
    %74 = tpu.matmul %66, %59, %cst_60 {dimension_numbers = #tpu.dot_dimension_numbers<[0], [0], [1], [1], [0, 1, 1, 1], [], []>} : vector<4x128xf32>, vector<4x128xf32>, vector<128x128xf32> -> vector<128x128xf32>
    %cst_61 = arith.constant -1.000000e+30 : f32
    %75 = vector.broadcast %cst_61 : f32 to vector<128x128xf32>
    %76 = arith.select %8, %75, %74 : vector<128x128xi1>, vector<128x128xf32>
    %cst_62 = arith.constant dense<0xFF800000> : vector<128xf32>
    %77 = vector.multi_reduction <maximumf>, %76, %cst_62 [0] : vector<128x128xf32> to vector<128xf32>
    %78 = vector.shape_cast %77 : vector<128xf32> to vector<1x128xf32>
    %79 = vector.broadcast %78 : vector<1x128xf32> to vector<128x128xf32>
    %80 = arith.subf %76, %79 : vector<128x128xf32>
    %81 = math.exp %80 : vector<128x128xf32>
    %cst_63 = arith.constant dense<0.000000e+00> : vector<128xf32>
    %82 = vector.multi_reduction <add>, %81, %cst_63 [0] : vector<128x128xf32> to vector<128xf32>
    %83 = vector.shape_cast %82 : vector<128xf32> to vector<1x128xf32>
    %84 = tpu.reciprocal %83 {approx = true} : vector<1x128xf32> -> vector<1x128xf32>
    %85 = vector.broadcast %84 : vector<1x128xf32> to vector<128x128xf32>
    %86 = arith.mulf %81, %85 : vector<128x128xf32>
    %cst_64 = arith.constant dense<0.000000e+00> : vector<4x128xf32>
    %87 = tpu.matmul %73, %86, %cst_64 {dimension_numbers = #tpu.dot_dimension_numbers<[1], [0], [0], [1], [0, 0, 1, 1], [], []>} : vector<4x128xf32>, vector<128x128xf32>, vector<4x128xf32> -> vector<4x128xf32>
    %c1_65 = arith.constant 1 : index
    %c0_66 = arith.constant 0 : index
    %c0_67 = arith.constant 0 : index
    %88 = vector.load %arg8[%c1_65, %c0_66, %c0_67] : memref<8x4x4xf32, #tpu.memory_space<vmem>>, vector<1x4x4xf32>
    %89 = vector.shape_cast %88 : vector<1x4x4xf32> to vector<4x4xf32>
    %cst_68 = arith.constant dense<0.000000e+00> : vector<4x128xf32>
    %90 = tpu.matmul %89, %87, %cst_68 {dimension_numbers = #tpu.dot_dimension_numbers<[1], [0], [0], [1], [0, 0, 1, 1], [], []>} : vector<4x4xf32>, vector<4x128xf32>, vector<4x128xf32> -> vector<4x128xf32>
    %91 = arith.addf %50, %90 : vector<4x128xf32>
    %c2 = arith.constant 2 : index
    %c0_69 = arith.constant 0 : index
    %c0_70 = arith.constant 0 : index
    %92 = vector.load %arg4[%c2, %c0_69, %c0_70] : memref<8x4x4xf32, #tpu.memory_space<vmem>>, vector<1x4x4xf32>
    %93 = vector.shape_cast %92 : vector<1x4x4xf32> to vector<4x4xf32>
    %cst_71 = arith.constant dense<0.000000e+00> : vector<4x128xf32>
    %94 = tpu.matmul %93, %1, %cst_71 {dimension_numbers = #tpu.dot_dimension_numbers<[1], [0], [0], [1], [0, 0, 1, 1], [], []>} : vector<4x4xf32>, vector<4x128xf32>, vector<4x128xf32> -> vector<4x128xf32>
    %c2_72 = arith.constant 2 : index
    %c0_73 = arith.constant 0 : index
    %c0_74 = arith.constant 0 : index
    %95 = vector.load %arg5[%c2_72, %c0_73, %c0_74] : memref<8x4x1xf32, #tpu.memory_space<vmem>>, vector<1x4x1xf32>
    %96 = vector.shape_cast %95 : vector<1x4x1xf32> to vector<4x1xf32>
    %97 = vector.broadcast %96 : vector<4x1xf32> to vector<4x128xf32>
    %98 = arith.addf %94, %97 : vector<4x128xf32>
    %cst_75 = arith.constant 5.000000e-01 : f32
    %99 = vector.broadcast %cst_75 : f32 to vector<4x128xf32>
    %100 = arith.mulf %98, %99 : vector<4x128xf32>
    %c2_76 = arith.constant 2 : index
    %c0_77 = arith.constant 0 : index
    %c0_78 = arith.constant 0 : index
    %101 = vector.load %arg6[%c2_76, %c0_77, %c0_78] : memref<8x4x4xf32, #tpu.memory_space<vmem>>, vector<1x4x4xf32>
    %102 = vector.shape_cast %101 : vector<1x4x4xf32> to vector<4x4xf32>
    %cst_79 = arith.constant dense<0.000000e+00> : vector<4x128xf32>
    %103 = tpu.matmul %102, %3, %cst_79 {dimension_numbers = #tpu.dot_dimension_numbers<[1], [0], [0], [1], [0, 0, 1, 1], [], []>} : vector<4x4xf32>, vector<4x128xf32>, vector<4x128xf32> -> vector<4x128xf32>
    %c2_80 = arith.constant 2 : index
    %c0_81 = arith.constant 0 : index
    %c0_82 = arith.constant 0 : index
    %104 = vector.load %arg7[%c2_80, %c0_81, %c0_82] : memref<8x4x1xf32, #tpu.memory_space<vmem>>, vector<1x4x1xf32>
    %105 = vector.shape_cast %104 : vector<1x4x1xf32> to vector<4x1xf32>
    %106 = vector.broadcast %105 : vector<4x1xf32> to vector<4x128xf32>
    %107 = arith.addf %103, %106 : vector<4x128xf32>
    %c2_83 = arith.constant 2 : index
    %c0_84 = arith.constant 0 : index
    %c0_85 = arith.constant 0 : index
    %108 = vector.load %arg6[%c2_83, %c0_84, %c0_85] : memref<8x4x4xf32, #tpu.memory_space<vmem>>, vector<1x4x4xf32>
    %109 = vector.shape_cast %108 : vector<1x4x4xf32> to vector<4x4xf32>
    %cst_86 = arith.constant dense<0.000000e+00> : vector<4x128xf32>
    %110 = tpu.matmul %109, %5, %cst_86 {dimension_numbers = #tpu.dot_dimension_numbers<[1], [0], [0], [1], [0, 0, 1, 1], [], []>} : vector<4x4xf32>, vector<4x128xf32>, vector<4x128xf32> -> vector<4x128xf32>
    %c2_87 = arith.constant 2 : index
    %c0_88 = arith.constant 0 : index
    %c0_89 = arith.constant 0 : index
    %111 = vector.load %arg7[%c2_87, %c0_88, %c0_89] : memref<8x4x1xf32, #tpu.memory_space<vmem>>, vector<1x4x1xf32>
    %112 = vector.shape_cast %111 : vector<1x4x1xf32> to vector<4x1xf32>
    %113 = vector.broadcast %112 : vector<4x1xf32> to vector<4x128xf32>
    %114 = arith.addf %110, %113 : vector<4x128xf32>
    %cst_90 = arith.constant dense<0.000000e+00> : vector<128x128xf32>
    %115 = tpu.matmul %107, %100, %cst_90 {dimension_numbers = #tpu.dot_dimension_numbers<[0], [0], [1], [1], [0, 1, 1, 1], [], []>} : vector<4x128xf32>, vector<4x128xf32>, vector<128x128xf32> -> vector<128x128xf32>
    %cst_91 = arith.constant -1.000000e+30 : f32
    %116 = vector.broadcast %cst_91 : f32 to vector<128x128xf32>
    %117 = arith.select %8, %116, %115 : vector<128x128xi1>, vector<128x128xf32>
    %cst_92 = arith.constant dense<0xFF800000> : vector<128xf32>
    %118 = vector.multi_reduction <maximumf>, %117, %cst_92 [0] : vector<128x128xf32> to vector<128xf32>
    %119 = vector.shape_cast %118 : vector<128xf32> to vector<1x128xf32>
    %120 = vector.broadcast %119 : vector<1x128xf32> to vector<128x128xf32>
    %121 = arith.subf %117, %120 : vector<128x128xf32>
    %122 = math.exp %121 : vector<128x128xf32>
    %cst_93 = arith.constant dense<0.000000e+00> : vector<128xf32>
    %123 = vector.multi_reduction <add>, %122, %cst_93 [0] : vector<128x128xf32> to vector<128xf32>
    %124 = vector.shape_cast %123 : vector<128xf32> to vector<1x128xf32>
    %125 = tpu.reciprocal %124 {approx = true} : vector<1x128xf32> -> vector<1x128xf32>
    %126 = vector.broadcast %125 : vector<1x128xf32> to vector<128x128xf32>
    %127 = arith.mulf %122, %126 : vector<128x128xf32>
    %cst_94 = arith.constant dense<0.000000e+00> : vector<4x128xf32>
    %128 = tpu.matmul %114, %127, %cst_94 {dimension_numbers = #tpu.dot_dimension_numbers<[1], [0], [0], [1], [0, 0, 1, 1], [], []>} : vector<4x128xf32>, vector<128x128xf32>, vector<4x128xf32> -> vector<4x128xf32>
    %c2_95 = arith.constant 2 : index
    %c0_96 = arith.constant 0 : index
    %c0_97 = arith.constant 0 : index
    %129 = vector.load %arg8[%c2_95, %c0_96, %c0_97] : memref<8x4x4xf32, #tpu.memory_space<vmem>>, vector<1x4x4xf32>
    %130 = vector.shape_cast %129 : vector<1x4x4xf32> to vector<4x4xf32>
    %cst_98 = arith.constant dense<0.000000e+00> : vector<4x128xf32>
    %131 = tpu.matmul %130, %128, %cst_98 {dimension_numbers = #tpu.dot_dimension_numbers<[1], [0], [0], [1], [0, 0, 1, 1], [], []>} : vector<4x4xf32>, vector<4x128xf32>, vector<4x128xf32> -> vector<4x128xf32>
    %132 = arith.addf %91, %131 : vector<4x128xf32>
    %c3 = arith.constant 3 : index
    %c0_99 = arith.constant 0 : index
    %c0_100 = arith.constant 0 : index
    %133 = vector.load %arg4[%c3, %c0_99, %c0_100] : memref<8x4x4xf32, #tpu.memory_space<vmem>>, vector<1x4x4xf32>
    %134 = vector.shape_cast %133 : vector<1x4x4xf32> to vector<4x4xf32>
    %cst_101 = arith.constant dense<0.000000e+00> : vector<4x128xf32>
    %135 = tpu.matmul %134, %1, %cst_101 {dimension_numbers = #tpu.dot_dimension_numbers<[1], [0], [0], [1], [0, 0, 1, 1], [], []>} : vector<4x4xf32>, vector<4x128xf32>, vector<4x128xf32> -> vector<4x128xf32>
    %c3_102 = arith.constant 3 : index
    %c0_103 = arith.constant 0 : index
    %c0_104 = arith.constant 0 : index
    %136 = vector.load %arg5[%c3_102, %c0_103, %c0_104] : memref<8x4x1xf32, #tpu.memory_space<vmem>>, vector<1x4x1xf32>
    %137 = vector.shape_cast %136 : vector<1x4x1xf32> to vector<4x1xf32>
    %138 = vector.broadcast %137 : vector<4x1xf32> to vector<4x128xf32>
    %139 = arith.addf %135, %138 : vector<4x128xf32>
    %cst_105 = arith.constant 5.000000e-01 : f32
    %140 = vector.broadcast %cst_105 : f32 to vector<4x128xf32>
    %141 = arith.mulf %139, %140 : vector<4x128xf32>
    %c3_106 = arith.constant 3 : index
    %c0_107 = arith.constant 0 : index
    %c0_108 = arith.constant 0 : index
    %142 = vector.load %arg6[%c3_106, %c0_107, %c0_108] : memref<8x4x4xf32, #tpu.memory_space<vmem>>, vector<1x4x4xf32>
    %143 = vector.shape_cast %142 : vector<1x4x4xf32> to vector<4x4xf32>
    %cst_109 = arith.constant dense<0.000000e+00> : vector<4x128xf32>
    %144 = tpu.matmul %143, %3, %cst_109 {dimension_numbers = #tpu.dot_dimension_numbers<[1], [0], [0], [1], [0, 0, 1, 1], [], []>} : vector<4x4xf32>, vector<4x128xf32>, vector<4x128xf32> -> vector<4x128xf32>
    %c3_110 = arith.constant 3 : index
    %c0_111 = arith.constant 0 : index
    %c0_112 = arith.constant 0 : index
    %145 = vector.load %arg7[%c3_110, %c0_111, %c0_112] : memref<8x4x1xf32, #tpu.memory_space<vmem>>, vector<1x4x1xf32>
    %146 = vector.shape_cast %145 : vector<1x4x1xf32> to vector<4x1xf32>
    %147 = vector.broadcast %146 : vector<4x1xf32> to vector<4x128xf32>
    %148 = arith.addf %144, %147 : vector<4x128xf32>
    %c3_113 = arith.constant 3 : index
    %c0_114 = arith.constant 0 : index
    %c0_115 = arith.constant 0 : index
    %149 = vector.load %arg6[%c3_113, %c0_114, %c0_115] : memref<8x4x4xf32, #tpu.memory_space<vmem>>, vector<1x4x4xf32>
    %150 = vector.shape_cast %149 : vector<1x4x4xf32> to vector<4x4xf32>
    %cst_116 = arith.constant dense<0.000000e+00> : vector<4x128xf32>
    %151 = tpu.matmul %150, %5, %cst_116 {dimension_numbers = #tpu.dot_dimension_numbers<[1], [0], [0], [1], [0, 0, 1, 1], [], []>} : vector<4x4xf32>, vector<4x128xf32>, vector<4x128xf32> -> vector<4x128xf32>
    %c3_117 = arith.constant 3 : index
    %c0_118 = arith.constant 0 : index
    %c0_119 = arith.constant 0 : index
    %152 = vector.load %arg7[%c3_117, %c0_118, %c0_119] : memref<8x4x1xf32, #tpu.memory_space<vmem>>, vector<1x4x1xf32>
    %153 = vector.shape_cast %152 : vector<1x4x1xf32> to vector<4x1xf32>
    %154 = vector.broadcast %153 : vector<4x1xf32> to vector<4x128xf32>
    %155 = arith.addf %151, %154 : vector<4x128xf32>
    %cst_120 = arith.constant dense<0.000000e+00> : vector<128x128xf32>
    %156 = tpu.matmul %148, %141, %cst_120 {dimension_numbers = #tpu.dot_dimension_numbers<[0], [0], [1], [1], [0, 1, 1, 1], [], []>} : vector<4x128xf32>, vector<4x128xf32>, vector<128x128xf32> -> vector<128x128xf32>
    %cst_121 = arith.constant -1.000000e+30 : f32
    %157 = vector.broadcast %cst_121 : f32 to vector<128x128xf32>
    %158 = arith.select %8, %157, %156 : vector<128x128xi1>, vector<128x128xf32>
    %cst_122 = arith.constant dense<0xFF800000> : vector<128xf32>
    %159 = vector.multi_reduction <maximumf>, %158, %cst_122 [0] : vector<128x128xf32> to vector<128xf32>
    %160 = vector.shape_cast %159 : vector<128xf32> to vector<1x128xf32>
    %161 = vector.broadcast %160 : vector<1x128xf32> to vector<128x128xf32>
    %162 = arith.subf %158, %161 : vector<128x128xf32>
    %163 = math.exp %162 : vector<128x128xf32>
    %cst_123 = arith.constant dense<0.000000e+00> : vector<128xf32>
    %164 = vector.multi_reduction <add>, %163, %cst_123 [0] : vector<128x128xf32> to vector<128xf32>
    %165 = vector.shape_cast %164 : vector<128xf32> to vector<1x128xf32>
    %166 = tpu.reciprocal %165 {approx = true} : vector<1x128xf32> -> vector<1x128xf32>
    %167 = vector.broadcast %166 : vector<1x128xf32> to vector<128x128xf32>
    %168 = arith.mulf %163, %167 : vector<128x128xf32>
    %cst_124 = arith.constant dense<0.000000e+00> : vector<4x128xf32>
    %169 = tpu.matmul %155, %168, %cst_124 {dimension_numbers = #tpu.dot_dimension_numbers<[1], [0], [0], [1], [0, 0, 1, 1], [], []>} : vector<4x128xf32>, vector<128x128xf32>, vector<4x128xf32> -> vector<4x128xf32>
    %c3_125 = arith.constant 3 : index
    %c0_126 = arith.constant 0 : index
    %c0_127 = arith.constant 0 : index
    %170 = vector.load %arg8[%c3_125, %c0_126, %c0_127] : memref<8x4x4xf32, #tpu.memory_space<vmem>>, vector<1x4x4xf32>
    %171 = vector.shape_cast %170 : vector<1x4x4xf32> to vector<4x4xf32>
    %cst_128 = arith.constant dense<0.000000e+00> : vector<4x128xf32>
    %172 = tpu.matmul %171, %169, %cst_128 {dimension_numbers = #tpu.dot_dimension_numbers<[1], [0], [0], [1], [0, 0, 1, 1], [], []>} : vector<4x4xf32>, vector<4x128xf32>, vector<4x128xf32> -> vector<4x128xf32>
    %173 = arith.addf %132, %172 : vector<4x128xf32>
    %c4 = arith.constant 4 : index
    %c0_129 = arith.constant 0 : index
    %c0_130 = arith.constant 0 : index
    %174 = vector.load %arg4[%c4, %c0_129, %c0_130] : memref<8x4x4xf32, #tpu.memory_space<vmem>>, vector<1x4x4xf32>
    %175 = vector.shape_cast %174 : vector<1x4x4xf32> to vector<4x4xf32>
    %cst_131 = arith.constant dense<0.000000e+00> : vector<4x128xf32>
    %176 = tpu.matmul %175, %1, %cst_131 {dimension_numbers = #tpu.dot_dimension_numbers<[1], [0], [0], [1], [0, 0, 1, 1], [], []>} : vector<4x4xf32>, vector<4x128xf32>, vector<4x128xf32> -> vector<4x128xf32>
    %c4_132 = arith.constant 4 : index
    %c0_133 = arith.constant 0 : index
    %c0_134 = arith.constant 0 : index
    %177 = vector.load %arg5[%c4_132, %c0_133, %c0_134] : memref<8x4x1xf32, #tpu.memory_space<vmem>>, vector<1x4x1xf32>
    %178 = vector.shape_cast %177 : vector<1x4x1xf32> to vector<4x1xf32>
    %179 = vector.broadcast %178 : vector<4x1xf32> to vector<4x128xf32>
    %180 = arith.addf %176, %179 : vector<4x128xf32>
    %cst_135 = arith.constant 5.000000e-01 : f32
    %181 = vector.broadcast %cst_135 : f32 to vector<4x128xf32>
    %182 = arith.mulf %180, %181 : vector<4x128xf32>
    %c4_136 = arith.constant 4 : index
    %c0_137 = arith.constant 0 : index
    %c0_138 = arith.constant 0 : index
    %183 = vector.load %arg6[%c4_136, %c0_137, %c0_138] : memref<8x4x4xf32, #tpu.memory_space<vmem>>, vector<1x4x4xf32>
    %184 = vector.shape_cast %183 : vector<1x4x4xf32> to vector<4x4xf32>
    %cst_139 = arith.constant dense<0.000000e+00> : vector<4x128xf32>
    %185 = tpu.matmul %184, %3, %cst_139 {dimension_numbers = #tpu.dot_dimension_numbers<[1], [0], [0], [1], [0, 0, 1, 1], [], []>} : vector<4x4xf32>, vector<4x128xf32>, vector<4x128xf32> -> vector<4x128xf32>
    %c4_140 = arith.constant 4 : index
    %c0_141 = arith.constant 0 : index
    %c0_142 = arith.constant 0 : index
    %186 = vector.load %arg7[%c4_140, %c0_141, %c0_142] : memref<8x4x1xf32, #tpu.memory_space<vmem>>, vector<1x4x1xf32>
    %187 = vector.shape_cast %186 : vector<1x4x1xf32> to vector<4x1xf32>
    %188 = vector.broadcast %187 : vector<4x1xf32> to vector<4x128xf32>
    %189 = arith.addf %185, %188 : vector<4x128xf32>
    %c4_143 = arith.constant 4 : index
    %c0_144 = arith.constant 0 : index
    %c0_145 = arith.constant 0 : index
    %190 = vector.load %arg6[%c4_143, %c0_144, %c0_145] : memref<8x4x4xf32, #tpu.memory_space<vmem>>, vector<1x4x4xf32>
    %191 = vector.shape_cast %190 : vector<1x4x4xf32> to vector<4x4xf32>
    %cst_146 = arith.constant dense<0.000000e+00> : vector<4x128xf32>
    %192 = tpu.matmul %191, %5, %cst_146 {dimension_numbers = #tpu.dot_dimension_numbers<[1], [0], [0], [1], [0, 0, 1, 1], [], []>} : vector<4x4xf32>, vector<4x128xf32>, vector<4x128xf32> -> vector<4x128xf32>
    %c4_147 = arith.constant 4 : index
    %c0_148 = arith.constant 0 : index
    %c0_149 = arith.constant 0 : index
    %193 = vector.load %arg7[%c4_147, %c0_148, %c0_149] : memref<8x4x1xf32, #tpu.memory_space<vmem>>, vector<1x4x1xf32>
    %194 = vector.shape_cast %193 : vector<1x4x1xf32> to vector<4x1xf32>
    %195 = vector.broadcast %194 : vector<4x1xf32> to vector<4x128xf32>
    %196 = arith.addf %192, %195 : vector<4x128xf32>
    %cst_150 = arith.constant dense<0.000000e+00> : vector<128x128xf32>
    %197 = tpu.matmul %189, %182, %cst_150 {dimension_numbers = #tpu.dot_dimension_numbers<[0], [0], [1], [1], [0, 1, 1, 1], [], []>} : vector<4x128xf32>, vector<4x128xf32>, vector<128x128xf32> -> vector<128x128xf32>
    %cst_151 = arith.constant -1.000000e+30 : f32
    %198 = vector.broadcast %cst_151 : f32 to vector<128x128xf32>
    %199 = arith.select %8, %198, %197 : vector<128x128xi1>, vector<128x128xf32>
    %cst_152 = arith.constant dense<0xFF800000> : vector<128xf32>
    %200 = vector.multi_reduction <maximumf>, %199, %cst_152 [0] : vector<128x128xf32> to vector<128xf32>
    %201 = vector.shape_cast %200 : vector<128xf32> to vector<1x128xf32>
    %202 = vector.broadcast %201 : vector<1x128xf32> to vector<128x128xf32>
    %203 = arith.subf %199, %202 : vector<128x128xf32>
    %204 = math.exp %203 : vector<128x128xf32>
    %cst_153 = arith.constant dense<0.000000e+00> : vector<128xf32>
    %205 = vector.multi_reduction <add>, %204, %cst_153 [0] : vector<128x128xf32> to vector<128xf32>
    %206 = vector.shape_cast %205 : vector<128xf32> to vector<1x128xf32>
    %207 = tpu.reciprocal %206 {approx = true} : vector<1x128xf32> -> vector<1x128xf32>
    %208 = vector.broadcast %207 : vector<1x128xf32> to vector<128x128xf32>
    %209 = arith.mulf %204, %208 : vector<128x128xf32>
    %cst_154 = arith.constant dense<0.000000e+00> : vector<4x128xf32>
    %210 = tpu.matmul %196, %209, %cst_154 {dimension_numbers = #tpu.dot_dimension_numbers<[1], [0], [0], [1], [0, 0, 1, 1], [], []>} : vector<4x128xf32>, vector<128x128xf32>, vector<4x128xf32> -> vector<4x128xf32>
    %c4_155 = arith.constant 4 : index
    %c0_156 = arith.constant 0 : index
    %c0_157 = arith.constant 0 : index
    %211 = vector.load %arg8[%c4_155, %c0_156, %c0_157] : memref<8x4x4xf32, #tpu.memory_space<vmem>>, vector<1x4x4xf32>
    %212 = vector.shape_cast %211 : vector<1x4x4xf32> to vector<4x4xf32>
    %cst_158 = arith.constant dense<0.000000e+00> : vector<4x128xf32>
    %213 = tpu.matmul %212, %210, %cst_158 {dimension_numbers = #tpu.dot_dimension_numbers<[1], [0], [0], [1], [0, 0, 1, 1], [], []>} : vector<4x4xf32>, vector<4x128xf32>, vector<4x128xf32> -> vector<4x128xf32>
    %214 = arith.addf %173, %213 : vector<4x128xf32>
    %c5 = arith.constant 5 : index
    %c0_159 = arith.constant 0 : index
    %c0_160 = arith.constant 0 : index
    %215 = vector.load %arg4[%c5, %c0_159, %c0_160] : memref<8x4x4xf32, #tpu.memory_space<vmem>>, vector<1x4x4xf32>
    %216 = vector.shape_cast %215 : vector<1x4x4xf32> to vector<4x4xf32>
    %cst_161 = arith.constant dense<0.000000e+00> : vector<4x128xf32>
    %217 = tpu.matmul %216, %1, %cst_161 {dimension_numbers = #tpu.dot_dimension_numbers<[1], [0], [0], [1], [0, 0, 1, 1], [], []>} : vector<4x4xf32>, vector<4x128xf32>, vector<4x128xf32> -> vector<4x128xf32>
    %c5_162 = arith.constant 5 : index
    %c0_163 = arith.constant 0 : index
    %c0_164 = arith.constant 0 : index
    %218 = vector.load %arg5[%c5_162, %c0_163, %c0_164] : memref<8x4x1xf32, #tpu.memory_space<vmem>>, vector<1x4x1xf32>
    %219 = vector.shape_cast %218 : vector<1x4x1xf32> to vector<4x1xf32>
    %220 = vector.broadcast %219 : vector<4x1xf32> to vector<4x128xf32>
    %221 = arith.addf %217, %220 : vector<4x128xf32>
    %cst_165 = arith.constant 5.000000e-01 : f32
    %222 = vector.broadcast %cst_165 : f32 to vector<4x128xf32>
    %223 = arith.mulf %221, %222 : vector<4x128xf32>
    %c5_166 = arith.constant 5 : index
    %c0_167 = arith.constant 0 : index
    %c0_168 = arith.constant 0 : index
    %224 = vector.load %arg6[%c5_166, %c0_167, %c0_168] : memref<8x4x4xf32, #tpu.memory_space<vmem>>, vector<1x4x4xf32>
    %225 = vector.shape_cast %224 : vector<1x4x4xf32> to vector<4x4xf32>
    %cst_169 = arith.constant dense<0.000000e+00> : vector<4x128xf32>
    %226 = tpu.matmul %225, %3, %cst_169 {dimension_numbers = #tpu.dot_dimension_numbers<[1], [0], [0], [1], [0, 0, 1, 1], [], []>} : vector<4x4xf32>, vector<4x128xf32>, vector<4x128xf32> -> vector<4x128xf32>
    %c5_170 = arith.constant 5 : index
    %c0_171 = arith.constant 0 : index
    %c0_172 = arith.constant 0 : index
    %227 = vector.load %arg7[%c5_170, %c0_171, %c0_172] : memref<8x4x1xf32, #tpu.memory_space<vmem>>, vector<1x4x1xf32>
    %228 = vector.shape_cast %227 : vector<1x4x1xf32> to vector<4x1xf32>
    %229 = vector.broadcast %228 : vector<4x1xf32> to vector<4x128xf32>
    %230 = arith.addf %226, %229 : vector<4x128xf32>
    %c5_173 = arith.constant 5 : index
    %c0_174 = arith.constant 0 : index
    %c0_175 = arith.constant 0 : index
    %231 = vector.load %arg6[%c5_173, %c0_174, %c0_175] : memref<8x4x4xf32, #tpu.memory_space<vmem>>, vector<1x4x4xf32>
    %232 = vector.shape_cast %231 : vector<1x4x4xf32> to vector<4x4xf32>
    %cst_176 = arith.constant dense<0.000000e+00> : vector<4x128xf32>
    %233 = tpu.matmul %232, %5, %cst_176 {dimension_numbers = #tpu.dot_dimension_numbers<[1], [0], [0], [1], [0, 0, 1, 1], [], []>} : vector<4x4xf32>, vector<4x128xf32>, vector<4x128xf32> -> vector<4x128xf32>
    %c5_177 = arith.constant 5 : index
    %c0_178 = arith.constant 0 : index
    %c0_179 = arith.constant 0 : index
    %234 = vector.load %arg7[%c5_177, %c0_178, %c0_179] : memref<8x4x1xf32, #tpu.memory_space<vmem>>, vector<1x4x1xf32>
    %235 = vector.shape_cast %234 : vector<1x4x1xf32> to vector<4x1xf32>
    %236 = vector.broadcast %235 : vector<4x1xf32> to vector<4x128xf32>
    %237 = arith.addf %233, %236 : vector<4x128xf32>
    %cst_180 = arith.constant dense<0.000000e+00> : vector<128x128xf32>
    %238 = tpu.matmul %230, %223, %cst_180 {dimension_numbers = #tpu.dot_dimension_numbers<[0], [0], [1], [1], [0, 1, 1, 1], [], []>} : vector<4x128xf32>, vector<4x128xf32>, vector<128x128xf32> -> vector<128x128xf32>
    %cst_181 = arith.constant -1.000000e+30 : f32
    %239 = vector.broadcast %cst_181 : f32 to vector<128x128xf32>
    %240 = arith.select %8, %239, %238 : vector<128x128xi1>, vector<128x128xf32>
    %cst_182 = arith.constant dense<0xFF800000> : vector<128xf32>
    %241 = vector.multi_reduction <maximumf>, %240, %cst_182 [0] : vector<128x128xf32> to vector<128xf32>
    %242 = vector.shape_cast %241 : vector<128xf32> to vector<1x128xf32>
    %243 = vector.broadcast %242 : vector<1x128xf32> to vector<128x128xf32>
    %244 = arith.subf %240, %243 : vector<128x128xf32>
    %245 = math.exp %244 : vector<128x128xf32>
    %cst_183 = arith.constant dense<0.000000e+00> : vector<128xf32>
    %246 = vector.multi_reduction <add>, %245, %cst_183 [0] : vector<128x128xf32> to vector<128xf32>
    %247 = vector.shape_cast %246 : vector<128xf32> to vector<1x128xf32>
    %248 = tpu.reciprocal %247 {approx = true} : vector<1x128xf32> -> vector<1x128xf32>
    %249 = vector.broadcast %248 : vector<1x128xf32> to vector<128x128xf32>
    %250 = arith.mulf %245, %249 : vector<128x128xf32>
    %cst_184 = arith.constant dense<0.000000e+00> : vector<4x128xf32>
    %251 = tpu.matmul %237, %250, %cst_184 {dimension_numbers = #tpu.dot_dimension_numbers<[1], [0], [0], [1], [0, 0, 1, 1], [], []>} : vector<4x128xf32>, vector<128x128xf32>, vector<4x128xf32> -> vector<4x128xf32>
    %c5_185 = arith.constant 5 : index
    %c0_186 = arith.constant 0 : index
    %c0_187 = arith.constant 0 : index
    %252 = vector.load %arg8[%c5_185, %c0_186, %c0_187] : memref<8x4x4xf32, #tpu.memory_space<vmem>>, vector<1x4x4xf32>
    %253 = vector.shape_cast %252 : vector<1x4x4xf32> to vector<4x4xf32>
    %cst_188 = arith.constant dense<0.000000e+00> : vector<4x128xf32>
    %254 = tpu.matmul %253, %251, %cst_188 {dimension_numbers = #tpu.dot_dimension_numbers<[1], [0], [0], [1], [0, 0, 1, 1], [], []>} : vector<4x4xf32>, vector<4x128xf32>, vector<4x128xf32> -> vector<4x128xf32>
    %255 = arith.addf %214, %254 : vector<4x128xf32>
    %c6 = arith.constant 6 : index
    %c0_189 = arith.constant 0 : index
    %c0_190 = arith.constant 0 : index
    %256 = vector.load %arg4[%c6, %c0_189, %c0_190] : memref<8x4x4xf32, #tpu.memory_space<vmem>>, vector<1x4x4xf32>
    %257 = vector.shape_cast %256 : vector<1x4x4xf32> to vector<4x4xf32>
    %cst_191 = arith.constant dense<0.000000e+00> : vector<4x128xf32>
    %258 = tpu.matmul %257, %1, %cst_191 {dimension_numbers = #tpu.dot_dimension_numbers<[1], [0], [0], [1], [0, 0, 1, 1], [], []>} : vector<4x4xf32>, vector<4x128xf32>, vector<4x128xf32> -> vector<4x128xf32>
    %c6_192 = arith.constant 6 : index
    %c0_193 = arith.constant 0 : index
    %c0_194 = arith.constant 0 : index
    %259 = vector.load %arg5[%c6_192, %c0_193, %c0_194] : memref<8x4x1xf32, #tpu.memory_space<vmem>>, vector<1x4x1xf32>
    %260 = vector.shape_cast %259 : vector<1x4x1xf32> to vector<4x1xf32>
    %261 = vector.broadcast %260 : vector<4x1xf32> to vector<4x128xf32>
    %262 = arith.addf %258, %261 : vector<4x128xf32>
    %cst_195 = arith.constant 5.000000e-01 : f32
    %263 = vector.broadcast %cst_195 : f32 to vector<4x128xf32>
    %264 = arith.mulf %262, %263 : vector<4x128xf32>
    %c6_196 = arith.constant 6 : index
    %c0_197 = arith.constant 0 : index
    %c0_198 = arith.constant 0 : index
    %265 = vector.load %arg6[%c6_196, %c0_197, %c0_198] : memref<8x4x4xf32, #tpu.memory_space<vmem>>, vector<1x4x4xf32>
    %266 = vector.shape_cast %265 : vector<1x4x4xf32> to vector<4x4xf32>
    %cst_199 = arith.constant dense<0.000000e+00> : vector<4x128xf32>
    %267 = tpu.matmul %266, %3, %cst_199 {dimension_numbers = #tpu.dot_dimension_numbers<[1], [0], [0], [1], [0, 0, 1, 1], [], []>} : vector<4x4xf32>, vector<4x128xf32>, vector<4x128xf32> -> vector<4x128xf32>
    %c6_200 = arith.constant 6 : index
    %c0_201 = arith.constant 0 : index
    %c0_202 = arith.constant 0 : index
    %268 = vector.load %arg7[%c6_200, %c0_201, %c0_202] : memref<8x4x1xf32, #tpu.memory_space<vmem>>, vector<1x4x1xf32>
    %269 = vector.shape_cast %268 : vector<1x4x1xf32> to vector<4x1xf32>
    %270 = vector.broadcast %269 : vector<4x1xf32> to vector<4x128xf32>
    %271 = arith.addf %267, %270 : vector<4x128xf32>
    %c6_203 = arith.constant 6 : index
    %c0_204 = arith.constant 0 : index
    %c0_205 = arith.constant 0 : index
    %272 = vector.load %arg6[%c6_203, %c0_204, %c0_205] : memref<8x4x4xf32, #tpu.memory_space<vmem>>, vector<1x4x4xf32>
    %273 = vector.shape_cast %272 : vector<1x4x4xf32> to vector<4x4xf32>
    %cst_206 = arith.constant dense<0.000000e+00> : vector<4x128xf32>
    %274 = tpu.matmul %273, %5, %cst_206 {dimension_numbers = #tpu.dot_dimension_numbers<[1], [0], [0], [1], [0, 0, 1, 1], [], []>} : vector<4x4xf32>, vector<4x128xf32>, vector<4x128xf32> -> vector<4x128xf32>
    %c6_207 = arith.constant 6 : index
    %c0_208 = arith.constant 0 : index
    %c0_209 = arith.constant 0 : index
    %275 = vector.load %arg7[%c6_207, %c0_208, %c0_209] : memref<8x4x1xf32, #tpu.memory_space<vmem>>, vector<1x4x1xf32>
    %276 = vector.shape_cast %275 : vector<1x4x1xf32> to vector<4x1xf32>
    %277 = vector.broadcast %276 : vector<4x1xf32> to vector<4x128xf32>
    %278 = arith.addf %274, %277 : vector<4x128xf32>
    %cst_210 = arith.constant dense<0.000000e+00> : vector<128x128xf32>
    %279 = tpu.matmul %271, %264, %cst_210 {dimension_numbers = #tpu.dot_dimension_numbers<[0], [0], [1], [1], [0, 1, 1, 1], [], []>} : vector<4x128xf32>, vector<4x128xf32>, vector<128x128xf32> -> vector<128x128xf32>
    %cst_211 = arith.constant -1.000000e+30 : f32
    %280 = vector.broadcast %cst_211 : f32 to vector<128x128xf32>
    %281 = arith.select %8, %280, %279 : vector<128x128xi1>, vector<128x128xf32>
    %cst_212 = arith.constant dense<0xFF800000> : vector<128xf32>
    %282 = vector.multi_reduction <maximumf>, %281, %cst_212 [0] : vector<128x128xf32> to vector<128xf32>
    %283 = vector.shape_cast %282 : vector<128xf32> to vector<1x128xf32>
    %284 = vector.broadcast %283 : vector<1x128xf32> to vector<128x128xf32>
    %285 = arith.subf %281, %284 : vector<128x128xf32>
    %286 = math.exp %285 : vector<128x128xf32>
    %cst_213 = arith.constant dense<0.000000e+00> : vector<128xf32>
    %287 = vector.multi_reduction <add>, %286, %cst_213 [0] : vector<128x128xf32> to vector<128xf32>
    %288 = vector.shape_cast %287 : vector<128xf32> to vector<1x128xf32>
    %289 = tpu.reciprocal %288 {approx = true} : vector<1x128xf32> -> vector<1x128xf32>
    %290 = vector.broadcast %289 : vector<1x128xf32> to vector<128x128xf32>
    %291 = arith.mulf %286, %290 : vector<128x128xf32>
    %cst_214 = arith.constant dense<0.000000e+00> : vector<4x128xf32>
    %292 = tpu.matmul %278, %291, %cst_214 {dimension_numbers = #tpu.dot_dimension_numbers<[1], [0], [0], [1], [0, 0, 1, 1], [], []>} : vector<4x128xf32>, vector<128x128xf32>, vector<4x128xf32> -> vector<4x128xf32>
    %c6_215 = arith.constant 6 : index
    %c0_216 = arith.constant 0 : index
    %c0_217 = arith.constant 0 : index
    %293 = vector.load %arg8[%c6_215, %c0_216, %c0_217] : memref<8x4x4xf32, #tpu.memory_space<vmem>>, vector<1x4x4xf32>
    %294 = vector.shape_cast %293 : vector<1x4x4xf32> to vector<4x4xf32>
    %cst_218 = arith.constant dense<0.000000e+00> : vector<4x128xf32>
    %295 = tpu.matmul %294, %292, %cst_218 {dimension_numbers = #tpu.dot_dimension_numbers<[1], [0], [0], [1], [0, 0, 1, 1], [], []>} : vector<4x4xf32>, vector<4x128xf32>, vector<4x128xf32> -> vector<4x128xf32>
    %296 = arith.addf %255, %295 : vector<4x128xf32>
    %c7 = arith.constant 7 : index
    %c0_219 = arith.constant 0 : index
    %c0_220 = arith.constant 0 : index
    %297 = vector.load %arg4[%c7, %c0_219, %c0_220] : memref<8x4x4xf32, #tpu.memory_space<vmem>>, vector<1x4x4xf32>
    %298 = vector.shape_cast %297 : vector<1x4x4xf32> to vector<4x4xf32>
    %cst_221 = arith.constant dense<0.000000e+00> : vector<4x128xf32>
    %299 = tpu.matmul %298, %1, %cst_221 {dimension_numbers = #tpu.dot_dimension_numbers<[1], [0], [0], [1], [0, 0, 1, 1], [], []>} : vector<4x4xf32>, vector<4x128xf32>, vector<4x128xf32> -> vector<4x128xf32>
    %c7_222 = arith.constant 7 : index
    %c0_223 = arith.constant 0 : index
    %c0_224 = arith.constant 0 : index
    %300 = vector.load %arg5[%c7_222, %c0_223, %c0_224] : memref<8x4x1xf32, #tpu.memory_space<vmem>>, vector<1x4x1xf32>
    %301 = vector.shape_cast %300 : vector<1x4x1xf32> to vector<4x1xf32>
    %302 = vector.broadcast %301 : vector<4x1xf32> to vector<4x128xf32>
    %303 = arith.addf %299, %302 : vector<4x128xf32>
    %cst_225 = arith.constant 5.000000e-01 : f32
    %304 = vector.broadcast %cst_225 : f32 to vector<4x128xf32>
    %305 = arith.mulf %303, %304 : vector<4x128xf32>
    %c7_226 = arith.constant 7 : index
    %c0_227 = arith.constant 0 : index
    %c0_228 = arith.constant 0 : index
    %306 = vector.load %arg6[%c7_226, %c0_227, %c0_228] : memref<8x4x4xf32, #tpu.memory_space<vmem>>, vector<1x4x4xf32>
    %307 = vector.shape_cast %306 : vector<1x4x4xf32> to vector<4x4xf32>
    %cst_229 = arith.constant dense<0.000000e+00> : vector<4x128xf32>
    %308 = tpu.matmul %307, %3, %cst_229 {dimension_numbers = #tpu.dot_dimension_numbers<[1], [0], [0], [1], [0, 0, 1, 1], [], []>} : vector<4x4xf32>, vector<4x128xf32>, vector<4x128xf32> -> vector<4x128xf32>
    %c7_230 = arith.constant 7 : index
    %c0_231 = arith.constant 0 : index
    %c0_232 = arith.constant 0 : index
    %309 = vector.load %arg7[%c7_230, %c0_231, %c0_232] : memref<8x4x1xf32, #tpu.memory_space<vmem>>, vector<1x4x1xf32>
    %310 = vector.shape_cast %309 : vector<1x4x1xf32> to vector<4x1xf32>
    %311 = vector.broadcast %310 : vector<4x1xf32> to vector<4x128xf32>
    %312 = arith.addf %308, %311 : vector<4x128xf32>
    %c7_233 = arith.constant 7 : index
    %c0_234 = arith.constant 0 : index
    %c0_235 = arith.constant 0 : index
    %313 = vector.load %arg6[%c7_233, %c0_234, %c0_235] : memref<8x4x4xf32, #tpu.memory_space<vmem>>, vector<1x4x4xf32>
    %314 = vector.shape_cast %313 : vector<1x4x4xf32> to vector<4x4xf32>
    %cst_236 = arith.constant dense<0.000000e+00> : vector<4x128xf32>
    %315 = tpu.matmul %314, %5, %cst_236 {dimension_numbers = #tpu.dot_dimension_numbers<[1], [0], [0], [1], [0, 0, 1, 1], [], []>} : vector<4x4xf32>, vector<4x128xf32>, vector<4x128xf32> -> vector<4x128xf32>
    %c7_237 = arith.constant 7 : index
    %c0_238 = arith.constant 0 : index
    %c0_239 = arith.constant 0 : index
    %316 = vector.load %arg7[%c7_237, %c0_238, %c0_239] : memref<8x4x1xf32, #tpu.memory_space<vmem>>, vector<1x4x1xf32>
    %317 = vector.shape_cast %316 : vector<1x4x1xf32> to vector<4x1xf32>
    %318 = vector.broadcast %317 : vector<4x1xf32> to vector<4x128xf32>
    %319 = arith.addf %315, %318 : vector<4x128xf32>
    %cst_240 = arith.constant dense<0.000000e+00> : vector<128x128xf32>
    %320 = tpu.matmul %312, %305, %cst_240 {dimension_numbers = #tpu.dot_dimension_numbers<[0], [0], [1], [1], [0, 1, 1, 1], [], []>} : vector<4x128xf32>, vector<4x128xf32>, vector<128x128xf32> -> vector<128x128xf32>
    %cst_241 = arith.constant -1.000000e+30 : f32
    %321 = vector.broadcast %cst_241 : f32 to vector<128x128xf32>
    %322 = arith.select %8, %321, %320 : vector<128x128xi1>, vector<128x128xf32>
    %cst_242 = arith.constant dense<0xFF800000> : vector<128xf32>
    %323 = vector.multi_reduction <maximumf>, %322, %cst_242 [0] : vector<128x128xf32> to vector<128xf32>
    %324 = vector.shape_cast %323 : vector<128xf32> to vector<1x128xf32>
    %325 = vector.broadcast %324 : vector<1x128xf32> to vector<128x128xf32>
    %326 = arith.subf %322, %325 : vector<128x128xf32>
    %327 = math.exp %326 : vector<128x128xf32>
    %cst_243 = arith.constant dense<0.000000e+00> : vector<128xf32>
    %328 = vector.multi_reduction <add>, %327, %cst_243 [0] : vector<128x128xf32> to vector<128xf32>
    %329 = vector.shape_cast %328 : vector<128xf32> to vector<1x128xf32>
    %330 = tpu.reciprocal %329 {approx = true} : vector<1x128xf32> -> vector<1x128xf32>
    %331 = vector.broadcast %330 : vector<1x128xf32> to vector<128x128xf32>
    %332 = arith.mulf %327, %331 : vector<128x128xf32>
    %cst_244 = arith.constant dense<0.000000e+00> : vector<4x128xf32>
    %333 = tpu.matmul %319, %332, %cst_244 {dimension_numbers = #tpu.dot_dimension_numbers<[1], [0], [0], [1], [0, 0, 1, 1], [], []>} : vector<4x128xf32>, vector<128x128xf32>, vector<4x128xf32> -> vector<4x128xf32>
    %c7_245 = arith.constant 7 : index
    %c0_246 = arith.constant 0 : index
    %c0_247 = arith.constant 0 : index
    %334 = vector.load %arg8[%c7_245, %c0_246, %c0_247] : memref<8x4x4xf32, #tpu.memory_space<vmem>>, vector<1x4x4xf32>
    %335 = vector.shape_cast %334 : vector<1x4x4xf32> to vector<4x4xf32>
    %cst_248 = arith.constant dense<0.000000e+00> : vector<4x128xf32>
    %336 = tpu.matmul %335, %333, %cst_248 {dimension_numbers = #tpu.dot_dimension_numbers<[1], [0], [0], [1], [0, 0, 1, 1], [], []>} : vector<4x4xf32>, vector<4x128xf32>, vector<4x128xf32> -> vector<4x128xf32>
    %337 = arith.addf %296, %336 : vector<4x128xf32>
    %c0_249 = arith.constant 0 : index
    %c0_250 = arith.constant 0 : index
    %338 = vector.load %arg9[%c0_249, %c0_250] : memref<4x1xf32, #tpu.memory_space<vmem>>, vector<4x1xf32>
    %339 = vector.broadcast %338 : vector<4x1xf32> to vector<4x128xf32>
    %340 = arith.addf %337, %339 : vector<4x128xf32>
    %c0_251 = arith.constant 0 : index
    %c0_252 = arith.constant 0 : index
    %c0_253 = arith.constant 0 : index
    %341 = vector.load %arg10[%c0_251, %c0_252, %c0_253] : memref<1x4x128xf32, #tpu.memory_space<vmem>>, vector<1x4x128xf32>
    %342 = vector.shape_cast %341 : vector<1x4x128xf32> to vector<4x128xf32>
    %343 = vector.shape_cast %340 : vector<4x128xf32> to vector<1x4x128xf32>
    tpu.vector_store %arg10[%c0_251, %c0_252, %c0_253], %343 {strides = array<i32>} : memref<1x4x128xf32, #tpu.memory_space<vmem>>, vector<1x4x128xf32>,
    return
  }
  func.func @transform_0(%arg0: i32) -> (i32, i32, i32) {
    %c0_i32 = arith.constant 0 : i32
    %c0_i32_0 = arith.constant 0 : i32
    %c0_i32_1 = arith.constant 0 : i32
    return %arg0, %c0_i32, %c0_i32_0 : i32, i32, i32
  }
  func.func @transform_1(%arg0: i32) -> (i32, i32, i32) {
    %c0_i32 = arith.constant 0 : i32
    %c0_i32_0 = arith.constant 0 : i32
    %c0_i32_1 = arith.constant 0 : i32
    return %arg0, %c0_i32, %c0_i32_0 : i32, i32, i32
  }
  func.func @transform_2(%arg0: i32) -> (i32, i32, i32) {
    %c0_i32 = arith.constant 0 : i32
    %c0_i32_0 = arith.constant 0 : i32
    %c0_i32_1 = arith.constant 0 : i32
    return %arg0, %c0_i32, %c0_i32_0 : i32, i32, i32
  }
  func.func @transform_3(%arg0: i32) -> (i32, i32, i32) {
    %c0_i32 = arith.constant 0 : i32
    %c0_i32_0 = arith.constant 0 : i32
    %c0_i32_1 = arith.constant 0 : i32
    %c0_i32_2 = arith.constant 0 : i32
    return %c0_i32, %c0_i32_0, %c0_i32_1 : i32, i32, i32
  }
  func.func @transform_4(%arg0: i32) -> (i32, i32, i32) {
    %c0_i32 = arith.constant 0 : i32
    %c0_i32_0 = arith.constant 0 : i32
    %c0_i32_1 = arith.constant 0 : i32
    %c0_i32_2 = arith.constant 0 : i32
    return %c0_i32, %c0_i32_0, %c0_i32_1 : i32, i32, i32
  }
  func.func @transform_5(%arg0: i32) -> (i32, i32, i32) {
    %c0_i32 = arith.constant 0 : i32
    %c0_i32_0 = arith.constant 0 : i32
    %c0_i32_1 = arith.constant 0 : i32
    %c0_i32_2 = arith.constant 0 : i32
    return %c0_i32, %c0_i32_0, %c0_i32_1 : i32, i32, i32
  }
  func.func @transform_6(%arg0: i32) -> (i32, i32, i32) {
    %c0_i32 = arith.constant 0 : i32
    %c0_i32_0 = arith.constant 0 : i32
    %c0_i32_1 = arith.constant 0 : i32
    %c0_i32_2 = arith.constant 0 : i32
    return %c0_i32, %c0_i32_0, %c0_i32_1 : i32, i32, i32
  }
  func.func @transform_7(%arg0: i32) -> (i32, i32, i32) {
    %c0_i32 = arith.constant 0 : i32
    %c0_i32_0 = arith.constant 0 : i32
    %c0_i32_1 = arith.constant 0 : i32
    %c0_i32_2 = arith.constant 0 : i32
    return %c0_i32, %c0_i32_0, %c0_i32_1 : i32, i32, i32
  }
  func.func @transform_8(%arg0: i32) -> (i32, i32) {
    %c0_i32 = arith.constant 0 : i32
    %c0_i32_0 = arith.constant 0 : i32
    %c0_i32_1 = arith.constant 0 : i32
    return %c0_i32, %c0_i32_0 : i32, i32
  }
  func.func @transform_9(%arg0: i32) -> (i32, i32, i32) {
    %c0_i32 = arith.constant 0 : i32
    %c0_i32_0 = arith.constant 0 : i32
    %c0_i32_1 = arith.constant 0 : i32
    return %arg0, %c0_i32, %c0_i32_0 : i32, i32, i32
  }
}

</mosaic_0001>

<llo_original>
// kernel: multihead_attention_forward.1
$region0: #{multihead_attention_forward.1}
  #allocation0 [shape = 'u32[]', space=smem, size = 0x4, offset = 0x4, fixed_abs, tag = 'smem constant byte address 0x4 - core index']
  #allocation1 [shape = 'u32[72,128]{1,0:T(1,128)}', space=vmem, size = 0x9000, scoped, tag = 'internal scratch']
  %s0 = inlined_call_operand.vmem [shape: f32[2,4,128], index: 0, kind: input, shape index: {}]
  %s1 = inlined_call_operand.vmem [shape: f32[2,4,128], index: 1, kind: input, shape index: {}]
  %s2 = inlined_call_operand.vmem [shape: f32[2,4,128], index: 2, kind: input, shape index: {}]
  %s3 = inlined_call_operand.vmem [shape: f32[8,4,4], index: 3, kind: input, shape index: {}]
  %s4 = inlined_call_operand.vmem [shape: f32[8,4,1], index: 4, kind: input, shape index: {}]
  %s5 = inlined_call_operand.vmem [shape: f32[8,4,4], index: 5, kind: input, shape index: {}]
  %s6 = inlined_call_operand.vmem [shape: f32[8,4,1], index: 6, kind: input, shape index: {}]
  %s7 = inlined_call_operand.vmem [shape: f32[8,4,4], index: 7, kind: input, shape index: {}]
  %s8 = inlined_call_operand.vmem [shape: f32[4,1], index: 8, kind: input, shape index: {}]
  %s9 = inlined_call_operand.hbm [shape: f32[2,4,128], index: 9, kind: output, shape index: {}]
  %s10 = sld [smem:[#allocation0]]
  $region69: #{multihead_attention_forward.1} parent=0
    _
  %s12 = ssub.s32 1, %s10
  %s13 = scalar_select 0, %s12, %s10
  $region1: #{multihead_attention_forward.1} parent=0
    #allocation2 [shape = 'u8[4096]{0}', space=vmem, size = 0x1000, scoped, tag = 'output window, operand 0']
    #allocation3 [shape = 's32[2]{0}', space=sflag, size = 0x8, scoped, tag = 'scoped memory for multihead_attention_forward.1']
    %14 = vsyncpa [#allocation3], 0
    %s15 = scalar_lea.sflag [#allocation3], 1
    %16 = vsyncpa %s15, 0
    loop: start=0, step=1, limit=4
    $region2: #{multihead_attention_forward.1} parent=1 // loop_pre_header
      _
    $region3: #{multihead_attention_forward.1} parent=1 // loop_header
      %s18 = sphi 0, %s22
      %p19 = scmp.ge.s32.totalorder %s18, 4
      %s28 = sphi 0, %s30
      %s31 = sphi 0, %s28
      %s32 = sphi 0, %s31
      %s48 = sphi 0, %s32
      %s54 = sphi 0, %s56
      %s57 = sphi 0, %s54
      %s58 = sphi 0, %s57
      %s74 = sphi 0, %s58
      %s80 = sphi 0, %s82
      %s83 = sphi 0, %s80
      %s84 = sphi 0, %s83
      %s100 = sphi 0, %s84
      %s104 = sphi 0, %s104
      %s106 = sphi 0, %s104
      %s107 = sphi 0, %s106
      %s121 = sphi 0, %s107
      %s125 = sphi 0, %s125
      %s127 = sphi 0, %s125
      %s128 = sphi 0, %s127
      %s142 = sphi 0, %s128
      %s146 = sphi 0, %s146
      %s148 = sphi 0, %s146
      %s149 = sphi 0, %s148
      %s163 = sphi 0, %s149
      %s167 = sphi 0, %s167
      %s169 = sphi 0, %s167
      %s170 = sphi 0, %s169
      %s184 = sphi 0, %s170
      %s188 = sphi 0, %s188
      %s190 = sphi 0, %s188
      %s191 = sphi 0, %s190
      %s205 = sphi 0, %s191
      %s209 = sphi 0, %s209
      %s211 = sphi 0, %s209
      %s212 = sphi 0, %s211
      %s226 = sphi 0, %s212
      %s232 = sphi 0, %s234
      %s235 = sphi 0, %s232
      %s236 = sphi 0, %s235
      %s252 = sphi 0, %s236
    $region4: #{multihead_attention_forward.1} parent=1 // loop_header_branch
      %21 = sbr.rel (%p19) target = $region8
    $region5: #{multihead_attention_forward.1} parent=1 // loop_body
      %s23 = ssub.s32 %s18, 1
      %s24 = ssub.s32 %s18, 2
      %s25 = sadd.s32 %s18, 1
      %s26 = ssub.s32 %s18, %s25
      %p27 = scmp.eq.s32.totalorder %s26, 0
      %s29 = sadd.s32 %s28, 1
      %s30 = scalar_select %p27, %s28, %s29
      %p33 = pneg %p27
      %p34 = scmp.eq.s32.totalorder %s18, 1
      %p35 = por %p33, %p34
      %p36 = scmp.ne.s32.totalorder %s28, %s31
      %p37 = scmp.eq.s32.totalorder %s18, 0
      %p38 = por %p36, %p37
      %p39 = scmp.ne.s32.totalorder %s28, %s31
      %p40 = scmp.eq.s32.totalorder %s23, 1
      %p41 = por %p39, %p40
      %p42 = scmp.ne.s32.totalorder %s31, %s32
      %p43 = scmp.eq.s32.totalorder %s23, 0
      %p44 = por %p42, %p43
      %p45 = scmp.ne.s32.totalorder %s31, %s32
      %p46 = scmp.eq.s32.totalorder %s24, 1
      %p47 = por %p45, %p46
      %p49 = scmp.ne.s32.totalorder %s32, %s48
      %p50 = scmp.eq.s32.totalorder %s24, 0
      %p51 = por %p49, %p50
      %s52 = ssub.s32 %s18, %s25
      %p53 = scmp.eq.s32.totalorder %s52, 0
      %s55 = sadd.s32 %s54, 1
      %s56 = scalar_select %p53, %s54, %s55
      %p59 = pneg %p53
      %p60 = scmp.eq.s32.totalorder %s18, 1
      %p61 = por %p59, %p60
      %p62 = scmp.ne.s32.totalorder %s54, %s57
      %p63 = scmp.eq.s32.totalorder %s18, 0
      %p64 = por %p62, %p63
      %p65 = scmp.ne.s32.totalorder %s54, %s57
      %p66 = scmp.eq.s32.totalorder %s23, 1
      %p67 = por %p65, %p66
      %p68 = scmp.ne.s32.totalorder %s57, %s58
      %p69 = scmp.eq.s32.totalorder %s23, 0
      %p70 = por %p68, %p69
      %p71 = scmp.ne.s32.totalorder %s57, %s58
      %p72 = scmp.eq.s32.totalorder %s24, 1
      %p73 = por %p71, %p72
      %p75 = scmp.ne.s32.totalorder %s58, %s74
      %p76 = scmp.eq.s32.totalorder %s24, 0
      %p77 = por %p75, %p76
      %s78 = ssub.s32 %s18, %s25
      %p79 = scmp.eq.s32.totalorder %s78, 0
      %s81 = sadd.s32 %s80, 1
      %s82 = scalar_select %p79, %s80, %s81
      %p85 = pneg %p79
      %p86 = scmp.eq.s32.totalorder %s18, 1
      %p87 = por %p85, %p86
      %p88 = scmp.ne.s32.totalorder %s80, %s83
      %p89 = scmp.eq.s32.totalorder %s18, 0
      %p90 = por %p88, %p89
      %p91 = scmp.ne.s32.totalorder %s80, %s83
      %p92 = scmp.eq.s32.totalorder %s23, 1
      %p93 = por %p91, %p92
      %p94 = scmp.ne.s32.totalorder %s83, %s84
      %p95 = scmp.eq.s32.totalorder %s23, 0
      %p96 = por %p94, %p95
      %p97 = scmp.ne.s32.totalorder %s83, %s84
      %p98 = scmp.eq.s32.totalorder %s24, 1
      %p99 = por %p97, %p98
      %p101 = scmp.ne.s32.totalorder %s84, %s100
      %p102 = scmp.eq.s32.totalorder %s24, 0
      %p103 = por %p101, %p102
      %s105 = sadd.s32 %s104, 1
      %p108 = scmp.eq.s32.totalorder %s18, 1
      %p109 = scmp.ne.s32.totalorder %s104, %s106
      %p110 = scmp.eq.s32.totalorder %s18, 0
      %p111 = por %p109, %p110
      %p112 = scmp.ne.s32.totalorder %s104, %s106
      %p113 = scmp.eq.s32.totalorder %s23, 1
      %p114 = por %p112, %p113
      %p115 = scmp.ne.s32.totalorder %s106, %s107
      %p116 = scmp.eq.s32.totalorder %s23, 0
      %p117 = por %p115, %p116
      %p118 = scmp.ne.s32.totalorder %s106, %s107
      %p119 = scmp.eq.s32.totalorder %s24, 1
      %p120 = por %p118, %p119
      %p122 = scmp.ne.s32.totalorder %s107, %s121
      %p123 = scmp.eq.s32.totalorder %s24, 0
      %p124 = por %p122, %p123
      %s126 = sadd.s32 %s125, 1
      %p129 = scmp.eq.s32.totalorder %s18, 1
      %p130 = scmp.ne.s32.totalorder %s125, %s127
      %p131 = scmp.eq.s32.totalorder %s18, 0
      %p132 = por %p130, %p131
      %p133 = scmp.ne.s32.totalorder %s125, %s127
      %p134 = scmp.eq.s32.totalorder %s23, 1
      %p135 = por %p133, %p134
      %p136 = scmp.ne.s32.totalorder %s127, %s128
      %p137 = scmp.eq.s32.totalorder %s23, 0
      %p138 = por %p136, %p137
      %p139 = scmp.ne.s32.totalorder %s127, %s128
      %p140 = scmp.eq.s32.totalorder %s24, 1
      %p141 = por %p139, %p140
      %p143 = scmp.ne.s32.totalorder %s128, %s142
      %p144 = scmp.eq.s32.totalorder %s24, 0
      %p145 = por %p143, %p144
      %s147 = sadd.s32 %s146, 1
      %p150 = scmp.eq.s32.totalorder %s18, 1
      %p151 = scmp.ne.s32.totalorder %s146, %s148
      %p152 = scmp.eq.s32.totalorder %s18, 0
      %p153 = por %p151, %p152
      %p154 = scmp.ne.s32.totalorder %s146, %s148
      %p155 = scmp.eq.s32.totalorder %s23, 1
      %p156 = por %p154, %p155
      %p157 = scmp.ne.s32.totalorder %s148, %s149
      %p158 = scmp.eq.s32.totalorder %s23, 0
      %p159 = por %p157, %p158
      %p160 = scmp.ne.s32.totalorder %s148, %s149
      %p161 = scmp.eq.s32.totalorder %s24, 1
      %p162 = por %p160, %p161
      %p164 = scmp.ne.s32.totalorder %s149, %s163
      %p165 = scmp.eq.s32.totalorder %s24, 0
      %p166 = por %p164, %p165
      %s168 = sadd.s32 %s167, 1
      %p171 = scmp.eq.s32.totalorder %s18, 1
      %p172 = scmp.ne.s32.totalorder %s167, %s169
      %p173 = scmp.eq.s32.totalorder %s18, 0
      %p174 = por %p172, %p173
      %p175 = scmp.ne.s32.totalorder %s167, %s169
      %p176 = scmp.eq.s32.totalorder %s23, 1
      %p177 = por %p175, %p176
      %p178 = scmp.ne.s32.totalorder %s169, %s170
      %p179 = scmp.eq.s32.totalorder %s23, 0
      %p180 = por %p178, %p179
      %p181 = scmp.ne.s32.totalorder %s169, %s170
      %p182 = scmp.eq.s32.totalorder %s24, 1
      %p183 = por %p181, %p182
      %p185 = scmp.ne.s32.totalorder %s170, %s184
      %p186 = scmp.eq.s32.totalorder %s24, 0
      %p187 = por %p185, %p186
      %s189 = sadd.s32 %s188, 1
      %p192 = scmp.eq.s32.totalorder %s18, 1
      %p193 = scmp.ne.s32.totalorder %s188, %s190
      %p194 = scmp.eq.s32.totalorder %s18, 0
      %p195 = por %p193, %p194
      %p196 = scmp.ne.s32.totalorder %s188, %s190
      %p197 = scmp.eq.s32.totalorder %s23, 1
      %p198 = por %p196, %p197
      %p199 = scmp.ne.s32.totalorder %s190, %s191
      %p200 = scmp.eq.s32.totalorder %s23, 0
      %p201 = por %p199, %p200
      %p202 = scmp.ne.s32.totalorder %s190, %s191
      %p203 = scmp.eq.s32.totalorder %s24, 1
      %p204 = por %p202, %p203
      %p206 = scmp.ne.s32.totalorder %s191, %s205
      %p207 = scmp.eq.s32.totalorder %s24, 0
      %p208 = por %p206, %p207
      %s210 = sadd.s32 %s209, 1
      %p213 = scmp.eq.s32.totalorder %s18, 1
      %p214 = scmp.ne.s32.totalorder %s209, %s211
      %p215 = scmp.eq.s32.totalorder %s18, 0
      %p216 = por %p214, %p215
      %p217 = scmp.ne.s32.totalorder %s209, %s211
      %p218 = scmp.eq.s32.totalorder %s23, 1
      %p219 = por %p217, %p218
      %p220 = scmp.ne.s32.totalorder %s211, %s212
      %p221 = scmp.eq.s32.totalorder %s23, 0
      %p222 = por %p220, %p221
      %p223 = scmp.ne.s32.totalorder %s211, %s212
      %p224 = scmp.eq.s32.totalorder %s24, 1
      %p225 = por %p223, %p224
      %p227 = scmp.ne.s32.totalorder %s212, %s226
      %p228 = scmp.eq.s32.totalorder %s24, 0
      %p229 = por %p227, %p228
      %s230 = ssub.s32 %s18, %s25
      %p231 = scmp.eq.s32.totalorder %s230, 0
      %s233 = sadd.s32 %s232, 1
      %s234 = scalar_select %p231, %s232, %s233
      %p237 = pneg %p231
      %p238 = scmp.eq.s32.totalorder %s18, 1
      %p239 = por %p237, %p238
      %p240 = scmp.ne.s32.totalorder %s232, %s235
      %p241 = scmp.eq.s32.totalorder %s18, 0
      %p242 = por %p240, %p241
      %p243 = scmp.ne.s32.totalorder %s232, %s235
      %p244 = scmp.eq.s32.totalorder %s23, 1
      %p245 = por %p243, %p244
      %p246 = scmp.ne.s32.totalorder %s235, %s236
      %p247 = scmp.eq.s32.totalorder %s23, 0
      %p248 = por %p246, %p247
      %p249 = scmp.ne.s32.totalorder %s235, %s236
      %p250 = scmp.eq.s32.totalorder %s24, 1
      %p251 = por %p249, %p250
      %p253 = scmp.ne.s32.totalorder %s236, %s252
      %p254 = scmp.eq.s32.totalorder %s24, 0
      %p255 = por %p253, %p254
      %p256 = scmp.le.s32.totalorder 1, %s18
      %p257 = scmp.lt.s32.totalorder %s18, 3
      %p258 = pnand %p256, %p257
      %p259 = pneg %p258
      // Predicated region
      $region9: #{multihead_attention_forward.1} parent=5 // pred_check
        _
      $region10: #{multihead_attention_forward.1} parent=5 // pred_check_branch
        %261 = sbr.rel (%p258) target = $region12
      $region11: #{multihead_attention_forward.1} parent=5 // pred_region
        %s262 = ssub.s32 %s18, 1
        // Predicated region
        $region13: #{multihead_attention_forward.1} parent=11 // pred_check
          %p263 = pneg %p117
        $region14: #{multihead_attention_forward.1} parent=11 // pred_check_branch
          %265 = sbr.rel (%p263) target = $region16
        $region15: #{multihead_attention_forward.1} parent=11 // pred_region
          _
        $region16: #{multihead_attention_forward.1} parent=11 // pred_fallthru
          _
        // Predicated region
        $region17: #{multihead_attention_forward.1} parent=11 // pred_check
          %p266 = pneg %p138
        $region18: #{multihead_attention_forward.1} parent=11 // pred_check_branch
          %268 = sbr.rel (%p266) target = $region20
        $region19: #{multihead_attention_forward.1} parent=11 // pred_region
          _
        $region20: #{multihead_attention_forward.1} parent=11 // pred_fallthru
          _
        // Predicated region
        $region21: #{multihead_attention_forward.1} parent=11 // pred_check
          %p269 = pneg %p159
        $region22: #{multihead_attention_forward.1} parent=11 // pred_check_branch
          %271 = sbr.rel (%p269) target = $region24
        $region23: #{multihead_attention_forward.1} parent=11 // pred_region
          _
        $region24: #{multihead_attention_forward.1} parent=11 // pred_fallthru
          _
        // Predicated region
        $region25: #{multihead_attention_forward.1} parent=11 // pred_check
          %p272 = pneg %p180
        $region26: #{multihead_attention_forward.1} parent=11 // pred_check_branch
          %274 = sbr.rel (%p272) target = $region28
        $region27: #{multihead_attention_forward.1} parent=11 // pred_region
          _
        $region28: #{multihead_attention_forward.1} parent=11 // pred_fallthru
          _
        // Predicated region
        $region29: #{multihead_attention_forward.1} parent=11 // pred_check
          %p275 = pneg %p201
        $region30: #{multihead_attention_forward.1} parent=11 // pred_check_branch
          %277 = sbr.rel (%p275) target = $region32
        $region31: #{multihead_attention_forward.1} parent=11 // pred_region
          _
        $region32: #{multihead_attention_forward.1} parent=11 // pred_fallthru
          _
        // Predicated region
        $region33: #{multihead_attention_forward.1} parent=11 // pred_check
          %p278 = pneg %p222
        $region34: #{multihead_attention_forward.1} parent=11 // pred_check_branch
          %280 = sbr.rel (%p278) target = $region36
        $region35: #{multihead_attention_forward.1} parent=11 // pred_region
          _
        $region36: #{multihead_attention_forward.1} parent=11 // pred_fallthru
          _
      $region12: #{multihead_attention_forward.1} parent=5 // pred_fallthru
        _
      %p281 = scmp.lt.s32.totalorder %s18, 2
      // Predicated region
      $region37: #{multihead_attention_forward.1} parent=5 // pred_check
        %p282 = pneg %p281
      $region38: #{multihead_attention_forward.1} parent=5 // pred_check_branch
        %284 = sbr.rel (%p282) target = $region40
      $region39: #{multihead_attention_forward.1} parent=5 // pred_region
        // Predicated region
        $region41: #{multihead_attention_forward.1} parent=39 // pred_check
          %p285 = pneg %p38
        $region42: #{multihead_attention_forward.1} parent=39 // pred_check_branch
          %287 = sbr.rel (%p285) target = $region44
        $region43: #{multihead_attention_forward.1} parent=39 // pred_region
          %p288 = scmp.lt.s32.totalorder %s18, 1
          %s289 = scalar_select %p288, %s18, 1
          %s290 = smul.addr %s289, 4
          %s291 = scalar_lea.vmem %s0, %s290
        $region44: #{multihead_attention_forward.1} parent=39 // pred_fallthru
          _
        // Predicated region
        $region45: #{multihead_attention_forward.1} parent=39 // pred_check
          %p292 = pneg %p64
        $region46: #{multihead_attention_forward.1} parent=39 // pred_check_branch
          %294 = sbr.rel (%p292) target = $region48
        $region47: #{multihead_attention_forward.1} parent=39 // pred_region
          %p295 = scmp.lt.s32.totalorder %s18, 1
          %s296 = scalar_select %p295, %s18, 1
          %s297 = smul.addr %s296, 4
          %s298 = scalar_lea.vmem %s1, %s297
        $region48: #{multihead_attention_forward.1} parent=39 // pred_fallthru
          _
        // Predicated region
        $region49: #{multihead_attention_forward.1} parent=39 // pred_check
          %p299 = pneg %p90
        $region50: #{multihead_attention_forward.1} parent=39 // pred_check_branch
          %301 = sbr.rel (%p299) target = $region52
        $region51: #{multihead_attention_forward.1} parent=39 // pred_region
          %p302 = scmp.lt.s32.totalorder %s18, 1
          %s303 = scalar_select %p302, %s18, 1
          %s304 = smul.addr %s303, 4
          %s305 = scalar_lea.vmem %s2, %s304
        $region52: #{multihead_attention_forward.1} parent=39 // pred_fallthru
          _
      $region40: #{multihead_attention_forward.1} parent=5 // pred_fallthru
        _
      %p306 = scmp.le.s32.totalorder 1, %s18
      %p307 = scmp.lt.s32.totalorder %s18, 3
      %p308 = pnand %p306, %p307
      %p309 = pneg %p308
      // Predicated region
      $region53: #{multihead_attention_forward.1} parent=5 // pred_check
        _
      $region54: #{multihead_attention_forward.1} parent=5 // pred_check_branch
        %311 = sbr.rel (%p308) target = $region56
      $region55: #{multihead_attention_forward.1} parent=5 // pred_region
        %s312 = ssub.s32 %s18, 1
        %p313 = scmp.lt.s32.totalorder %s23, 1
        %s314 = scalar_select %p313, %s23, 1
        %s315 = smul.addr %s314, 4
        %s316 = scalar_lea.vmem %s0, %s315
        %p317 = pneg %p44
        %p318 = pneg %p41
        %p319 = scmp.lt.s32.totalorder %s23, 1
        %s320 = scalar_select %p319, %s23, 1
        %s321 = smul.addr %s320, 4
        %s322 = scalar_lea.vmem %s1, %s321
        %p323 = pneg %p70
        %p324 = pneg %p67
        %p325 = scmp.lt.s32.totalorder %s23, 1
        %s326 = scalar_select %p325, %s23, 1
        %s327 = smul.addr %s326, 4
        %s328 = scalar_lea.vmem %s2, %s327
        %p329 = pneg %p96
        %p330 = pneg %p93
        %p331 = pneg %p117
        %p332 = pneg %p114
        %p333 = pneg %p138
        %p334 = pneg %p135
        %p335 = pneg %p159
        %p336 = pneg %p156
        %p337 = pneg %p180
        %p338 = pneg %p177
        %p339 = pneg %p201
        %p340 = pneg %p198
        %p341 = pneg %p222
        %p342 = pneg %p219
        %p343 = pneg %p248
        %p344 = pneg %p245
        %s345 = sand.u32 %s235, 1
        %s346 = scalar_lea.sflag [#allocation3], %s345
        %s347 = sand.u32 %s235, 1
        %s348 = smul.addr %s347, 4
        %s349 = scalar_lea.vmem [#allocation2], %s348
        %p350 = scmp.lt.s32.totalorder %s23, 1
        %s351 = scalar_select %p350, %s23, 1
        %s352 = smul.addr %s351, 4
        %s353 = scalar_lea.vmem %s0, %s352
        %p354 = scmp.lt.s32.totalorder %s23, 1
        %s355 = scalar_select %p354, %s23, 1
        %s356 = smul.addr %s355, 4
        %s357 = scalar_lea.vmem %s1, %s356
        %p358 = scmp.lt.s32.totalorder %s23, 1
        %s359 = scalar_select %p358, %s23, 1
        %s360 = smul.addr %s359, 4
        %s361 = scalar_lea.vmem %s2, %s360
        %v362 = vld [vmem:[%s353] sm:$0xf]
        %v363 = vld [vmem:[%s357] sm:$0xf]
        %v364 = vld [vmem:[%s361] sm:$0xf]
        %v365 = vlaneseq
        %v366 = vshrl.u32 %v365, 7
        %v367 = vadd.s32 %v366, 8
        %v368 = vadd.s32 %v366, 16
        %v369 = vadd.s32 %v366, 24
        %v370 = vadd.s32 %v366, 32
        %v371 = vadd.s32 %v366, 40
        %v372 = vadd.s32 %v366, 48
        %v373 = vadd.s32 %v366, 56
        %v374 = vadd.s32 %v366, 64
        %v375 = vadd.s32 %v366, 72
        %v376 = vadd.s32 %v366, 80
        %v377 = vadd.s32 %v366, 88
        %v378 = vadd.s32 %v366, 96
        %v379 = vadd.s32 %v366, 104
        %v380 = vadd.s32 %v366, 112
        %v381 = vadd.s32 %v366, 120
        %vm382 = vcmp.ge.s32.totalorder %v366, 16
        %vm383 = vcmp.ge.s32.totalorder %v367, 16
        %vm384 = vcmp.ge.s32.totalorder %v368, 16
        %vm385 = vcmp.ge.s32.totalorder %v369, 16
        %vm386 = vcmp.ge.s32.totalorder %v370, 16
        %vm387 = vcmp.ge.s32.totalorder %v371, 16
        %vm388 = vcmp.ge.s32.totalorder %v372, 16
        %vm389 = vcmp.ge.s32.totalorder %v373, 16
        %vm390 = vcmp.ge.s32.totalorder %v374, 16
        %vm391 = vcmp.ge.s32.totalorder %v375, 16
        %vm392 = vcmp.ge.s32.totalorder %v376, 16
        %vm393 = vcmp.ge.s32.totalorder %v377, 16
        %vm394 = vcmp.ge.s32.totalorder %v378, 16
        %vm395 = vcmp.ge.s32.totalorder %v379, 16
        %vm396 = vcmp.ge.s32.totalorder %v380, 16
        %vm397 = vcmp.ge.s32.totalorder %v381, 16
        %v398 = vld [vmem:[%s3] sm:$0xf]
        %v399 = vld [vmem:[%s4] sm:$0xf]
        %401 = vset.pattern.permute.xlu0 0
        %402 = vperm.xlu0 %401, %v399
        %v403 = vpop.permute.xlu0 %402
        %vm405 = vcmask 31744
        %v407 = vsel %vm405, %v398, 0
        %vm409 = vcmask 1043456
        %v411 = vsel %vm409, %v362, 0
        %413 = vmatpush.msra.mxu0 0.0
        %414 = vmatpush.msra.mxu0 0.0
        %415 = vmatpush.msra.mxu0 0.0
        %416 = vmatpush.msra.mxu0 0.0
        %417 = vmatpush.msra.mxu0 0.0
        %418 = vmatpush.msra.mxu0 0.0
        %419 = vmatpush.msra.mxu0 0.0
        %420 = vmatpush.msra.mxu0 0.0
        %421 = vmatpush.msra.mxu0 0.0
        %422 = vmatpush.msra.mxu0 0.0
        %423 = vmatpush.msra.mxu0 0.0
        %424 = vmatpush.msra.mxu0 0.0
        %425 = vmatpush.msra.mxu0 0.0
        %426 = vmatpush.msra.mxu0 0.0
        %427 = vmatpush.msra.mxu0 0.0
        %428 = vmatpush.msra.mxu0 %v411
        %429 = vmatmul.f32.gmra.mxu0 %v407
        %v430 = vpop.f32.mrf.mxu0
        %v431 = vadd.f32 %v403, %v430
        %432 = vdwg.mxu0
        %v433 = vmul.f32 %v431, 0.5
        %v434 = vld [vmem:[%s5] sm:$0xf]
        %v435 = vld [vmem:[%s6] sm:$0xf]
        %437 = vset.pattern.permute.xlu0 0
        %438 = vperm.xlu0 %437, %v435
        %v439 = vpop.permute.xlu0 %438
        %v442 = vsel %vm405, %v434, 0
        %v445 = vsel %vm409, %v363, 0
        %447 = vmatpush.msra.mxu0 0.0
        %448 = vmatpush.msra.mxu0 0.0
        %449 = vmatpush.msra.mxu0 0.0
        %450 = vmatpush.msra.mxu0 0.0
        %451 = vmatpush.msra.mxu0 0.0
        %452 = vmatpush.msra.mxu0 0.0
        %453 = vmatpush.msra.mxu0 0.0
        %454 = vmatpush.msra.mxu0 0.0
        %455 = vmatpush.msra.mxu0 0.0
        %456 = vmatpush.msra.mxu0 0.0
        %457 = vmatpush.msra.mxu0 0.0
        %458 = vmatpush.msra.mxu0 0.0
        %459 = vmatpush.msra.mxu0 0.0
        %460 = vmatpush.msra.mxu0 0.0
        %461 = vmatpush.msra.mxu0 0.0
        %462 = vmatpush.msra.mxu0 %v445
        %463 = vmatmul.f32.gmra.mxu0 %v442
        %v464 = vpop.f32.mrf.mxu0
        %v465 = vadd.f32 %v439, %v464
        %466 = vdwg.mxu0
        %v468 = vsel %vm409, %v364, 0
        %470 = vmatpush.msra.mxu0 0.0
        %471 = vmatpush.msra.mxu0 0.0
        %472 = vmatpush.msra.mxu0 0.0
        %473 = vmatpush.msra.mxu0 0.0
        %474 = vmatpush.msra.mxu0 0.0
        %475 = vmatpush.msra.mxu0 0.0
        %476 = vmatpush.msra.mxu0 0.0
        %477 = vmatpush.msra.mxu0 0.0
        %478 = vmatpush.msra.mxu0 0.0
        %479 = vmatpush.msra.mxu0 0.0
        %480 = vmatpush.msra.mxu0 0.0
        %481 = vmatpush.msra.mxu0 0.0
        %482 = vmatpush.msra.mxu0 0.0
        %483 = vmatpush.msra.mxu0 0.0
        %484 = vmatpush.msra.mxu0 0.0
        %485 = vmatpush.msra.mxu0 %v468
        %486 = vmatmul.f32.gmra.mxu0 %v442
        %v487 = vpop.f32.mrf.mxu0
        %v488 = vadd.f32 %v439, %v487
        %489 = vdwg.mxu0
        %490 = vxpose.xlu0.b32.start [1/16] %v465, 128
        %491 = vxpose.xlu0.b32.cont [2/16] 0.0, 128
        %492 = vxpose.xlu0.b32.cont [3/16] 0.0, 128
        %493 = vxpose.xlu0.b32.cont [4/16] 0.0, 128
        %494 = vxpose.xlu0.b32.cont [5/16] 0.0, 128
        %495 = vxpose.xlu0.b32.cont [6/16] 0.0, 128
        %496 = vxpose.xlu0.b32.cont [7/16] 0.0, 128
        %497 = vxpose.xlu0.b32.cont [8/16] 0.0, 128
        %498 = vxpose.xlu0.b32.cont [9/16] 0.0, 128
        %499 = vxpose.xlu0.b32.cont [10/16] 0.0, 128
        %500 = vxpose.xlu0.b32.cont [11/16] 0.0, 128
        %501 = vxpose.xlu0.b32.cont [12/16] 0.0, 128
        %502 = vxpose.xlu0.b32.cont [13/16] 0.0, 128
        %503 = vxpose.xlu0.b32.cont [14/16] 0.0, 128
        %504 = vxpose.xlu0.b32.cont [15/16] 0.0, 128
        %505 = vxpose.xlu0.b32.end [16/16] 0.0, 128
        %v506 = vpop.trf.xlu0
        %v507 = vpop.trf.xlu0
        %v508 = vpop.trf.xlu0
        %v509 = vpop.trf.xlu0
        %v510 = vpop.trf.xlu0
        %v511 = vpop.trf.xlu0
        %v512 = vpop.trf.xlu0
        %v513 = vpop.trf.xlu0
        %v514 = vpop.trf.xlu0
        %v515 = vpop.trf.xlu0
        %v516 = vpop.trf.xlu0
        %v517 = vpop.trf.xlu0
        %v518 = vpop.trf.xlu0
        %v519 = vpop.trf.xlu0
        %v520 = vpop.trf.xlu0
        %v521 = vpop.trf.xlu0
        %v523 = vsel %vm405, %v506, 0
        %v526 = vsel %vm405, %v507, 0
        %v529 = vsel %vm405, %v508, 0
        %v532 = vsel %vm405, %v509, 0
        %v535 = vsel %vm405, %v510, 0
        %v538 = vsel %vm405, %v511, 0
        %v541 = vsel %vm405, %v512, 0
        %v544 = vsel %vm405, %v513, 0
        %v547 = vsel %vm405, %v514, 0
        %v550 = vsel %vm405, %v515, 0
        %v553 = vsel %vm405, %v516, 0
        %v556 = vsel %vm405, %v517, 0
        %v559 = vsel %vm405, %v518, 0
        %v562 = vsel %vm405, %v519, 0
        %v565 = vsel %vm405, %v520, 0
        %v568 = vsel %vm405, %v521, 0
        %v571 = vsel %vm409, %v433, 0
        %573 = vmatpush.msra.mxu0 0.0
        %574 = vmatpush.msra.mxu0 0.0
        %575 = vmatpush.msra.mxu0 0.0
        %576 = vmatpush.msra.mxu0 0.0
        %577 = vmatpush.msra.mxu0 0.0
        %578 = vmatpush.msra.mxu0 0.0
        %579 = vmatpush.msra.mxu0 0.0
        %580 = vmatpush.msra.mxu0 0.0
        %581 = vmatpush.msra.mxu0 0.0
        %582 = vmatpush.msra.mxu0 0.0
        %583 = vmatpush.msra.mxu0 0.0
        %584 = vmatpush.msra.mxu0 0.0
        %585 = vmatpush.msra.mxu0 0.0
        %586 = vmatpush.msra.mxu0 0.0
        %587 = vmatpush.msra.mxu0 0.0
        %588 = vmatpush.msra.mxu0 %v571
        %589 = vmatmul.f32.gmra.mxu0 %v523
        %v590 = vpop.f32.mrf.mxu0
        %v591 = vadd.f32 0.0, %v590
        %592 = vmatmul.f32.gmra.mxu0 %v526
        %v593 = vpop.f32.mrf.mxu0
        %v594 = vadd.f32 0.0, %v593
        %595 = vmatmul.f32.gmra.mxu0 %v529
        %v596 = vpop.f32.mrf.mxu0
        %v597 = vadd.f32 0.0, %v596
        %598 = vmatmul.f32.gmra.mxu0 %v532
        %v599 = vpop.f32.mrf.mxu0
        %v600 = vadd.f32 0.0, %v599
        %601 = vmatmul.f32.gmra.mxu0 %v535
        %v602 = vpop.f32.mrf.mxu0
        %v603 = vadd.f32 0.0, %v602
        %604 = vmatmul.f32.gmra.mxu0 %v538
        %v605 = vpop.f32.mrf.mxu0
        %v606 = vadd.f32 0.0, %v605
        %607 = vmatmul.f32.gmra.mxu0 %v541
        %v608 = vpop.f32.mrf.mxu0
        %v609 = vadd.f32 0.0, %v608
        %610 = vmatmul.f32.gmra.mxu0 %v544
        %v611 = vpop.f32.mrf.mxu0
        %v612 = vadd.f32 0.0, %v611
        %613 = vmatmul.f32.gmra.mxu0 %v547
        %v614 = vpop.f32.mrf.mxu0
        %v615 = vadd.f32 0.0, %v614
        %616 = vmatmul.f32.gmra.mxu0 %v550
        %v617 = vpop.f32.mrf.mxu0
        %v618 = vadd.f32 0.0, %v617
        %619 = vmatmul.f32.gmra.mxu0 %v553
        %v620 = vpop.f32.mrf.mxu0
        %v621 = vadd.f32 0.0, %v620
        %622 = vmatmul.f32.gmra.mxu0 %v556
        %v623 = vpop.f32.mrf.mxu0
        %v624 = vadd.f32 0.0, %v623
        %625 = vmatmul.f32.gmra.mxu0 %v559
        %v626 = vpop.f32.mrf.mxu0
        %v627 = vadd.f32 0.0, %v626
        %628 = vmatmul.f32.gmra.mxu0 %v562
        %v629 = vpop.f32.mrf.mxu0
        %v630 = vadd.f32 0.0, %v629
        %631 = vmatmul.f32.gmra.mxu0 %v565
        %v632 = vpop.f32.mrf.mxu0
        %v633 = vadd.f32 0.0, %v632
        %634 = vmatmul.f32.gmra.mxu0 %v568
        %v635 = vpop.f32.mrf.mxu0
        %v636 = vadd.f32 0.0, %v635
        %637 = vdwg.mxu0
        %v638 = vsel %vm382, -1e+30, %v591
        %v639 = vsel %vm383, -1e+30, %v594
        %v640 = vsel %vm384, -1e+30, %v597
        %v641 = vsel %vm385, -1e+30, %v600
        %v642 = vsel %vm386, -1e+30, %v603
        %v643 = vsel %vm387, -1e+30, %v606
        %v644 = vsel %vm388, -1e+30, %v609
        %v645 = vsel %vm389, -1e+30, %v612
        %v646 = vsel %vm390, -1e+30, %v615
        %v647 = vsel %vm391, -1e+30, %v618
        %v648 = vsel %vm392, -1e+30, %v621
        %v649 = vsel %vm393, -1e+30, %v624
        %v650 = vsel %vm394, -1e+30, %v627
        %v651 = vsel %vm395, -1e+30, %v630
        %v652 = vsel %vm396, -1e+30, %v633
        %v653 = vsel %vm397, -1e+30, %v636
        %v654 = vmax.f32 %v638, %v642
        %v655 = vmax.f32 %v639, %v643
        %v656 = vmax.f32 %v640, %v644
        %v657 = vmax.f32 %v641, %v645
        %v658 = vmax.f32 %v654, %v646
        %v659 = vmax.f32 %v655, %v647
        %v660 = vmax.f32 %v656, %v648
        %v661 = vmax.f32 %v657, %v649
        %v662 = vmax.f32 %v658, %v650
        %v663 = vmax.f32 %v659, %v651
        %v664 = vmax.f32 %v660, %v652
        %v665 = vmax.f32 %v661, %v653
        %v666 = vmax.f32 %v662, %v663
        %v667 = vmax.f32 %v664, %v665
        %v668 = vmax.f32 %v666, %v667
        %v669 = vrot.slane %v668, 4
        %v670 = vmax.f32 %v668, %v669
        %v671 = vrot.slane %v670, 2
        %v672 = vmax.f32 %v670, %v671
        %v673 = vrot.slane %v672, 1
        %v674 = vmax.f32 %v672, %v673
        %v675 = vsub.f32 %v638, %v674
        %v676 = vsub.f32 %v639, %v674
        %v677 = vsub.f32 %v640, %v674
        %v678 = vsub.f32 %v641, %v674
        %v679 = vsub.f32 %v642, %v674
        %v680 = vsub.f32 %v643, %v674
        %v681 = vsub.f32 %v644, %v674
        %v682 = vsub.f32 %v645, %v674
        %v683 = vsub.f32 %v646, %v674
        %v684 = vsub.f32 %v647, %v674
        %v685 = vsub.f32 %v648, %v674
        %v686 = vsub.f32 %v649, %v674
        %v687 = vsub.f32 %v650, %v674
        %v688 = vsub.f32 %v651, %v674
        %v689 = vsub.f32 %v652, %v674
        %v690 = vsub.f32 %v653, %v674
        %v691 = vmul.f32 %v675, 1.442695
        %v692 = vpow.pop %v691
        %v693 = vmul.f32 %v676, 1.442695
        %v694 = vpow.pop %v693
        %v695 = vmul.f32 %v677, 1.442695
        %v696 = vpow.pop %v695
        %v697 = vmul.f32 %v678, 1.442695
        %v698 = vpow.pop %v697
        %v699 = vmul.f32 %v679, 1.442695
        %v700 = vpow.pop %v699
        %v701 = vmul.f32 %v680, 1.442695
        %v702 = vpow.pop %v701
        %v703 = vmul.f32 %v681, 1.442695
        %v704 = vpow.pop %v703
        %v705 = vmul.f32 %v682, 1.442695
        %v706 = vpow.pop %v705
        %v707 = vmul.f32 %v683, 1.442695
        %v708 = vpow.pop %v707
        %v709 = vmul.f32 %v684, 1.442695
        %v710 = vpow.pop %v709
        %v711 = vmul.f32 %v685, 1.442695
        %v712 = vpow.pop %v711
        %v713 = vmul.f32 %v686, 1.442695
        %v714 = vpow.pop %v713
        %v715 = vmul.f32 %v687, 1.442695
        %v716 = vpow.pop %v715
        %v717 = vmul.f32 %v688, 1.442695
        %v718 = vpow.pop %v717
        %v719 = vmul.f32 %v689, 1.442695
        %v720 = vpow.pop %v719
        %v721 = vmul.f32 %v690, 1.442695
        %v722 = vpow.pop %v721
        %v723 = vadd.f32 %v692, %v694
        %v724 = vadd.f32 %v723, %v696
        %v725 = vadd.f32 %v724, %v698
        %v726 = vadd.f32 %v725, %v700
        %v727 = vadd.f32 %v726, %v702
        %v728 = vadd.f32 %v727, %v704
        %v729 = vadd.f32 %v728, %v706
        %v730 = vadd.f32 %v729, %v708
        %v731 = vadd.f32 %v730, %v710
        %v732 = vadd.f32 %v731, %v712
        %v733 = vadd.f32 %v732, %v714
        %v734 = vadd.f32 %v733, %v716
        %v735 = vadd.f32 %v734, %v718
        %v736 = vadd.f32 %v735, %v720
        %v737 = vadd.f32 %v736, %v722
        %v738 = vrot.slane %v737, 4
        %v739 = vadd.f32 %v737, %v738
        %v740 = vrot.slane %v739, 2
        %v741 = vadd.f32 %v739, %v740
        %v742 = vrot.slane %v741, 1
        %v743 = vadd.f32 %v741, %v742
        %v744 = vrcp.pop %v743
        %v745 = vmul.f32 %v692, %v744
        %v746 = vmul.f32 %v694, %v744
        %v747 = vmul.f32 %v696, %v744
        %v748 = vmul.f32 %v698, %v744
        %v749 = vmul.f32 %v700, %v744
        %v750 = vmul.f32 %v702, %v744
        %v751 = vmul.f32 %v704, %v744
        %v752 = vmul.f32 %v706, %v744
        %v753 = vmul.f32 %v708, %v744
        %v754 = vmul.f32 %v710, %v744
        %v755 = vmul.f32 %v712, %v744
        %v756 = vmul.f32 %v714, %v744
        %v757 = vmul.f32 %v716, %v744
        %v758 = vmul.f32 %v718, %v744
        %v759 = vmul.f32 %v720, %v744
        %v760 = vmul.f32 %v722, %v744
        %761 = vmatpush.msra.mxu0 %v760
        %762 = vmatpush.msra.mxu0 %v759
        %763 = vmatpush.msra.mxu0 %v758
        %764 = vmatpush.msra.mxu0 %v757
        %765 = vmatpush.msra.mxu0 %v756
        %766 = vmatpush.msra.mxu0 %v755
        %767 = vmatpush.msra.mxu0 %v754
        %768 = vmatpush.msra.mxu0 %v753
        %769 = vmatpush.msra.mxu0 %v752
        %770 = vmatpush.msra.mxu0 %v751
        %771 = vmatpush.msra.mxu0 %v750
        %772 = vmatpush.msra.mxu0 %v749
        %773 = vmatpush.msra.mxu0 %v748
        %774 = vmatpush.msra.mxu0 %v747
        %775 = vmatpush.msra.mxu0 %v746
        %776 = vmatpush.msra.mxu0 %v745
        %777 = vmatmul.f32.gmra.mxu0 %v488
        %v778 = vpop.f32.mrf.mxu0
        %v779 = vadd.f32 0.0, %v778
        %780 = vdwg.mxu0
        %v781 = vld [vmem:[%s7] sm:$0xf]
        %s782 = scalar_lea.vmem %s3, 4
        %v783 = vld [vmem:[%s782] sm:$0xf]
        %s784 = scalar_lea.vmem %s4, 4
        %v785 = vld [vmem:[%s784] sm:$0xf]
        %787 = vset.pattern.permute.xlu0 0
        %788 = vperm.xlu0 %787, %v785
        %v789 = vpop.permute.xlu0 %788
        %v792 = vsel %vm405, %v783, 0
        %794 = vmatpush.msra.mxu0 0.0
        %795 = vmatpush.msra.mxu0 0.0
        %796 = vmatpush.msra.mxu0 0.0
        %797 = vmatpush.msra.mxu0 0.0
        %798 = vmatpush.msra.mxu0 0.0
        %799 = vmatpush.msra.mxu0 0.0
        %800 = vmatpush.msra.mxu0 0.0
        %801 = vmatpush.msra.mxu0 0.0
        %802 = vmatpush.msra.mxu0 0.0
        %803 = vmatpush.msra.mxu0 0.0
        %804 = vmatpush.msra.mxu0 0.0
        %805 = vmatpush.msra.mxu0 0.0
        %806 = vmatpush.msra.mxu0 0.0
        %807 = vmatpush.msra.mxu0 0.0
        %808 = vmatpush.msra.mxu0 0.0
        %809 = vmatpush.msra.mxu0 %v411
        %810 = vmatmul.f32.gmra.mxu0 %v792
        %v811 = vpop.f32.mrf.mxu0
        %v812 = vadd.f32 %v789, %v811
        %813 = vdwg.mxu0
        %v814 = vmul.f32 %v812, 0.5
        %s815 = scalar_lea.vmem %s5, 4
        %v816 = vld [vmem:[%s815] sm:$0xf]
        %s817 = scalar_lea.vmem %s6, 4
        %v818 = vld [vmem:[%s817] sm:$0xf]
        %820 = vset.pattern.permute.xlu0 0
        %821 = vperm.xlu0 %820, %v818
        %v822 = vpop.permute.xlu0 %821
        %v825 = vsel %vm405, %v816, 0
        %827 = vmatpush.msra.mxu0 0.0
        %828 = vmatpush.msra.mxu0 0.0
        %829 = vmatpush.msra.mxu0 0.0
        %830 = vmatpush.msra.mxu0 0.0
        %831 = vmatpush.msra.mxu0 0.0
        %832 = vmatpush.msra.mxu0 0.0
        %833 = vmatpush.msra.mxu0 0.0
        %834 = vmatpush.msra.mxu0 0.0
        %835 = vmatpush.msra.mxu0 0.0
        %836 = vmatpush.msra.mxu0 0.0
        %837 = vmatpush.msra.mxu0 0.0
        %838 = vmatpush.msra.mxu0 0.0
        %839 = vmatpush.msra.mxu0 0.0
        %840 = vmatpush.msra.mxu0 0.0
        %841 = vmatpush.msra.mxu0 0.0
        %842 = vmatpush.msra.mxu0 %v445
        %843 = vmatmul.f32.gmra.mxu0 %v825
        %v844 = vpop.f32.mrf.mxu0
        %v845 = vadd.f32 %v822, %v844
        %846 = vdwg.mxu0
        %847 = vmatpush.msra.mxu0 0.0
        %848 = vmatpush.msra.mxu0 0.0
        %849 = vmatpush.msra.mxu0 0.0
        %850 = vmatpush.msra.mxu0 0.0
        %851 = vmatpush.msra.mxu0 0.0
        %852 = vmatpush.msra.mxu0 0.0
        %853 = vmatpush.msra.mxu0 0.0
        %854 = vmatpush.msra.mxu0 0.0
        %855 = vmatpush.msra.mxu0 0.0
        %856 = vmatpush.msra.mxu0 0.0
        %857 = vmatpush.msra.mxu0 0.0
        %858 = vmatpush.msra.mxu0 0.0
        %859 = vmatpush.msra.mxu0 0.0
        %860 = vmatpush.msra.mxu0 0.0
        %861 = vmatpush.msra.mxu0 0.0
        %862 = vmatpush.msra.mxu0 %v468
        %863 = vmatmul.f32.gmra.mxu0 %v825
        %v864 = vpop.f32.mrf.mxu0
        %v865 = vadd.f32 %v822, %v864
        %866 = vdwg.mxu0
        %867 = vxpose.xlu0.b32.start [1/16] %v845, 128
        %868 = vxpose.xlu0.b32.cont [2/16] 0.0, 128
        %869 = vxpose.xlu0.b32.cont [3/16] 0.0, 128
        %870 = vxpose.xlu0.b32.cont [4/16] 0.0, 128
        %871 = vxpose.xlu0.b32.cont [5/16] 0.0, 128
        %872 = vxpose.xlu0.b32.cont [6/16] 0.0, 128
        %873 = vxpose.xlu0.b32.cont [7/16] 0.0, 128
        %874 = vxpose.xlu0.b32.cont [8/16] 0.0, 128
        %875 = vxpose.xlu0.b32.cont [9/16] 0.0, 128
        %876 = vxpose.xlu0.b32.cont [10/16] 0.0, 128
        %877 = vxpose.xlu0.b32.cont [11/16] 0.0, 128
        %878 = vxpose.xlu0.b32.cont [12/16] 0.0, 128
        %879 = vxpose.xlu0.b32.cont [13/16] 0.0, 128
        %880 = vxpose.xlu0.b32.cont [14/16] 0.0, 128
        %881 = vxpose.xlu0.b32.cont [15/16] 0.0, 128
        %882 = vxpose.xlu0.b32.end [16/16] 0.0, 128
        %v883 = vpop.trf.xlu0
        %v884 = vpop.trf.xlu0
        %v885 = vpop.trf.xlu0
        %v886 = vpop.trf.xlu0
        %v887 = vpop.trf.xlu0
        %v888 = vpop.trf.xlu0
        %v889 = vpop.trf.xlu0
        %v890 = vpop.trf.xlu0
        %v891 = vpop.trf.xlu0
        %v892 = vpop.trf.xlu0
        %v893 = vpop.trf.xlu0
        %v894 = vpop.trf.xlu0
        %v895 = vpop.trf.xlu0
        %v896 = vpop.trf.xlu0
        %v897 = vpop.trf.xlu0
        %v898 = vpop.trf.xlu0
        %v900 = vsel %vm405, %v883, 0
        %v903 = vsel %vm405, %v884, 0
        %v906 = vsel %vm405, %v885, 0
        %v909 = vsel %vm405, %v886, 0
        %v912 = vsel %vm405, %v887, 0
        %v915 = vsel %vm405, %v888, 0
        %v918 = vsel %vm405, %v889, 0
        %v921 = vsel %vm405, %v890, 0
        %v924 = vsel %vm405, %v891, 0
        %v927 = vsel %vm405, %v892, 0
        %v930 = vsel %vm405, %v893, 0
        %v933 = vsel %vm405, %v894, 0
        %v936 = vsel %vm405, %v895, 0
        %v939 = vsel %vm405, %v896, 0
        %v942 = vsel %vm405, %v897, 0
        %v945 = vsel %vm405, %v898, 0
        %v948 = vsel %vm409, %v814, 0
        %950 = vmatpush.msra.mxu0 0.0
        %951 = vmatpush.msra.mxu0 0.0
        %952 = vmatpush.msra.mxu0 0.0
        %953 = vmatpush.msra.mxu0 0.0
        %954 = vmatpush.msra.mxu0 0.0
        %955 = vmatpush.msra.mxu0 0.0
        %956 = vmatpush.msra.mxu0 0.0
        %957 = vmatpush.msra.mxu0 0.0
        %958 = vmatpush.msra.mxu0 0.0
        %959 = vmatpush.msra.mxu0 0.0
        %960 = vmatpush.msra.mxu0 0.0
        %961 = vmatpush.msra.mxu0 0.0
        %962 = vmatpush.msra.mxu0 0.0
        %963 = vmatpush.msra.mxu0 0.0
        %964 = vmatpush.msra.mxu0 0.0
        %965 = vmatpush.msra.mxu0 %v948
        %966 = vmatmul.f32.gmra.mxu0 %v900
        %v967 = vpop.f32.mrf.mxu0
        %v968 = vadd.f32 0.0, %v967
        %969 = vmatmul.f32.gmra.mxu0 %v903
        %v970 = vpop.f32.mrf.mxu0
        %v971 = vadd.f32 0.0, %v970
        %972 = vmatmul.f32.gmra.mxu0 %v906
        %v973 = vpop.f32.mrf.mxu0
        %v974 = vadd.f32 0.0, %v973
        %975 = vmatmul.f32.gmra.mxu0 %v909
        %v976 = vpop.f32.mrf.mxu0
        %v977 = vadd.f32 0.0, %v976
        %978 = vmatmul.f32.gmra.mxu0 %v912
        %v979 = vpop.f32.mrf.mxu0
        %v980 = vadd.f32 0.0, %v979
        %981 = vmatmul.f32.gmra.mxu0 %v915
        %v982 = vpop.f32.mrf.mxu0
        %v983 = vadd.f32 0.0, %v982
        %984 = vmatmul.f32.gmra.mxu0 %v918
        %v985 = vpop.f32.mrf.mxu0
        %v986 = vadd.f32 0.0, %v985
        %987 = vmatmul.f32.gmra.mxu0 %v921
        %v988 = vpop.f32.mrf.mxu0
        %v989 = vadd.f32 0.0, %v988
        %990 = vmatmul.f32.gmra.mxu0 %v924
        %v991 = vpop.f32.mrf.mxu0
        %v992 = vadd.f32 0.0, %v991
        %993 = vmatmul.f32.gmra.mxu0 %v927
        %v994 = vpop.f32.mrf.mxu0
        %v995 = vadd.f32 0.0, %v994
        %996 = vmatmul.f32.gmra.mxu0 %v930
        %v997 = vpop.f32.mrf.mxu0
        %v998 = vadd.f32 0.0, %v997
        %999 = vmatmul.f32.gmra.mxu0 %v933
        %v1000 = vpop.f32.mrf.mxu0
        %v1001 = vadd.f32 0.0, %v1000
        %1002 = vmatmul.f32.gmra.mxu0 %v936
        %v1003 = vpop.f32.mrf.mxu0
        %v1004 = vadd.f32 0.0, %v1003
        %1005 = vmatmul.f32.gmra.mxu0 %v939
        %v1006 = vpop.f32.mrf.mxu0
        %v1007 = vadd.f32 0.0, %v1006
        %1008 = vmatmul.f32.gmra.mxu0 %v942
        %v1009 = vpop.f32.mrf.mxu0
        %v1010 = vadd.f32 0.0, %v1009
        %1011 = vmatmul.f32.gmra.mxu0 %v945
        %v1012 = vpop.f32.mrf.mxu0
        %v1013 = vadd.f32 0.0, %v1012
        %1014 = vdwg.mxu0
        %v1015 = vsel %vm382, -1e+30, %v968
        %v1016 = vsel %vm383, -1e+30, %v971
        %v1017 = vsel %vm384, -1e+30, %v974
        %v1018 = vsel %vm385, -1e+30, %v977
        %v1019 = vsel %vm386, -1e+30, %v980
        %v1020 = vsel %vm387, -1e+30, %v983
        %v1021 = vsel %vm388, -1e+30, %v986
        %v1022 = vsel %vm389, -1e+30, %v989
        %v1023 = vsel %vm390, -1e+30, %v992
        %v1024 = vsel %vm391, -1e+30, %v995
        %v1025 = vsel %vm392, -1e+30, %v998
        %v1026 = vsel %vm393, -1e+30, %v1001
        %v1027 = vsel %vm394, -1e+30, %v1004
        %v1028 = vsel %vm395, -1e+30, %v1007
        %v1029 = vsel %vm396, -1e+30, %v1010
        %v1030 = vsel %vm397, -1e+30, %v1013
        %v1031 = vmax.f32 %v1015, %v1019
        %v1032 = vmax.f32 %v1016, %v1020
        %v1033 = vmax.f32 %v1017, %v1021
        %v1034 = vmax.f32 %v1018, %v1022
        %v1035 = vmax.f32 %v1031, %v1023
        %v1036 = vmax.f32 %v1032, %v1024
        %v1037 = vmax.f32 %v1033, %v1025
        %v1038 = vmax.f32 %v1034, %v1026
        %v1039 = vmax.f32 %v1035, %v1027
        %v1040 = vmax.f32 %v1036, %v1028
        %v1041 = vmax.f32 %v1037, %v1029
        %v1042 = vmax.f32 %v1038, %v1030
        %v1043 = vmax.f32 %v1039, %v1040
        %v1044 = vmax.f32 %v1041, %v1042
        %v1045 = vmax.f32 %v1043, %v1044
        %v1046 = vrot.slane %v1045, 4
        %v1047 = vmax.f32 %v1045, %v1046
        %v1048 = vrot.slane %v1047, 2
        %v1049 = vmax.f32 %v1047, %v1048
        %v1050 = vrot.slane %v1049, 1
        %v1051 = vmax.f32 %v1049, %v1050
        %v1052 = vsub.f32 %v1015, %v1051
        %v1053 = vsub.f32 %v1016, %v1051
        %v1054 = vsub.f32 %v1017, %v1051
        %v1055 = vsub.f32 %v1018, %v1051
        %v1056 = vsub.f32 %v1019, %v1051
        %v1057 = vsub.f32 %v1020, %v1051
        %v1058 = vsub.f32 %v1021, %v1051
        %v1059 = vsub.f32 %v1022, %v1051
        %v1060 = vsub.f32 %v1023, %v1051
        %v1061 = vsub.f32 %v1024, %v1051
        %v1062 = vsub.f32 %v1025, %v1051
        %v1063 = vsub.f32 %v1026, %v1051
        %v1064 = vsub.f32 %v1027, %v1051
        %v1065 = vsub.f32 %v1028, %v1051
        %v1066 = vsub.f32 %v1029, %v1051
        %v1067 = vsub.f32 %v1030, %v1051
        %v1068 = vmul.f32 %v1052, 1.442695
        %v1069 = vpow.pop %v1068
        %v1070 = vmul.f32 %v1053, 1.442695
        %v1071 = vpow.pop %v1070
        %v1072 = vmul.f32 %v1054, 1.442695
        %v1073 = vpow.pop %v1072
        %v1074 = vmul.f32 %v1055, 1.442695
        %v1075 = vpow.pop %v1074
        %v1076 = vmul.f32 %v1056, 1.442695
        %v1077 = vpow.pop %v1076
        %v1078 = vmul.f32 %v1057, 1.442695
        %v1079 = vpow.pop %v1078
        %v1080 = vmul.f32 %v1058, 1.442695
        %v1081 = vpow.pop %v1080
        %v1082 = vmul.f32 %v1059, 1.442695
        %v1083 = vpow.pop %v1082
        %v1084 = vmul.f32 %v1060, 1.442695
        %v1085 = vpow.pop %v1084
        %v1086 = vmul.f32 %v1061, 1.442695
        %v1087 = vpow.pop %v1086
        %v1088 = vmul.f32 %v1062, 1.442695
        %v1089 = vpow.pop %v1088
        %v1090 = vmul.f32 %v1063, 1.442695
        %v1091 = vpow.pop %v1090
        %v1092 = vmul.f32 %v1064, 1.442695
        %v1093 = vpow.pop %v1092
        %v1094 = vmul.f32 %v1065, 1.442695
        %v1095 = vpow.pop %v1094
        %v1096 = vmul.f32 %v1066, 1.442695
        %v1097 = vpow.pop %v1096
        %v1098 = vmul.f32 %v1067, 1.442695
        %v1099 = vpow.pop %v1098
        %v1100 = vadd.f32 %v1069, %v1071
        %v1101 = vadd.f32 %v1100, %v1073
        %v1102 = vadd.f32 %v1101, %v1075
        %v1103 = vadd.f32 %v1102, %v1077
        %v1104 = vadd.f32 %v1103, %v1079
        %v1105 = vadd.f32 %v1104, %v1081
        %v1106 = vadd.f32 %v1105, %v1083
        %v1107 = vadd.f32 %v1106, %v1085
        %v1108 = vadd.f32 %v1107, %v1087
        %v1109 = vadd.f32 %v1108, %v1089
        %v1110 = vadd.f32 %v1109, %v1091
        %v1111 = vadd.f32 %v1110, %v1093
        %v1112 = vadd.f32 %v1111, %v1095
        %v1113 = vadd.f32 %v1112, %v1097
        %v1114 = vadd.f32 %v1113, %v1099
        %v1115 = vrot.slane %v1114, 4
        %v1116 = vadd.f32 %v1114, %v1115
        %v1117 = vrot.slane %v1116, 2
        %v1118 = vadd.f32 %v1116, %v1117
        %v1119 = vrot.slane %v1118, 1
        %v1120 = vadd.f32 %v1118, %v1119
        %v1121 = vrcp.pop %v1120
        %v1122 = vmul.f32 %v1069, %v1121
        %v1123 = vmul.f32 %v1071, %v1121
        %v1124 = vmul.f32 %v1073, %v1121
        %v1125 = vmul.f32 %v1075, %v1121
        %v1126 = vmul.f32 %v1077, %v1121
        %v1127 = vmul.f32 %v1079, %v1121
        %v1128 = vmul.f32 %v1081, %v1121
        %v1129 = vmul.f32 %v1083, %v1121
        %v1130 = vmul.f32 %v1085, %v1121
        %v1131 = vmul.f32 %v1087, %v1121
        %v1132 = vmul.f32 %v1089, %v1121
        %v1133 = vmul.f32 %v1091, %v1121
        %v1134 = vmul.f32 %v1093, %v1121
        %v1135 = vmul.f32 %v1095, %v1121
        %v1136 = vmul.f32 %v1097, %v1121
        %v1137 = vmul.f32 %v1099, %v1121
        %1138 = vmatpush.msra.mxu0 %v1137
        %1139 = vmatpush.msra.mxu0 %v1136
        %1140 = vmatpush.msra.mxu0 %v1135
        %1141 = vmatpush.msra.mxu0 %v1134
        %1142 = vmatpush.msra.mxu0 %v1133
        %1143 = vmatpush.msra.mxu0 %v1132
        %1144 = vmatpush.msra.mxu0 %v1131
        %1145 = vmatpush.msra.mxu0 %v1130
        %1146 = vmatpush.msra.mxu0 %v1129
        %1147 = vmatpush.msra.mxu0 %v1128
        %1148 = vmatpush.msra.mxu0 %v1127
        %1149 = vmatpush.msra.mxu0 %v1126
        %1150 = vmatpush.msra.mxu0 %v1125
        %1151 = vmatpush.msra.mxu0 %v1124
        %1152 = vmatpush.msra.mxu0 %v1123
        %1153 = vmatpush.msra.mxu0 %v1122
        %1154 = vmatmul.f32.gmra.mxu0 %v865
        %v1155 = vpop.f32.mrf.mxu0
        %v1156 = vadd.f32 0.0, %v1155
        %1157 = vdwg.mxu0
        %s1158 = scalar_lea.vmem %s7, 4
        %v1159 = vld [vmem:[%s1158] sm:$0xf]
        %v1161 = vsel %vm405, %v1159, 0
        %v1164 = vsel %vm409, %v1156, 0
        %1166 = vmatpush.msra.mxu0 0.0
        %1167 = vmatpush.msra.mxu0 0.0
        %1168 = vmatpush.msra.mxu0 0.0
        %1169 = vmatpush.msra.mxu0 0.0
        %1170 = vmatpush.msra.mxu0 0.0
        %1171 = vmatpush.msra.mxu0 0.0
        %1172 = vmatpush.msra.mxu0 0.0
        %1173 = vmatpush.msra.mxu0 0.0
        %1174 = vmatpush.msra.mxu0 0.0
        %1175 = vmatpush.msra.mxu0 0.0
        %1176 = vmatpush.msra.mxu0 0.0
        %1177 = vmatpush.msra.mxu0 0.0
        %1178 = vmatpush.msra.mxu0 0.0
        %1179 = vmatpush.msra.mxu0 0.0
        %1180 = vmatpush.msra.mxu0 0.0
        %1181 = vmatpush.msra.mxu0 %v1164
        %1182 = vmatmul.f32.gmra.mxu0 %v1161
        %v1183 = vpop.f32.mrf.mxu0
        %v1184 = vadd.f32 0.0, %v1183
        %1185 = vdwg.mxu0
        %v1187 = vsel %vm405, %v781, 0
        %v1190 = vsel %vm409, %v779, 0
        %1192 = vmatpush.msra.mxu0 0.0
        %1193 = vmatpush.msra.mxu0 0.0
        %1194 = vmatpush.msra.mxu0 0.0
        %1195 = vmatpush.msra.mxu0 0.0
        %1196 = vmatpush.msra.mxu0 0.0
        %1197 = vmatpush.msra.mxu0 0.0
        %1198 = vmatpush.msra.mxu0 0.0
        %1199 = vmatpush.msra.mxu0 0.0
        %1200 = vmatpush.msra.mxu0 0.0
        %1201 = vmatpush.msra.mxu0 0.0
        %1202 = vmatpush.msra.mxu0 0.0
        %1203 = vmatpush.msra.mxu0 0.0
        %1204 = vmatpush.msra.mxu0 0.0
        %1205 = vmatpush.msra.mxu0 0.0
        %1206 = vmatpush.msra.mxu0 0.0
        %1207 = vmatpush.msra.mxu0 %v1190
        %1208 = vmatmul.f32.gmra.mxu0 %v1187
        %v1209 = vpop.f32.mrf.mxu0
        %v1210 = vadd.f32 %v1184, %v1209
        %1211 = vdwg.mxu0
        %s1212 = scalar_lea.vmem %s3, 8
        %v1213 = vld [vmem:[%s1212] sm:$0xf]
        %s1214 = scalar_lea.vmem %s4, 8
        %v1215 = vld [vmem:[%s1214] sm:$0xf]
        %1217 = vset.pattern.permute.xlu0 0
        %1218 = vperm.xlu0 %1217, %v1215
        %v1219 = vpop.permute.xlu0 %1218
        %v1222 = vsel %vm405, %v1213, 0
        %1224 = vmatpush.msra.mxu0 0.0
        %1225 = vmatpush.msra.mxu0 0.0
        %1226 = vmatpush.msra.mxu0 0.0
        %1227 = vmatpush.msra.mxu0 0.0
        %1228 = vmatpush.msra.mxu0 0.0
        %1229 = vmatpush.msra.mxu0 0.0
        %1230 = vmatpush.msra.mxu0 0.0
        %1231 = vmatpush.msra.mxu0 0.0
        %1232 = vmatpush.msra.mxu0 0.0
        %1233 = vmatpush.msra.mxu0 0.0
        %1234 = vmatpush.msra.mxu0 0.0
        %1235 = vmatpush.msra.mxu0 0.0
        %1236 = vmatpush.msra.mxu0 0.0
        %1237 = vmatpush.msra.mxu0 0.0
        %1238 = vmatpush.msra.mxu0 0.0
        %1239 = vmatpush.msra.mxu0 %v411
        %1240 = vmatmul.f32.gmra.mxu0 %v1222
        %v1241 = vpop.f32.mrf.mxu0
        %v1242 = vadd.f32 %v1219, %v1241
        %1243 = vdwg.mxu0
        %v1244 = vmul.f32 %v1242, 0.5
        %s1245 = scalar_lea.vmem %s5, 8
        %v1246 = vld [vmem:[%s1245] sm:$0xf]
        %s1247 = scalar_lea.vmem %s6, 8
        %v1248 = vld [vmem:[%s1247] sm:$0xf]
        %1250 = vset.pattern.permute.xlu0 0
        %1251 = vperm.xlu0 %1250, %v1248
        %v1252 = vpop.permute.xlu0 %1251
        %v1255 = vsel %vm405, %v1246, 0
        %1257 = vmatpush.msra.mxu0 0.0
        %1258 = vmatpush.msra.mxu0 0.0
        %1259 = vmatpush.msra.mxu0 0.0
        %1260 = vmatpush.msra.mxu0 0.0
        %1261 = vmatpush.msra.mxu0 0.0
        %1262 = vmatpush.msra.mxu0 0.0
        %1263 = vmatpush.msra.mxu0 0.0
        %1264 = vmatpush.msra.mxu0 0.0
        %1265 = vmatpush.msra.mxu0 0.0
        %1266 = vmatpush.msra.mxu0 0.0
        %1267 = vmatpush.msra.mxu0 0.0
        %1268 = vmatpush.msra.mxu0 0.0
        %1269 = vmatpush.msra.mxu0 0.0
        %1270 = vmatpush.msra.mxu0 0.0
        %1271 = vmatpush.msra.mxu0 0.0
        %1272 = vmatpush.msra.mxu0 %v445
        %1273 = vmatmul.f32.gmra.mxu0 %v1255
        %v1274 = vpop.f32.mrf.mxu0
        %v1275 = vadd.f32 %v1252, %v1274
        %1276 = vdwg.mxu0
        %1277 = vmatpush.msra.mxu0 0.0
        %1278 = vmatpush.msra.mxu0 0.0
        %1279 = vmatpush.msra.mxu0 0.0
        %1280 = vmatpush.msra.mxu0 0.0
        %1281 = vmatpush.msra.mxu0 0.0
        %1282 = vmatpush.msra.mxu0 0.0
        %1283 = vmatpush.msra.mxu0 0.0
        %1284 = vmatpush.msra.mxu0 0.0
        %1285 = vmatpush.msra.mxu0 0.0
        %1286 = vmatpush.msra.mxu0 0.0
        %1287 = vmatpush.msra.mxu0 0.0
        %1288 = vmatpush.msra.mxu0 0.0
        %1289 = vmatpush.msra.mxu0 0.0
        %1290 = vmatpush.msra.mxu0 0.0
        %1291 = vmatpush.msra.mxu0 0.0
        %1292 = vmatpush.msra.mxu0 %v468
        %1293 = vmatmul.f32.gmra.mxu0 %v1255
        %v1294 = vpop.f32.mrf.mxu0
        %v1295 = vadd.f32 %v1252, %v1294
        %1296 = vdwg.mxu0
        %1297 = vxpose.xlu0.b32.start [1/16] %v1275, 128
        %1298 = vxpose.xlu0.b32.cont [2/16] 0.0, 128
        %1299 = vxpose.xlu0.b32.cont [3/16] 0.0, 128
        %1300 = vxpose.xlu0.b32.cont [4/16] 0.0, 128
        %1301 = vxpose.xlu0.b32.cont [5/16] 0.0, 128
        %1302 = vxpose.xlu0.b32.cont [6/16] 0.0, 128
        %1303 = vxpose.xlu0.b32.cont [7/16] 0.0, 128
        %1304 = vxpose.xlu0.b32.cont [8/16] 0.0, 128
        %1305 = vxpose.xlu0.b32.cont [9/16] 0.0, 128
        %1306 = vxpose.xlu0.b32.cont [10/16] 0.0, 128
        %1307 = vxpose.xlu0.b32.cont [11/16] 0.0, 128
        %1308 = vxpose.xlu0.b32.cont [12/16] 0.0, 128
        %1309 = vxpose.xlu0.b32.cont [13/16] 0.0, 128
        %1310 = vxpose.xlu0.b32.cont [14/16] 0.0, 128
        %1311 = vxpose.xlu0.b32.cont [15/16] 0.0, 128
        %1312 = vxpose.xlu0.b32.end [16/16] 0.0, 128
        %v1313 = vpop.trf.xlu0
        %v1314 = vpop.trf.xlu0
        %v1315 = vpop.trf.xlu0
        %v1316 = vpop.trf.xlu0
        %v1317 = vpop.trf.xlu0
        %v1318 = vpop.trf.xlu0
        %v1319 = vpop.trf.xlu0
        %v1320 = vpop.trf.xlu0
        %v1321 = vpop.trf.xlu0
        %v1322 = vpop.trf.xlu0
        %v1323 = vpop.trf.xlu0
        %v1324 = vpop.trf.xlu0
        %v1325 = vpop.trf.xlu0
        %v1326 = vpop.trf.xlu0
        %v1327 = vpop.trf.xlu0
        %v1328 = vpop.trf.xlu0
        %v1330 = vsel %vm405, %v1313, 0
        %v1333 = vsel %vm405, %v1314, 0
        %v1336 = vsel %vm405, %v1315, 0
        %v1339 = vsel %vm405, %v1316, 0
        %v1342 = vsel %vm405, %v1317, 0
        %v1345 = vsel %vm405, %v1318, 0
        %v1348 = vsel %vm405, %v1319, 0
        %v1351 = vsel %vm405, %v1320, 0
        %v1354 = vsel %vm405, %v1321, 0
        %v1357 = vsel %vm405, %v1322, 0
        %v1360 = vsel %vm405, %v1323, 0
        %v1363 = vsel %vm405, %v1324, 0
        %v1366 = vsel %vm405, %v1325, 0
        %v1369 = vsel %vm405, %v1326, 0
        %v1372 = vsel %vm405, %v1327, 0
        %v1375 = vsel %vm405, %v1328, 0
        %v1378 = vsel %vm409, %v1244, 0
        %1380 = vmatpush.msra.mxu0 0.0
        %1381 = vmatpush.msra.mxu0 0.0
        %1382 = vmatpush.msra.mxu0 0.0
        %1383 = vmatpush.msra.mxu0 0.0
        %1384 = vmatpush.msra.mxu0 0.0
        %1385 = vmatpush.msra.mxu0 0.0
        %1386 = vmatpush.msra.mxu0 0.0
        %1387 = vmatpush.msra.mxu0 0.0
        %1388 = vmatpush.msra.mxu0 0.0
        %1389 = vmatpush.msra.mxu0 0.0
        %1390 = vmatpush.msra.mxu0 0.0
        %1391 = vmatpush.msra.mxu0 0.0
        %1392 = vmatpush.msra.mxu0 0.0
        %1393 = vmatpush.msra.mxu0 0.0
        %1394 = vmatpush.msra.mxu0 0.0
        %1395 = vmatpush.msra.mxu0 %v1378
        %1396 = vmatmul.f32.gmra.mxu0 %v1330
        %v1397 = vpop.f32.mrf.mxu0
        %v1398 = vadd.f32 0.0, %v1397
        %1399 = vmatmul.f32.gmra.mxu0 %v1333
        %v1400 = vpop.f32.mrf.mxu0
        %v1401 = vadd.f32 0.0, %v1400
        %1402 = vmatmul.f32.gmra.mxu0 %v1336
        %v1403 = vpop.f32.mrf.mxu0
        %v1404 = vadd.f32 0.0, %v1403
        %1405 = vmatmul.f32.gmra.mxu0 %v1339
        %v1406 = vpop.f32.mrf.mxu0
        %v1407 = vadd.f32 0.0, %v1406
        %1408 = vmatmul.f32.gmra.mxu0 %v1342
        %v1409 = vpop.f32.mrf.mxu0
        %v1410 = vadd.f32 0.0, %v1409
        %1411 = vmatmul.f32.gmra.mxu0 %v1345
        %v1412 = vpop.f32.mrf.mxu0
        %v1413 = vadd.f32 0.0, %v1412
        %1414 = vmatmul.f32.gmra.mxu0 %v1348
        %v1415 = vpop.f32.mrf.mxu0
        %v1416 = vadd.f32 0.0, %v1415
        %1417 = vmatmul.f32.gmra.mxu0 %v1351
        %v1418 = vpop.f32.mrf.mxu0
        %v1419 = vadd.f32 0.0, %v1418
        %1420 = vmatmul.f32.gmra.mxu0 %v1354
        %v1421 = vpop.f32.mrf.mxu0
        %v1422 = vadd.f32 0.0, %v1421
        %1423 = vmatmul.f32.gmra.mxu0 %v1357
        %v1424 = vpop.f32.mrf.mxu0
        %v1425 = vadd.f32 0.0, %v1424
        %1426 = vmatmul.f32.gmra.mxu0 %v1360
        %v1427 = vpop.f32.mrf.mxu0
        %v1428 = vadd.f32 0.0, %v1427
        %1429 = vmatmul.f32.gmra.mxu0 %v1363
        %v1430 = vpop.f32.mrf.mxu0
        %v1431 = vadd.f32 0.0, %v1430
        %1432 = vmatmul.f32.gmra.mxu0 %v1366
        %v1433 = vpop.f32.mrf.mxu0
        %v1434 = vadd.f32 0.0, %v1433
        %1435 = vmatmul.f32.gmra.mxu0 %v1369
        %v1436 = vpop.f32.mrf.mxu0
        %v1437 = vadd.f32 0.0, %v1436
        %1438 = vmatmul.f32.gmra.mxu0 %v1372
        %v1439 = vpop.f32.mrf.mxu0
        %v1440 = vadd.f32 0.0, %v1439
        %1441 = vmatmul.f32.gmra.mxu0 %v1375
        %v1442 = vpop.f32.mrf.mxu0
        %v1443 = vadd.f32 0.0, %v1442
        %1444 = vdwg.mxu0
        %v1445 = vsel %vm382, -1e+30, %v1398
        %v1446 = vsel %vm383, -1e+30, %v1401
        %v1447 = vsel %vm384, -1e+30, %v1404
        %v1448 = vsel %vm385, -1e+30, %v1407
        %v1449 = vsel %vm386, -1e+30, %v1410
        %v1450 = vsel %vm387, -1e+30, %v1413
        %v1451 = vsel %vm388, -1e+30, %v1416
        %v1452 = vsel %vm389, -1e+30, %v1419
        %v1453 = vsel %vm390, -1e+30, %v1422
        %v1454 = vsel %vm391, -1e+30, %v1425
        %v1455 = vsel %vm392, -1e+30, %v1428
        %v1456 = vsel %vm393, -1e+30, %v1431
        %v1457 = vsel %vm394, -1e+30, %v1434
        %v1458 = vsel %vm395, -1e+30, %v1437
        %v1459 = vsel %vm396, -1e+30, %v1440
        %v1460 = vsel %vm397, -1e+30, %v1443
        %v1461 = vmax.f32 %v1445, %v1449
        %v1462 = vmax.f32 %v1446, %v1450
        %v1463 = vmax.f32 %v1447, %v1451
        %v1464 = vmax.f32 %v1448, %v1452
        %v1465 = vmax.f32 %v1461, %v1453
        %v1466 = vmax.f32 %v1462, %v1454
        %v1467 = vmax.f32 %v1463, %v1455
        %v1468 = vmax.f32 %v1464, %v1456
        %v1469 = vmax.f32 %v1465, %v1457
        %v1470 = vmax.f32 %v1466, %v1458
        %v1471 = vmax.f32 %v1467, %v1459
        %v1472 = vmax.f32 %v1468, %v1460
        %v1473 = vmax.f32 %v1469, %v1470
        %v1474 = vmax.f32 %v1471, %v1472
        %v1475 = vmax.f32 %v1473, %v1474
        %v1476 = vrot.slane %v1475, 4
        %v1477 = vmax.f32 %v1475, %v1476
        %v1478 = vrot.slane %v1477, 2
        %v1479 = vmax.f32 %v1477, %v1478
        %v1480 = vrot.slane %v1479, 1
        %v1481 = vmax.f32 %v1479, %v1480
        %v1482 = vsub.f32 %v1445, %v1481
        %v1483 = vsub.f32 %v1446, %v1481
        %v1484 = vsub.f32 %v1447, %v1481
        %v1485 = vsub.f32 %v1448, %v1481
        %v1486 = vsub.f32 %v1449, %v1481
        %v1487 = vsub.f32 %v1450, %v1481
        %v1488 = vsub.f32 %v1451, %v1481
        %v1489 = vsub.f32 %v1452, %v1481
        %v1490 = vsub.f32 %v1453, %v1481
        %v1491 = vsub.f32 %v1454, %v1481
        %v1492 = vsub.f32 %v1455, %v1481
        %v1493 = vsub.f32 %v1456, %v1481
        %v1494 = vsub.f32 %v1457, %v1481
        %v1495 = vsub.f32 %v1458, %v1481
        %v1496 = vsub.f32 %v1459, %v1481
        %v1497 = vsub.f32 %v1460, %v1481
        %v1498 = vmul.f32 %v1482, 1.442695
        %v1499 = vpow.pop %v1498
        %v1500 = vmul.f32 %v1483, 1.442695
        %v1501 = vpow.pop %v1500
        %v1502 = vmul.f32 %v1484, 1.442695
        %v1503 = vpow.pop %v1502
        %v1504 = vmul.f32 %v1485, 1.442695
        %v1505 = vpow.pop %v1504
        %v1506 = vmul.f32 %v1486, 1.442695
        %v1507 = vpow.pop %v1506
        %v1508 = vmul.f32 %v1487, 1.442695
        %v1509 = vpow.pop %v1508
        %v1510 = vmul.f32 %v1488, 1.442695
        %v1511 = vpow.pop %v1510
        %v1512 = vmul.f32 %v1489, 1.442695
        %v1513 = vpow.pop %v1512
        %v1514 = vmul.f32 %v1490, 1.442695
        %v1515 = vpow.pop %v1514
        %v1516 = vmul.f32 %v1491, 1.442695
        %v1517 = vpow.pop %v1516
        %v1518 = vmul.f32 %v1492, 1.442695
        %v1519 = vpow.pop %v1518
        %v1520 = vmul.f32 %v1493, 1.442695
        %v1521 = vpow.pop %v1520
        %v1522 = vmul.f32 %v1494, 1.442695
        %v1523 = vpow.pop %v1522
        %v1524 = vmul.f32 %v1495, 1.442695
        %v1525 = vpow.pop %v1524
        %v1526 = vmul.f32 %v1496, 1.442695
        %v1527 = vpow.pop %v1526
        %v1528 = vmul.f32 %v1497, 1.442695
        %v1529 = vpow.pop %v1528
        %v1530 = vadd.f32 %v1499, %v1501
        %v1531 = vadd.f32 %v1530, %v1503
        %v1532 = vadd.f32 %v1531, %v1505
        %v1533 = vadd.f32 %v1532, %v1507
        %v1534 = vadd.f32 %v1533, %v1509
        %v1535 = vadd.f32 %v1534, %v1511
        %v1536 = vadd.f32 %v1535, %v1513
        %v1537 = vadd.f32 %v1536, %v1515
        %v1538 = vadd.f32 %v1537, %v1517
        %v1539 = vadd.f32 %v1538, %v1519
        %v1540 = vadd.f32 %v1539, %v1521
        %v1541 = vadd.f32 %v1540, %v1523
        %v1542 = vadd.f32 %v1541, %v1525
        %v1543 = vadd.f32 %v1542, %v1527
        %v1544 = vadd.f32 %v1543, %v1529
        %v1545 = vrot.slane %v1544, 4
        %v1546 = vadd.f32 %v1544, %v1545
        %v1547 = vrot.slane %v1546, 2
        %v1548 = vadd.f32 %v1546, %v1547
        %v1549 = vrot.slane %v1548, 1
        %v1550 = vadd.f32 %v1548, %v1549
        %v1551 = vrcp.pop %v1550
        %v1552 = vmul.f32 %v1499, %v1551
        %v1553 = vmul.f32 %v1501, %v1551
        %v1554 = vmul.f32 %v1503, %v1551
        %v1555 = vmul.f32 %v1505, %v1551
        %v1556 = vmul.f32 %v1507, %v1551
        %v1557 = vmul.f32 %v1509, %v1551
        %v1558 = vmul.f32 %v1511, %v1551
        %v1559 = vmul.f32 %v1513, %v1551
        %v1560 = vmul.f32 %v1515, %v1551
        %v1561 = vmul.f32 %v1517, %v1551
        %v1562 = vmul.f32 %v1519, %v1551
        %v1563 = vmul.f32 %v1521, %v1551
        %v1564 = vmul.f32 %v1523, %v1551
        %v1565 = vmul.f32 %v1525, %v1551
        %v1566 = vmul.f32 %v1527, %v1551
        %v1567 = vmul.f32 %v1529, %v1551
        %1568 = vmatpush.msra.mxu0 %v1567
        %1569 = vmatpush.msra.mxu0 %v1566
        %1570 = vmatpush.msra.mxu0 %v1565
        %1571 = vmatpush.msra.mxu0 %v1564
        %1572 = vmatpush.msra.mxu0 %v1563
        %1573 = vmatpush.msra.mxu0 %v1562
        %1574 = vmatpush.msra.mxu0 %v1561
        %1575 = vmatpush.msra.mxu0 %v1560
        %1576 = vmatpush.msra.mxu0 %v1559
        %1577 = vmatpush.msra.mxu0 %v1558
        %1578 = vmatpush.msra.mxu0 %v1557
        %1579 = vmatpush.msra.mxu0 %v1556
        %1580 = vmatpush.msra.mxu0 %v1555
        %1581 = vmatpush.msra.mxu0 %v1554
        %1582 = vmatpush.msra.mxu0 %v1553
        %1583 = vmatpush.msra.mxu0 %v1552
        %1584 = vmatmul.f32.gmra.mxu0 %v1295
        %v1585 = vpop.f32.mrf.mxu0
        %v1586 = vadd.f32 0.0, %v1585
        %1587 = vdwg.mxu0
        %s1588 = scalar_lea.vmem %s7, 8
        %v1589 = vld [vmem:[%s1588] sm:$0xf]
        %v1591 = vsel %vm405, %v1589, 0
        %v1594 = vsel %vm409, %v1586, 0
        %1596 = vmatpush.msra.mxu0 0.0
        %1597 = vmatpush.msra.mxu0 0.0
        %1598 = vmatpush.msra.mxu0 0.0
        %1599 = vmatpush.msra.mxu0 0.0
        %1600 = vmatpush.msra.mxu0 0.0
        %1601 = vmatpush.msra.mxu0 0.0
        %1602 = vmatpush.msra.mxu0 0.0
        %1603 = vmatpush.msra.mxu0 0.0
        %1604 = vmatpush.msra.mxu0 0.0
        %1605 = vmatpush.msra.mxu0 0.0
        %1606 = vmatpush.msra.mxu0 0.0
        %1607 = vmatpush.msra.mxu0 0.0
        %1608 = vmatpush.msra.mxu0 0.0
        %1609 = vmatpush.msra.mxu0 0.0
        %1610 = vmatpush.msra.mxu0 0.0
        %1611 = vmatpush.msra.mxu0 %v1594
        %1612 = vmatmul.f32.gmra.mxu0 %v1591
        %v1613 = vpop.f32.mrf.mxu0
        %v1614 = vadd.f32 0.0, %v1613
        %1615 = vdwg.mxu0
        %v1616 = vadd.f32 %v1210, %v1614
        %s1617 = scalar_lea.vmem %s3, 12
        %v1618 = vld [vmem:[%s1617] sm:$0xf]
        %s1619 = scalar_lea.vmem %s4, 12
        %v1620 = vld [vmem:[%s1619] sm:$0xf]
        %1622 = vset.pattern.permute.xlu0 0
        %1623 = vperm.xlu0 %1622, %v1620
        %v1624 = vpop.permute.xlu0 %1623
        %v1627 = vsel %vm405, %v1618, 0
        %1629 = vmatpush.msra.mxu0 0.0
        %1630 = vmatpush.msra.mxu0 0.0
        %1631 = vmatpush.msra.mxu0 0.0
        %1632 = vmatpush.msra.mxu0 0.0
        %1633 = vmatpush.msra.mxu0 0.0
        %1634 = vmatpush.msra.mxu0 0.0
        %1635 = vmatpush.msra.mxu0 0.0
        %1636 = vmatpush.msra.mxu0 0.0
        %1637 = vmatpush.msra.mxu0 0.0
        %1638 = vmatpush.msra.mxu0 0.0
        %1639 = vmatpush.msra.mxu0 0.0
        %1640 = vmatpush.msra.mxu0 0.0
        %1641 = vmatpush.msra.mxu0 0.0
        %1642 = vmatpush.msra.mxu0 0.0
        %1643 = vmatpush.msra.mxu0 0.0
        %1644 = vmatpush.msra.mxu0 %v411
        %1645 = vmatmul.f32.gmra.mxu0 %v1627
        %v1646 = vpop.f32.mrf.mxu0
        %v1647 = vadd.f32 %v1624, %v1646
        %1648 = vdwg.mxu0
        %v1649 = vmul.f32 %v1647, 0.5
        %s1650 = scalar_lea.vmem %s5, 12
        %v1651 = vld [vmem:[%s1650] sm:$0xf]
        %s1652 = scalar_lea.vmem %s6, 12
        %v1653 = vld [vmem:[%s1652] sm:$0xf]
        %1655 = vset.pattern.permute.xlu0 0
        %1656 = vperm.xlu0 %1655, %v1653
        %v1657 = vpop.permute.xlu0 %1656
        %v1660 = vsel %vm405, %v1651, 0
        %1662 = vmatpush.msra.mxu0 0.0
        %1663 = vmatpush.msra.mxu0 0.0
        %1664 = vmatpush.msra.mxu0 0.0
        %1665 = vmatpush.msra.mxu0 0.0
        %1666 = vmatpush.msra.mxu0 0.0
        %1667 = vmatpush.msra.mxu0 0.0
        %1668 = vmatpush.msra.mxu0 0.0
        %1669 = vmatpush.msra.mxu0 0.0
        %1670 = vmatpush.msra.mxu0 0.0
        %1671 = vmatpush.msra.mxu0 0.0
        %1672 = vmatpush.msra.mxu0 0.0
        %1673 = vmatpush.msra.mxu0 0.0
        %1674 = vmatpush.msra.mxu0 0.0
        %1675 = vmatpush.msra.mxu0 0.0
        %1676 = vmatpush.msra.mxu0 0.0
        %1677 = vmatpush.msra.mxu0 %v445
        %1678 = vmatmul.f32.gmra.mxu0 %v1660
        %v1679 = vpop.f32.mrf.mxu0
        %v1680 = vadd.f32 %v1657, %v1679
        %1681 = vdwg.mxu0
        %1682 = vmatpush.msra.mxu0 0.0
        %1683 = vmatpush.msra.mxu0 0.0
        %1684 = vmatpush.msra.mxu0 0.0
        %1685 = vmatpush.msra.mxu0 0.0
        %1686 = vmatpush.msra.mxu0 0.0
        %1687 = vmatpush.msra.mxu0 0.0
        %1688 = vmatpush.msra.mxu0 0.0
        %1689 = vmatpush.msra.mxu0 0.0
        %1690 = vmatpush.msra.mxu0 0.0
        %1691 = vmatpush.msra.mxu0 0.0
        %1692 = vmatpush.msra.mxu0 0.0
        %1693 = vmatpush.msra.mxu0 0.0
        %1694 = vmatpush.msra.mxu0 0.0
        %1695 = vmatpush.msra.mxu0 0.0
        %1696 = vmatpush.msra.mxu0 0.0
        %1697 = vmatpush.msra.mxu0 %v468
        %1698 = vmatmul.f32.gmra.mxu0 %v1660
        %v1699 = vpop.f32.mrf.mxu0
        %v1700 = vadd.f32 %v1657, %v1699
        %1701 = vdwg.mxu0
        %1702 = vxpose.xlu0.b32.start [1/16] %v1680, 128
        %1703 = vxpose.xlu0.b32.cont [2/16] 0.0, 128
        %1704 = vxpose.xlu0.b32.cont [3/16] 0.0, 128
        %1705 = vxpose.xlu0.b32.cont [4/16] 0.0, 128
        %1706 = vxpose.xlu0.b32.cont [5/16] 0.0, 128
        %1707 = vxpose.xlu0.b32.cont [6/16] 0.0, 128
        %1708 = vxpose.xlu0.b32.cont [7/16] 0.0, 128
        %1709 = vxpose.xlu0.b32.cont [8/16] 0.0, 128
        %1710 = vxpose.xlu0.b32.cont [9/16] 0.0, 128
        %1711 = vxpose.xlu0.b32.cont [10/16] 0.0, 128
        %1712 = vxpose.xlu0.b32.cont [11/16] 0.0, 128
        %1713 = vxpose.xlu0.b32.cont [12/16] 0.0, 128
        %1714 = vxpose.xlu0.b32.cont [13/16] 0.0, 128
        %1715 = vxpose.xlu0.b32.cont [14/16] 0.0, 128
        %1716 = vxpose.xlu0.b32.cont [15/16] 0.0, 128
        %1717 = vxpose.xlu0.b32.end [16/16] 0.0, 128
        %v1718 = vpop.trf.xlu0
        %v1719 = vpop.trf.xlu0
        %v1720 = vpop.trf.xlu0
        %v1721 = vpop.trf.xlu0
        %v1722 = vpop.trf.xlu0
        %v1723 = vpop.trf.xlu0
        %v1724 = vpop.trf.xlu0
        %v1725 = vpop.trf.xlu0
        %v1726 = vpop.trf.xlu0
        %v1727 = vpop.trf.xlu0
        %v1728 = vpop.trf.xlu0
        %v1729 = vpop.trf.xlu0
        %v1730 = vpop.trf.xlu0
        %v1731 = vpop.trf.xlu0
        %v1732 = vpop.trf.xlu0
        %v1733 = vpop.trf.xlu0
        %v1735 = vsel %vm405, %v1718, 0
        %v1738 = vsel %vm405, %v1719, 0
        %v1741 = vsel %vm405, %v1720, 0
        %v1744 = vsel %vm405, %v1721, 0
        %v1747 = vsel %vm405, %v1722, 0
        %v1750 = vsel %vm405, %v1723, 0
        %v1753 = vsel %vm405, %v1724, 0
        %v1756 = vsel %vm405, %v1725, 0
        %v1759 = vsel %vm405, %v1726, 0
        %v1762 = vsel %vm405, %v1727, 0
        %v1765 = vsel %vm405, %v1728, 0
        %v1768 = vsel %vm405, %v1729, 0
        %v1771 = vsel %vm405, %v1730, 0
        %v1774 = vsel %vm405, %v1731, 0
        %v1777 = vsel %vm405, %v1732, 0
        %v1780 = vsel %vm405, %v1733, 0
        %v1783 = vsel %vm409, %v1649, 0
        %1785 = vmatpush.msra.mxu0 0.0
        %1786 = vmatpush.msra.mxu0 0.0
        %1787 = vmatpush.msra.mxu0 0.0
        %1788 = vmatpush.msra.mxu0 0.0
        %1789 = vmatpush.msra.mxu0 0.0
        %1790 = vmatpush.msra.mxu0 0.0
        %1791 = vmatpush.msra.mxu0 0.0
        %1792 = vmatpush.msra.mxu0 0.0
        %1793 = vmatpush.msra.mxu0 0.0
        %1794 = vmatpush.msra.mxu0 0.0
        %1795 = vmatpush.msra.mxu0 0.0
        %1796 = vmatpush.msra.mxu0 0.0
        %1797 = vmatpush.msra.mxu0 0.0
        %1798 = vmatpush.msra.mxu0 0.0
        %1799 = vmatpush.msra.mxu0 0.0
        %1800 = vmatpush.msra.mxu0 %v1783
        %1801 = vmatmul.f32.gmra.mxu0 %v1735
        %v1802 = vpop.f32.mrf.mxu0
        %v1803 = vadd.f32 0.0, %v1802
        %1804 = vmatmul.f32.gmra.mxu0 %v1738
        %v1805 = vpop.f32.mrf.mxu0
        %v1806 = vadd.f32 0.0, %v1805
        %1807 = vmatmul.f32.gmra.mxu0 %v1741
        %v1808 = vpop.f32.mrf.mxu0
        %v1809 = vadd.f32 0.0, %v1808
        %1810 = vmatmul.f32.gmra.mxu0 %v1744
        %v1811 = vpop.f32.mrf.mxu0
        %v1812 = vadd.f32 0.0, %v1811
        %1813 = vmatmul.f32.gmra.mxu0 %v1747
        %v1814 = vpop.f32.mrf.mxu0
        %v1815 = vadd.f32 0.0, %v1814
        %1816 = vmatmul.f32.gmra.mxu0 %v1750
        %v1817 = vpop.f32.mrf.mxu0
        %v1818 = vadd.f32 0.0, %v1817
        %1819 = vmatmul.f32.gmra.mxu0 %v1753
        %v1820 = vpop.f32.mrf.mxu0
        %v1821 = vadd.f32 0.0, %v1820
        %1822 = vmatmul.f32.gmra.mxu0 %v1756
        %v1823 = vpop.f32.mrf.mxu0
        %v1824 = vadd.f32 0.0, %v1823
        %1825 = vmatmul.f32.gmra.mxu0 %v1759
        %v1826 = vpop.f32.mrf.mxu0
        %v1827 = vadd.f32 0.0, %v1826
        %1828 = vmatmul.f32.gmra.mxu0 %v1762
        %v1829 = vpop.f32.mrf.mxu0
        %v1830 = vadd.f32 0.0, %v1829
        %1831 = vmatmul.f32.gmra.mxu0 %v1765
        %v1832 = vpop.f32.mrf.mxu0
        %v1833 = vadd.f32 0.0, %v1832
        %1834 = vmatmul.f32.gmra.mxu0 %v1768
        %v1835 = vpop.f32.mrf.mxu0
        %v1836 = vadd.f32 0.0, %v1835
        %1837 = vmatmul.f32.gmra.mxu0 %v1771
        %v1838 = vpop.f32.mrf.mxu0
        %v1839 = vadd.f32 0.0, %v1838
        %1840 = vmatmul.f32.gmra.mxu0 %v1774
        %v1841 = vpop.f32.mrf.mxu0
        %v1842 = vadd.f32 0.0, %v1841
        %1843 = vmatmul.f32.gmra.mxu0 %v1777
        %v1844 = vpop.f32.mrf.mxu0
        %v1845 = vadd.f32 0.0, %v1844
        %1846 = vmatmul.f32.gmra.mxu0 %v1780
        %v1847 = vpop.f32.mrf.mxu0
        %v1848 = vadd.f32 0.0, %v1847
        %1849 = vdwg.mxu0
        %v1850 = vsel %vm382, -1e+30, %v1803
        %v1851 = vsel %vm383, -1e+30, %v1806
        %v1852 = vsel %vm384, -1e+30, %v1809
        %v1853 = vsel %vm385, -1e+30, %v1812
        %v1854 = vsel %vm386, -1e+30, %v1815
        %v1855 = vsel %vm387, -1e+30, %v1818
        %v1856 = vsel %vm388, -1e+30, %v1821
        %v1857 = vsel %vm389, -1e+30, %v1824
        %v1858 = vsel %vm390, -1e+30, %v1827
        %v1859 = vsel %vm391, -1e+30, %v1830
        %v1860 = vsel %vm392, -1e+30, %v1833
        %v1861 = vsel %vm393, -1e+30, %v1836
        %v1862 = vsel %vm394, -1e+30, %v1839
        %v1863 = vsel %vm395, -1e+30, %v1842
        %v1864 = vsel %vm396, -1e+30, %v1845
        %v1865 = vsel %vm397, -1e+30, %v1848
        %v1866 = vmax.f32 %v1850, %v1854
        %v1867 = vmax.f32 %v1851, %v1855
        %v1868 = vmax.f32 %v1852, %v1856
        %v1869 = vmax.f32 %v1853, %v1857
        %v1870 = vmax.f32 %v1866, %v1858
        %v1871 = vmax.f32 %v1867, %v1859
        %v1872 = vmax.f32 %v1868, %v1860
        %v1873 = vmax.f32 %v1869, %v1861
        %v1874 = vmax.f32 %v1870, %v1862
        %v1875 = vmax.f32 %v1871, %v1863
        %v1876 = vmax.f32 %v1872, %v1864
        %v1877 = vmax.f32 %v1873, %v1865
        %v1878 = vmax.f32 %v1874, %v1875
        %v1879 = vmax.f32 %v1876, %v1877
        %v1880 = vmax.f32 %v1878, %v1879
        %v1881 = vrot.slane %v1880, 4
        %v1882 = vmax.f32 %v1880, %v1881
        %v1883 = vrot.slane %v1882, 2
        %v1884 = vmax.f32 %v1882, %v1883
        %v1885 = vrot.slane %v1884, 1
        %v1886 = vmax.f32 %v1884, %v1885
        %v1887 = vsub.f32 %v1850, %v1886
        %v1888 = vsub.f32 %v1851, %v1886
        %v1889 = vsub.f32 %v1852, %v1886
        %v1890 = vsub.f32 %v1853, %v1886
        %v1891 = vsub.f32 %v1854, %v1886
        %v1892 = vsub.f32 %v1855, %v1886
        %v1893 = vsub.f32 %v1856, %v1886
        %v1894 = vsub.f32 %v1857, %v1886
        %v1895 = vsub.f32 %v1858, %v1886
        %v1896 = vsub.f32 %v1859, %v1886
        %v1897 = vsub.f32 %v1860, %v1886
        %v1898 = vsub.f32 %v1861, %v1886
        %v1899 = vsub.f32 %v1862, %v1886
        %v1900 = vsub.f32 %v1863, %v1886
        %v1901 = vsub.f32 %v1864, %v1886
        %v1902 = vsub.f32 %v1865, %v1886
        %v1903 = vmul.f32 %v1887, 1.442695
        %v1904 = vpow.pop %v1903
        %v1905 = vmul.f32 %v1888, 1.442695
        %v1906 = vpow.pop %v1905
        %v1907 = vmul.f32 %v1889, 1.442695
        %v1908 = vpow.pop %v1907
        %v1909 = vmul.f32 %v1890, 1.442695
        %v1910 = vpow.pop %v1909
        %v1911 = vmul.f32 %v1891, 1.442695
        %v1912 = vpow.pop %v1911
        %v1913 = vmul.f32 %v1892, 1.442695
        %v1914 = vpow.pop %v1913
        %v1915 = vmul.f32 %v1893, 1.442695
        %v1916 = vpow.pop %v1915
        %v1917 = vmul.f32 %v1894, 1.442695
        %v1918 = vpow.pop %v1917
        %v1919 = vmul.f32 %v1895, 1.442695
        %v1920 = vpow.pop %v1919
        %v1921 = vmul.f32 %v1896, 1.442695
        %v1922 = vpow.pop %v1921
        %v1923 = vmul.f32 %v1897, 1.442695
        %v1924 = vpow.pop %v1923
        %v1925 = vmul.f32 %v1898, 1.442695
        %v1926 = vpow.pop %v1925
        %v1927 = vmul.f32 %v1899, 1.442695
        %v1928 = vpow.pop %v1927
        %v1929 = vmul.f32 %v1900, 1.442695
        %v1930 = vpow.pop %v1929
        %v1931 = vmul.f32 %v1901, 1.442695
        %v1932 = vpow.pop %v1931
        %v1933 = vmul.f32 %v1902, 1.442695
        %v1934 = vpow.pop %v1933
        %v1935 = vadd.f32 %v1904, %v1906
        %v1936 = vadd.f32 %v1935, %v1908
        %v1937 = vadd.f32 %v1936, %v1910
        %v1938 = vadd.f32 %v1937, %v1912
        %v1939 = vadd.f32 %v1938, %v1914
        %v1940 = vadd.f32 %v1939, %v1916
        %v1941 = vadd.f32 %v1940, %v1918
        %v1942 = vadd.f32 %v1941, %v1920
        %v1943 = vadd.f32 %v1942, %v1922
        %v1944 = vadd.f32 %v1943, %v1924
        %v1945 = vadd.f32 %v1944, %v1926
        %v1946 = vadd.f32 %v1945, %v1928
        %v1947 = vadd.f32 %v1946, %v1930
        %v1948 = vadd.f32 %v1947, %v1932
        %v1949 = vadd.f32 %v1948, %v1934
        %v1950 = vrot.slane %v1949, 4
        %v1951 = vadd.f32 %v1949, %v1950
        %v1952 = vrot.slane %v1951, 2
        %v1953 = vadd.f32 %v1951, %v1952
        %v1954 = vrot.slane %v1953, 1
        %v1955 = vadd.f32 %v1953, %v1954
        %v1956 = vrcp.pop %v1955
        %v1957 = vmul.f32 %v1904, %v1956
        %v1958 = vmul.f32 %v1906, %v1956
        %v1959 = vmul.f32 %v1908, %v1956
        %v1960 = vmul.f32 %v1910, %v1956
        %v1961 = vmul.f32 %v1912, %v1956
        %v1962 = vmul.f32 %v1914, %v1956
        %v1963 = vmul.f32 %v1916, %v1956
        %v1964 = vmul.f32 %v1918, %v1956
        %v1965 = vmul.f32 %v1920, %v1956
        %v1966 = vmul.f32 %v1922, %v1956
        %v1967 = vmul.f32 %v1924, %v1956
        %v1968 = vmul.f32 %v1926, %v1956
        %v1969 = vmul.f32 %v1928, %v1956
        %v1970 = vmul.f32 %v1930, %v1956
        %v1971 = vmul.f32 %v1932, %v1956
        %v1972 = vmul.f32 %v1934, %v1956
        %1973 = vmatpush.msra.mxu0 %v1972
        %1974 = vmatpush.msra.mxu0 %v1971
        %1975 = vmatpush.msra.mxu0 %v1970
        %1976 = vmatpush.msra.mxu0 %v1969
        %1977 = vmatpush.msra.mxu0 %v1968
        %1978 = vmatpush.msra.mxu0 %v1967
        %1979 = vmatpush.msra.mxu0 %v1966
        %1980 = vmatpush.msra.mxu0 %v1965
        %1981 = vmatpush.msra.mxu0 %v1964
        %1982 = vmatpush.msra.mxu0 %v1963
        %1983 = vmatpush.msra.mxu0 %v1962
        %1984 = vmatpush.msra.mxu0 %v1961
        %1985 = vmatpush.msra.mxu0 %v1960
        %1986 = vmatpush.msra.mxu0 %v1959
        %1987 = vmatpush.msra.mxu0 %v1958
        %1988 = vmatpush.msra.mxu0 %v1957
        %1989 = vmatmul.f32.gmra.mxu0 %v1700
        %v1990 = vpop.f32.mrf.mxu0
        %v1991 = vadd.f32 0.0, %v1990
        %1992 = vdwg.mxu0
        %s1993 = scalar_lea.vmem %s7, 12
        %v1994 = vld [vmem:[%s1993] sm:$0xf]
        %v1996 = vsel %vm405, %v1994, 0
        %v1999 = vsel %vm409, %v1991, 0
        %2001 = vmatpush.msra.mxu0 0.0
        %2002 = vmatpush.msra.mxu0 0.0
        %2003 = vmatpush.msra.mxu0 0.0
        %2004 = vmatpush.msra.mxu0 0.0
        %2005 = vmatpush.msra.mxu0 0.0
        %2006 = vmatpush.msra.mxu0 0.0
        %2007 = vmatpush.msra.mxu0 0.0
        %2008 = vmatpush.msra.mxu0 0.0
        %2009 = vmatpush.msra.mxu0 0.0
        %2010 = vmatpush.msra.mxu0 0.0
        %2011 = vmatpush.msra.mxu0 0.0
        %2012 = vmatpush.msra.mxu0 0.0
        %2013 = vmatpush.msra.mxu0 0.0
        %2014 = vmatpush.msra.mxu0 0.0
        %2015 = vmatpush.msra.mxu0 0.0
        %2016 = vmatpush.msra.mxu0 %v1999
        %2017 = vmatmul.f32.gmra.mxu0 %v1996
        %v2018 = vpop.f32.mrf.mxu0
        %v2019 = vadd.f32 0.0, %v2018
        %2020 = vdwg.mxu0
        %v2021 = vadd.f32 %v1616, %v2019
        %s2022 = scalar_lea.vmem %s3, 16
        %v2023 = vld [vmem:[%s2022] sm:$0xf]
        %s2024 = scalar_lea.vmem %s4, 16
        %v2025 = vld [vmem:[%s2024] sm:$0xf]
        %2027 = vset.pattern.permute.xlu0 0
        %2028 = vperm.xlu0 %2027, %v2025
        %v2029 = vpop.permute.xlu0 %2028
        %v2032 = vsel %vm405, %v2023, 0
        %2034 = vmatpush.msra.mxu0 0.0
        %2035 = vmatpush.msra.mxu0 0.0
        %2036 = vmatpush.msra.mxu0 0.0
        %2037 = vmatpush.msra.mxu0 0.0
        %2038 = vmatpush.msra.mxu0 0.0
        %2039 = vmatpush.msra.mxu0 0.0
        %2040 = vmatpush.msra.mxu0 0.0
        %2041 = vmatpush.msra.mxu0 0.0
        %2042 = vmatpush.msra.mxu0 0.0
        %2043 = vmatpush.msra.mxu0 0.0
        %2044 = vmatpush.msra.mxu0 0.0
        %2045 = vmatpush.msra.mxu0 0.0
        %2046 = vmatpush.msra.mxu0 0.0
        %2047 = vmatpush.msra.mxu0 0.0
        %2048 = vmatpush.msra.mxu0 0.0
        %2049 = vmatpush.msra.mxu0 %v411
        %2050 = vmatmul.f32.gmra.mxu0 %v2032
        %v2051 = vpop.f32.mrf.mxu0
        %v2052 = vadd.f32 %v2029, %v2051
        %2053 = vdwg.mxu0
        %v2054 = vmul.f32 %v2052, 0.5
        %s2055 = scalar_lea.vmem %s5, 16
        %v2056 = vld [vmem:[%s2055] sm:$0xf]
        %s2057 = scalar_lea.vmem %s6, 16
        %v2058 = vld [vmem:[%s2057] sm:$0xf]
        %2060 = vset.pattern.permute.xlu0 0
        %2061 = vperm.xlu0 %2060, %v2058
        %v2062 = vpop.permute.xlu0 %2061
        %v2065 = vsel %vm405, %v2056, 0
        %2067 = vmatpush.msra.mxu0 0.0
        %2068 = vmatpush.msra.mxu0 0.0
        %2069 = vmatpush.msra.mxu0 0.0
        %2070 = vmatpush.msra.mxu0 0.0
        %2071 = vmatpush.msra.mxu0 0.0
        %2072 = vmatpush.msra.mxu0 0.0
        %2073 = vmatpush.msra.mxu0 0.0
        %2074 = vmatpush.msra.mxu0 0.0
        %2075 = vmatpush.msra.mxu0 0.0
        %2076 = vmatpush.msra.mxu0 0.0
        %2077 = vmatpush.msra.mxu0 0.0
        %2078 = vmatpush.msra.mxu0 0.0
        %2079 = vmatpush.msra.mxu0 0.0
        %2080 = vmatpush.msra.mxu0 0.0
        %2081 = vmatpush.msra.mxu0 0.0
        %2082 = vmatpush.msra.mxu0 %v445
        %2083 = vmatmul.f32.gmra.mxu0 %v2065
        %v2084 = vpop.f32.mrf.mxu0
        %v2085 = vadd.f32 %v2062, %v2084
        %2086 = vdwg.mxu0
        %2087 = vmatpush.msra.mxu0 0.0
        %2088 = vmatpush.msra.mxu0 0.0
        %2089 = vmatpush.msra.mxu0 0.0
        %2090 = vmatpush.msra.mxu0 0.0
        %2091 = vmatpush.msra.mxu0 0.0
        %2092 = vmatpush.msra.mxu0 0.0
        %2093 = vmatpush.msra.mxu0 0.0
        %2094 = vmatpush.msra.mxu0 0.0
        %2095 = vmatpush.msra.mxu0 0.0
        %2096 = vmatpush.msra.mxu0 0.0
        %2097 = vmatpush.msra.mxu0 0.0
        %2098 = vmatpush.msra.mxu0 0.0
        %2099 = vmatpush.msra.mxu0 0.0
        %2100 = vmatpush.msra.mxu0 0.0
        %2101 = vmatpush.msra.mxu0 0.0
        %2102 = vmatpush.msra.mxu0 %v468
        %2103 = vmatmul.f32.gmra.mxu0 %v2065
        %v2104 = vpop.f32.mrf.mxu0
        %v2105 = vadd.f32 %v2062, %v2104
        %2106 = vdwg.mxu0
        %2107 = vxpose.xlu0.b32.start [1/16] %v2085, 128
        %2108 = vxpose.xlu0.b32.cont [2/16] 0.0, 128
        %2109 = vxpose.xlu0.b32.cont [3/16] 0.0, 128
        %2110 = vxpose.xlu0.b32.cont [4/16] 0.0, 128
        %2111 = vxpose.xlu0.b32.cont [5/16] 0.0, 128
        %2112 = vxpose.xlu0.b32.cont [6/16] 0.0, 128
        %2113 = vxpose.xlu0.b32.cont [7/16] 0.0, 128
        %2114 = vxpose.xlu0.b32.cont [8/16] 0.0, 128
        %2115 = vxpose.xlu0.b32.cont [9/16] 0.0, 128
        %2116 = vxpose.xlu0.b32.cont [10/16] 0.0, 128
        %2117 = vxpose.xlu0.b32.cont [11/16] 0.0, 128
        %2118 = vxpose.xlu0.b32.cont [12/16] 0.0, 128
        %2119 = vxpose.xlu0.b32.cont [13/16] 0.0, 128
        %2120 = vxpose.xlu0.b32.cont [14/16] 0.0, 128
        %2121 = vxpose.xlu0.b32.cont [15/16] 0.0, 128
        %2122 = vxpose.xlu0.b32.end [16/16] 0.0, 128
        %v2123 = vpop.trf.xlu0
        %v2124 = vpop.trf.xlu0
        %v2125 = vpop.trf.xlu0
        %v2126 = vpop.trf.xlu0
        %v2127 = vpop.trf.xlu0
        %v2128 = vpop.trf.xlu0
        %v2129 = vpop.trf.xlu0
        %v2130 = vpop.trf.xlu0
        %v2131 = vpop.trf.xlu0
        %v2132 = vpop.trf.xlu0
        %v2133 = vpop.trf.xlu0
        %v2134 = vpop.trf.xlu0
        %v2135 = vpop.trf.xlu0
        %v2136 = vpop.trf.xlu0
        %v2137 = vpop.trf.xlu0
        %v2138 = vpop.trf.xlu0
        %v2140 = vsel %vm405, %v2123, 0
        %v2143 = vsel %vm405, %v2124, 0
        %v2146 = vsel %vm405, %v2125, 0
        %v2149 = vsel %vm405, %v2126, 0
        %v2152 = vsel %vm405, %v2127, 0
        %v2155 = vsel %vm405, %v2128, 0
        %v2158 = vsel %vm405, %v2129, 0
        %v2161 = vsel %vm405, %v2130, 0
        %v2164 = vsel %vm405, %v2131, 0
        %v2167 = vsel %vm405, %v2132, 0
        %v2170 = vsel %vm405, %v2133, 0
        %v2173 = vsel %vm405, %v2134, 0
        %v2176 = vsel %vm405, %v2135, 0
        %v2179 = vsel %vm405, %v2136, 0
        %v2182 = vsel %vm405, %v2137, 0
        %v2185 = vsel %vm405, %v2138, 0
        %v2188 = vsel %vm409, %v2054, 0
        %2190 = vmatpush.msra.mxu0 0.0
        %2191 = vmatpush.msra.mxu0 0.0
        %2192 = vmatpush.msra.mxu0 0.0
        %2193 = vmatpush.msra.mxu0 0.0
        %2194 = vmatpush.msra.mxu0 0.0
        %2195 = vmatpush.msra.mxu0 0.0
        %2196 = vmatpush.msra.mxu0 0.0
        %2197 = vmatpush.msra.mxu0 0.0
        %2198 = vmatpush.msra.mxu0 0.0
        %2199 = vmatpush.msra.mxu0 0.0
        %2200 = vmatpush.msra.mxu0 0.0
        %2201 = vmatpush.msra.mxu0 0.0
        %2202 = vmatpush.msra.mxu0 0.0
        %2203 = vmatpush.msra.mxu0 0.0
        %2204 = vmatpush.msra.mxu0 0.0
        %2205 = vmatpush.msra.mxu0 %v2188
        %2206 = vmatmul.f32.gmra.mxu0 %v2140
        %v2207 = vpop.f32.mrf.mxu0
        %v2208 = vadd.f32 0.0, %v2207
        %2209 = vmatmul.f32.gmra.mxu0 %v2143
        %v2210 = vpop.f32.mrf.mxu0
        %v2211 = vadd.f32 0.0, %v2210
        %2212 = vmatmul.f32.gmra.mxu0 %v2146
        %v2213 = vpop.f32.mrf.mxu0
        %v2214 = vadd.f32 0.0, %v2213
        %2215 = vmatmul.f32.gmra.mxu0 %v2149
        %v2216 = vpop.f32.mrf.mxu0
        %v2217 = vadd.f32 0.0, %v2216
        %2218 = vmatmul.f32.gmra.mxu0 %v2152
        %v2219 = vpop.f32.mrf.mxu0
        %v2220 = vadd.f32 0.0, %v2219
        %2221 = vmatmul.f32.gmra.mxu0 %v2155
        %v2222 = vpop.f32.mrf.mxu0
        %v2223 = vadd.f32 0.0, %v2222
        %2224 = vmatmul.f32.gmra.mxu0 %v2158
        %v2225 = vpop.f32.mrf.mxu0
        %v2226 = vadd.f32 0.0, %v2225
        %2227 = vmatmul.f32.gmra.mxu0 %v2161
        %v2228 = vpop.f32.mrf.mxu0
        %v2229 = vadd.f32 0.0, %v2228
        %2230 = vmatmul.f32.gmra.mxu0 %v2164
        %v2231 = vpop.f32.mrf.mxu0
        %v2232 = vadd.f32 0.0, %v2231
        %2233 = vmatmul.f32.gmra.mxu0 %v2167
        %v2234 = vpop.f32.mrf.mxu0
        %v2235 = vadd.f32 0.0, %v2234
        %2236 = vmatmul.f32.gmra.mxu0 %v2170
        %v2237 = vpop.f32.mrf.mxu0
        %v2238 = vadd.f32 0.0, %v2237
        %2239 = vmatmul.f32.gmra.mxu0 %v2173
        %v2240 = vpop.f32.mrf.mxu0
        %v2241 = vadd.f32 0.0, %v2240
        %2242 = vmatmul.f32.gmra.mxu0 %v2176
        %v2243 = vpop.f32.mrf.mxu0
        %v2244 = vadd.f32 0.0, %v2243
        %2245 = vmatmul.f32.gmra.mxu0 %v2179
        %v2246 = vpop.f32.mrf.mxu0
        %v2247 = vadd.f32 0.0, %v2246
        %2248 = vmatmul.f32.gmra.mxu0 %v2182
        %v2249 = vpop.f32.mrf.mxu0
        %v2250 = vadd.f32 0.0, %v2249
        %2251 = vmatmul.f32.gmra.mxu0 %v2185
        %v2252 = vpop.f32.mrf.mxu0
        %v2253 = vadd.f32 0.0, %v2252
        %2254 = vdwg.mxu0
        %v2255 = vsel %vm382, -1e+30, %v2208
        %v2256 = vsel %vm383, -1e+30, %v2211
        %v2257 = vsel %vm384, -1e+30, %v2214
        %v2258 = vsel %vm385, -1e+30, %v2217
        %v2259 = vsel %vm386, -1e+30, %v2220
        %v2260 = vsel %vm387, -1e+30, %v2223
        %v2261 = vsel %vm388, -1e+30, %v2226
        %v2262 = vsel %vm389, -1e+30, %v2229
        %v2263 = vsel %vm390, -1e+30, %v2232
        %v2264 = vsel %vm391, -1e+30, %v2235
        %v2265 = vsel %vm392, -1e+30, %v2238
        %v2266 = vsel %vm393, -1e+30, %v2241
        %v2267 = vsel %vm394, -1e+30, %v2244
        %v2268 = vsel %vm395, -1e+30, %v2247
        %v2269 = vsel %vm396, -1e+30, %v2250
        %v2270 = vsel %vm397, -1e+30, %v2253
        %v2271 = vmax.f32 %v2255, %v2259
        %v2272 = vmax.f32 %v2256, %v2260
        %v2273 = vmax.f32 %v2257, %v2261
        %v2274 = vmax.f32 %v2258, %v2262
        %v2275 = vmax.f32 %v2271, %v2263
        %v2276 = vmax.f32 %v2272, %v2264
        %v2277 = vmax.f32 %v2273, %v2265
        %v2278 = vmax.f32 %v2274, %v2266
        %v2279 = vmax.f32 %v2275, %v2267
        %v2280 = vmax.f32 %v2276, %v2268
        %v2281 = vmax.f32 %v2277, %v2269
        %v2282 = vmax.f32 %v2278, %v2270
        %v2283 = vmax.f32 %v2279, %v2280
        %v2284 = vmax.f32 %v2281, %v2282
        %v2285 = vmax.f32 %v2283, %v2284
        %v2286 = vrot.slane %v2285, 4
        %v2287 = vmax.f32 %v2285, %v2286
        %v2288 = vrot.slane %v2287, 2
        %v2289 = vmax.f32 %v2287, %v2288
        %v2290 = vrot.slane %v2289, 1
        %v2291 = vmax.f32 %v2289, %v2290
        %v2292 = vsub.f32 %v2255, %v2291
        %v2293 = vsub.f32 %v2256, %v2291
        %v2294 = vsub.f32 %v2257, %v2291
        %v2295 = vsub.f32 %v2258, %v2291
        %v2296 = vsub.f32 %v2259, %v2291
        %v2297 = vsub.f32 %v2260, %v2291
        %v2298 = vsub.f32 %v2261, %v2291
        %v2299 = vsub.f32 %v2262, %v2291
        %v2300 = vsub.f32 %v2263, %v2291
        %v2301 = vsub.f32 %v2264, %v2291
        %v2302 = vsub.f32 %v2265, %v2291
        %v2303 = vsub.f32 %v2266, %v2291
        %v2304 = vsub.f32 %v2267, %v2291
        %v2305 = vsub.f32 %v2268, %v2291
        %v2306 = vsub.f32 %v2269, %v2291
        %v2307 = vsub.f32 %v2270, %v2291
        %v2308 = vmul.f32 %v2292, 1.442695
        %v2309 = vpow.pop %v2308
        %v2310 = vmul.f32 %v2293, 1.442695
        %v2311 = vpow.pop %v2310
        %v2312 = vmul.f32 %v2294, 1.442695
        %v2313 = vpow.pop %v2312
        %v2314 = vmul.f32 %v2295, 1.442695
        %v2315 = vpow.pop %v2314
        %v2316 = vmul.f32 %v2296, 1.442695
        %v2317 = vpow.pop %v2316
        %v2318 = vmul.f32 %v2297, 1.442695
        %v2319 = vpow.pop %v2318
        %v2320 = vmul.f32 %v2298, 1.442695
        %v2321 = vpow.pop %v2320
        %v2322 = vmul.f32 %v2299, 1.442695
        %v2323 = vpow.pop %v2322
        %v2324 = vmul.f32 %v2300, 1.442695
        %v2325 = vpow.pop %v2324
        %v2326 = vmul.f32 %v2301, 1.442695
        %v2327 = vpow.pop %v2326
        %v2328 = vmul.f32 %v2302, 1.442695
        %v2329 = vpow.pop %v2328
        %v2330 = vmul.f32 %v2303, 1.442695
        %v2331 = vpow.pop %v2330
        %v2332 = vmul.f32 %v2304, 1.442695
        %v2333 = vpow.pop %v2332
        %v2334 = vmul.f32 %v2305, 1.442695
        %v2335 = vpow.pop %v2334
        %v2336 = vmul.f32 %v2306, 1.442695
        %v2337 = vpow.pop %v2336
        %v2338 = vmul.f32 %v2307, 1.442695
        %v2339 = vpow.pop %v2338
        %v2340 = vadd.f32 %v2309, %v2311
        %v2341 = vadd.f32 %v2340, %v2313
        %v2342 = vadd.f32 %v2341, %v2315
        %v2343 = vadd.f32 %v2342, %v2317
        %v2344 = vadd.f32 %v2343, %v2319
        %v2345 = vadd.f32 %v2344, %v2321
        %v2346 = vadd.f32 %v2345, %v2323
        %v2347 = vadd.f32 %v2346, %v2325
        %v2348 = vadd.f32 %v2347, %v2327
        %v2349 = vadd.f32 %v2348, %v2329
        %v2350 = vadd.f32 %v2349, %v2331
        %v2351 = vadd.f32 %v2350, %v2333
        %v2352 = vadd.f32 %v2351, %v2335
        %v2353 = vadd.f32 %v2352, %v2337
        %v2354 = vadd.f32 %v2353, %v2339
        %v2355 = vrot.slane %v2354, 4
        %v2356 = vadd.f32 %v2354, %v2355
        %v2357 = vrot.slane %v2356, 2
        %v2358 = vadd.f32 %v2356, %v2357
        %v2359 = vrot.slane %v2358, 1
        %v2360 = vadd.f32 %v2358, %v2359
        %v2361 = vrcp.pop %v2360
        %v2362 = vmul.f32 %v2309, %v2361
        %v2363 = vmul.f32 %v2311, %v2361
        %v2364 = vmul.f32 %v2313, %v2361
        %v2365 = vmul.f32 %v2315, %v2361
        %v2366 = vmul.f32 %v2317, %v2361
        %v2367 = vmul.f32 %v2319, %v2361
        %v2368 = vmul.f32 %v2321, %v2361
        %v2369 = vmul.f32 %v2323, %v2361
        %v2370 = vmul.f32 %v2325, %v2361
        %v2371 = vmul.f32 %v2327, %v2361
        %v2372 = vmul.f32 %v2329, %v2361
        %v2373 = vmul.f32 %v2331, %v2361
        %v2374 = vmul.f32 %v2333, %v2361
        %v2375 = vmul.f32 %v2335, %v2361
        %v2376 = vmul.f32 %v2337, %v2361
        %v2377 = vmul.f32 %v2339, %v2361
        %2378 = vmatpush.msra.mxu0 %v2377
        %2379 = vmatpush.msra.mxu0 %v2376
        %2380 = vmatpush.msra.mxu0 %v2375
        %2381 = vmatpush.msra.mxu0 %v2374
        %2382 = vmatpush.msra.mxu0 %v2373
        %2383 = vmatpush.msra.mxu0 %v2372
        %2384 = vmatpush.msra.mxu0 %v2371
        %2385 = vmatpush.msra.mxu0 %v2370
        %2386 = vmatpush.msra.mxu0 %v2369
        %2387 = vmatpush.msra.mxu0 %v2368
        %2388 = vmatpush.msra.mxu0 %v2367
        %2389 = vmatpush.msra.mxu0 %v2366
        %2390 = vmatpush.msra.mxu0 %v2365
        %2391 = vmatpush.msra.mxu0 %v2364
        %2392 = vmatpush.msra.mxu0 %v2363
        %2393 = vmatpush.msra.mxu0 %v2362
        %2394 = vmatmul.f32.gmra.mxu0 %v2105
        %v2395 = vpop.f32.mrf.mxu0
        %v2396 = vadd.f32 0.0, %v2395
        %2397 = vdwg.mxu0
        %s2398 = scalar_lea.vmem %s7, 16
        %v2399 = vld [vmem:[%s2398] sm:$0xf]
        %v2401 = vsel %vm405, %v2399, 0
        %v2404 = vsel %vm409, %v2396, 0
        %2406 = vmatpush.msra.mxu0 0.0
        %2407 = vmatpush.msra.mxu0 0.0
        %2408 = vmatpush.msra.mxu0 0.0
        %2409 = vmatpush.msra.mxu0 0.0
        %2410 = vmatpush.msra.mxu0 0.0
        %2411 = vmatpush.msra.mxu0 0.0
        %2412 = vmatpush.msra.mxu0 0.0
        %2413 = vmatpush.msra.mxu0 0.0
        %2414 = vmatpush.msra.mxu0 0.0
        %2415 = vmatpush.msra.mxu0 0.0
        %2416 = vmatpush.msra.mxu0 0.0
        %2417 = vmatpush.msra.mxu0 0.0
        %2418 = vmatpush.msra.mxu0 0.0
        %2419 = vmatpush.msra.mxu0 0.0
        %2420 = vmatpush.msra.mxu0 0.0
        %2421 = vmatpush.msra.mxu0 %v2404
        %2422 = vmatmul.f32.gmra.mxu0 %v2401
        %v2423 = vpop.f32.mrf.mxu0
        %v2424 = vadd.f32 0.0, %v2423
        %2425 = vdwg.mxu0
        %v2426 = vadd.f32 %v2021, %v2424
        %s2427 = scalar_lea.vmem %s3, 20
        %v2428 = vld [vmem:[%s2427] sm:$0xf]
        %s2429 = scalar_lea.vmem %s4, 20
        %v2430 = vld [vmem:[%s2429] sm:$0xf]
        %2432 = vset.pattern.permute.xlu0 0
        %2433 = vperm.xlu0 %2432, %v2430
        %v2434 = vpop.permute.xlu0 %2433
        %v2437 = vsel %vm405, %v2428, 0
        %2439 = vmatpush.msra.mxu0 0.0
        %2440 = vmatpush.msra.mxu0 0.0
        %2441 = vmatpush.msra.mxu0 0.0
        %2442 = vmatpush.msra.mxu0 0.0
        %2443 = vmatpush.msra.mxu0 0.0
        %2444 = vmatpush.msra.mxu0 0.0
        %2445 = vmatpush.msra.mxu0 0.0
        %2446 = vmatpush.msra.mxu0 0.0
        %2447 = vmatpush.msra.mxu0 0.0
        %2448 = vmatpush.msra.mxu0 0.0
        %2449 = vmatpush.msra.mxu0 0.0
        %2450 = vmatpush.msra.mxu0 0.0
        %2451 = vmatpush.msra.mxu0 0.0
        %2452 = vmatpush.msra.mxu0 0.0
        %2453 = vmatpush.msra.mxu0 0.0
        %2454 = vmatpush.msra.mxu0 %v411
        %2455 = vmatmul.f32.gmra.mxu0 %v2437
        %v2456 = vpop.f32.mrf.mxu0
        %v2457 = vadd.f32 %v2434, %v2456
        %2458 = vdwg.mxu0
        %v2459 = vmul.f32 %v2457, 0.5
        %s2460 = scalar_lea.vmem %s5, 20
        %v2461 = vld [vmem:[%s2460] sm:$0xf]
        %s2462 = scalar_lea.vmem %s6, 20
        %v2463 = vld [vmem:[%s2462] sm:$0xf]
        %2465 = vset.pattern.permute.xlu0 0
        %2466 = vperm.xlu0 %2465, %v2463
        %v2467 = vpop.permute.xlu0 %2466
        %v2470 = vsel %vm405, %v2461, 0
        %2472 = vmatpush.msra.mxu0 0.0
        %2473 = vmatpush.msra.mxu0 0.0
        %2474 = vmatpush.msra.mxu0 0.0
        %2475 = vmatpush.msra.mxu0 0.0
        %2476 = vmatpush.msra.mxu0 0.0
        %2477 = vmatpush.msra.mxu0 0.0
        %2478 = vmatpush.msra.mxu0 0.0
        %2479 = vmatpush.msra.mxu0 0.0
        %2480 = vmatpush.msra.mxu0 0.0
        %2481 = vmatpush.msra.mxu0 0.0
        %2482 = vmatpush.msra.mxu0 0.0
        %2483 = vmatpush.msra.mxu0 0.0
        %2484 = vmatpush.msra.mxu0 0.0
        %2485 = vmatpush.msra.mxu0 0.0
        %2486 = vmatpush.msra.mxu0 0.0
        %2487 = vmatpush.msra.mxu0 %v445
        %2488 = vmatmul.f32.gmra.mxu0 %v2470
        %v2489 = vpop.f32.mrf.mxu0
        %v2490 = vadd.f32 %v2467, %v2489
        %2491 = vdwg.mxu0
        %2492 = vmatpush.msra.mxu0 0.0
        %2493 = vmatpush.msra.mxu0 0.0
        %2494 = vmatpush.msra.mxu0 0.0
        %2495 = vmatpush.msra.mxu0 0.0
        %2496 = vmatpush.msra.mxu0 0.0
        %2497 = vmatpush.msra.mxu0 0.0
        %2498 = vmatpush.msra.mxu0 0.0
        %2499 = vmatpush.msra.mxu0 0.0
        %2500 = vmatpush.msra.mxu0 0.0
        %2501 = vmatpush.msra.mxu0 0.0
        %2502 = vmatpush.msra.mxu0 0.0
        %2503 = vmatpush.msra.mxu0 0.0
        %2504 = vmatpush.msra.mxu0 0.0
        %2505 = vmatpush.msra.mxu0 0.0
        %2506 = vmatpush.msra.mxu0 0.0
        %2507 = vmatpush.msra.mxu0 %v468
        %2508 = vmatmul.f32.gmra.mxu0 %v2470
        %v2509 = vpop.f32.mrf.mxu0
        %v2510 = vadd.f32 %v2467, %v2509
        %2511 = vdwg.mxu0
        %2512 = vxpose.xlu0.b32.start [1/16] %v2490, 128
        %2513 = vxpose.xlu0.b32.cont [2/16] 0.0, 128
        %2514 = vxpose.xlu0.b32.cont [3/16] 0.0, 128
        %2515 = vxpose.xlu0.b32.cont [4/16] 0.0, 128
        %2516 = vxpose.xlu0.b32.cont [5/16] 0.0, 128
        %2517 = vxpose.xlu0.b32.cont [6/16] 0.0, 128
        %2518 = vxpose.xlu0.b32.cont [7/16] 0.0, 128
        %2519 = vxpose.xlu0.b32.cont [8/16] 0.0, 128
        %2520 = vxpose.xlu0.b32.cont [9/16] 0.0, 128
        %2521 = vxpose.xlu0.b32.cont [10/16] 0.0, 128
        %2522 = vxpose.xlu0.b32.cont [11/16] 0.0, 128
        %2523 = vxpose.xlu0.b32.cont [12/16] 0.0, 128
        %2524 = vxpose.xlu0.b32.cont [13/16] 0.0, 128
        %2525 = vxpose.xlu0.b32.cont [14/16] 0.0, 128
        %2526 = vxpose.xlu0.b32.cont [15/16] 0.0, 128
        %2527 = vxpose.xlu0.b32.end [16/16] 0.0, 128
        %v2528 = vpop.trf.xlu0
        %v2529 = vpop.trf.xlu0
        %v2530 = vpop.trf.xlu0
        %v2531 = vpop.trf.xlu0
        %v2532 = vpop.trf.xlu0
        %v2533 = vpop.trf.xlu0
        %v2534 = vpop.trf.xlu0
        %v2535 = vpop.trf.xlu0
        %v2536 = vpop.trf.xlu0
        %v2537 = vpop.trf.xlu0
        %v2538 = vpop.trf.xlu0
        %v2539 = vpop.trf.xlu0
        %v2540 = vpop.trf.xlu0
        %v2541 = vpop.trf.xlu0
        %v2542 = vpop.trf.xlu0
        %v2543 = vpop.trf.xlu0
        %v2545 = vsel %vm405, %v2528, 0
        %v2548 = vsel %vm405, %v2529, 0
        %v2551 = vsel %vm405, %v2530, 0
        %v2554 = vsel %vm405, %v2531, 0
        %v2557 = vsel %vm405, %v2532, 0
        %v2560 = vsel %vm405, %v2533, 0
        %v2563 = vsel %vm405, %v2534, 0
        %v2566 = vsel %vm405, %v2535, 0
        %v2569 = vsel %vm405, %v2536, 0
        %v2572 = vsel %vm405, %v2537, 0
        %v2575 = vsel %vm405, %v2538, 0
        %v2578 = vsel %vm405, %v2539, 0
        %v2581 = vsel %vm405, %v2540, 0
        %v2584 = vsel %vm405, %v2541, 0
        %v2587 = vsel %vm405, %v2542, 0
        %v2590 = vsel %vm405, %v2543, 0
        %v2593 = vsel %vm409, %v2459, 0
        %2595 = vmatpush.msra.mxu0 0.0
        %2596 = vmatpush.msra.mxu0 0.0
        %2597 = vmatpush.msra.mxu0 0.0
        %2598 = vmatpush.msra.mxu0 0.0
        %2599 = vmatpush.msra.mxu0 0.0
        %2600 = vmatpush.msra.mxu0 0.0
        %2601 = vmatpush.msra.mxu0 0.0
        %2602 = vmatpush.msra.mxu0 0.0
        %2603 = vmatpush.msra.mxu0 0.0
        %2604 = vmatpush.msra.mxu0 0.0
        %2605 = vmatpush.msra.mxu0 0.0
        %2606 = vmatpush.msra.mxu0 0.0
        %2607 = vmatpush.msra.mxu0 0.0
        %2608 = vmatpush.msra.mxu0 0.0
        %2609 = vmatpush.msra.mxu0 0.0
        %2610 = vmatpush.msra.mxu0 %v2593
        %2611 = vmatmul.f32.gmra.mxu0 %v2545
        %v2612 = vpop.f32.mrf.mxu0
        %v2613 = vadd.f32 0.0, %v2612
        %2614 = vmatmul.f32.gmra.mxu0 %v2548
        %v2615 = vpop.f32.mrf.mxu0
        %v2616 = vadd.f32 0.0, %v2615
        %2617 = vmatmul.f32.gmra.mxu0 %v2551
        %v2618 = vpop.f32.mrf.mxu0
        %v2619 = vadd.f32 0.0, %v2618
        %2620 = vmatmul.f32.gmra.mxu0 %v2554
        %v2621 = vpop.f32.mrf.mxu0
        %v2622 = vadd.f32 0.0, %v2621
        %2623 = vmatmul.f32.gmra.mxu0 %v2557
        %v2624 = vpop.f32.mrf.mxu0
        %v2625 = vadd.f32 0.0, %v2624
        %2626 = vmatmul.f32.gmra.mxu0 %v2560
        %v2627 = vpop.f32.mrf.mxu0
        %v2628 = vadd.f32 0.0, %v2627
        %2629 = vmatmul.f32.gmra.mxu0 %v2563
        %v2630 = vpop.f32.mrf.mxu0
        %v2631 = vadd.f32 0.0, %v2630
        %2632 = vmatmul.f32.gmra.mxu0 %v2566
        %v2633 = vpop.f32.mrf.mxu0
        %v2634 = vadd.f32 0.0, %v2633
        %2635 = vmatmul.f32.gmra.mxu0 %v2569
        %v2636 = vpop.f32.mrf.mxu0
        %v2637 = vadd.f32 0.0, %v2636
        %2638 = vmatmul.f32.gmra.mxu0 %v2572
        %v2639 = vpop.f32.mrf.mxu0
        %v2640 = vadd.f32 0.0, %v2639
        %2641 = vmatmul.f32.gmra.mxu0 %v2575
        %v2642 = vpop.f32.mrf.mxu0
        %v2643 = vadd.f32 0.0, %v2642
        %2644 = vmatmul.f32.gmra.mxu0 %v2578
        %v2645 = vpop.f32.mrf.mxu0
        %v2646 = vadd.f32 0.0, %v2645
        %2647 = vmatmul.f32.gmra.mxu0 %v2581
        %v2648 = vpop.f32.mrf.mxu0
        %v2649 = vadd.f32 0.0, %v2648
        %2650 = vmatmul.f32.gmra.mxu0 %v2584
        %v2651 = vpop.f32.mrf.mxu0
        %v2652 = vadd.f32 0.0, %v2651
        %2653 = vmatmul.f32.gmra.mxu0 %v2587
        %v2654 = vpop.f32.mrf.mxu0
        %v2655 = vadd.f32 0.0, %v2654
        %2656 = vmatmul.f32.gmra.mxu0 %v2590
        %v2657 = vpop.f32.mrf.mxu0
        %v2658 = vadd.f32 0.0, %v2657
        %2659 = vdwg.mxu0
        %v2660 = vsel %vm382, -1e+30, %v2613
        %v2661 = vsel %vm383, -1e+30, %v2616
        %v2662 = vsel %vm384, -1e+30, %v2619
        %v2663 = vsel %vm385, -1e+30, %v2622
        %v2664 = vsel %vm386, -1e+30, %v2625
        %v2665 = vsel %vm387, -1e+30, %v2628
        %v2666 = vsel %vm388, -1e+30, %v2631
        %v2667 = vsel %vm389, -1e+30, %v2634
        %v2668 = vsel %vm390, -1e+30, %v2637
        %v2669 = vsel %vm391, -1e+30, %v2640
        %v2670 = vsel %vm392, -1e+30, %v2643
        %v2671 = vsel %vm393, -1e+30, %v2646
        %v2672 = vsel %vm394, -1e+30, %v2649
        %v2673 = vsel %vm395, -1e+30, %v2652
        %v2674 = vsel %vm396, -1e+30, %v2655
        %v2675 = vsel %vm397, -1e+30, %v2658
        %v2676 = vmax.f32 %v2660, %v2664
        %v2677 = vmax.f32 %v2661, %v2665
        %v2678 = vmax.f32 %v2662, %v2666
        %v2679 = vmax.f32 %v2663, %v2667
        %v2680 = vmax.f32 %v2676, %v2668
        %v2681 = vmax.f32 %v2677, %v2669
        %v2682 = vmax.f32 %v2678, %v2670
        %v2683 = vmax.f32 %v2679, %v2671
        %v2684 = vmax.f32 %v2680, %v2672
        %v2685 = vmax.f32 %v2681, %v2673
        %v2686 = vmax.f32 %v2682, %v2674
        %v2687 = vmax.f32 %v2683, %v2675
        %v2688 = vmax.f32 %v2684, %v2685
        %v2689 = vmax.f32 %v2686, %v2687
        %v2690 = vmax.f32 %v2688, %v2689
        %v2691 = vrot.slane %v2690, 4
        %v2692 = vmax.f32 %v2690, %v2691
        %v2693 = vrot.slane %v2692, 2
        %v2694 = vmax.f32 %v2692, %v2693
        %v2695 = vrot.slane %v2694, 1
        %v2696 = vmax.f32 %v2694, %v2695
        %v2697 = vsub.f32 %v2660, %v2696
        %v2698 = vsub.f32 %v2661, %v2696
        %v2699 = vsub.f32 %v2662, %v2696
        %v2700 = vsub.f32 %v2663, %v2696
        %v2701 = vsub.f32 %v2664, %v2696
        %v2702 = vsub.f32 %v2665, %v2696
        %v2703 = vsub.f32 %v2666, %v2696
        %v2704 = vsub.f32 %v2667, %v2696
        %v2705 = vsub.f32 %v2668, %v2696
        %v2706 = vsub.f32 %v2669, %v2696
        %v2707 = vsub.f32 %v2670, %v2696
        %v2708 = vsub.f32 %v2671, %v2696
        %v2709 = vsub.f32 %v2672, %v2696
        %v2710 = vsub.f32 %v2673, %v2696
        %v2711 = vsub.f32 %v2674, %v2696
        %v2712 = vsub.f32 %v2675, %v2696
        %v2713 = vmul.f32 %v2697, 1.442695
        %v2714 = vpow.pop %v2713
        %v2715 = vmul.f32 %v2698, 1.442695
        %v2716 = vpow.pop %v2715
        %v2717 = vmul.f32 %v2699, 1.442695
        %v2718 = vpow.pop %v2717
        %v2719 = vmul.f32 %v2700, 1.442695
        %v2720 = vpow.pop %v2719
        %v2721 = vmul.f32 %v2701, 1.442695
        %v2722 = vpow.pop %v2721
        %v2723 = vmul.f32 %v2702, 1.442695
        %v2724 = vpow.pop %v2723
        %v2725 = vmul.f32 %v2703, 1.442695
        %v2726 = vpow.pop %v2725
        %v2727 = vmul.f32 %v2704, 1.442695
        %v2728 = vpow.pop %v2727
        %v2729 = vmul.f32 %v2705, 1.442695
        %v2730 = vpow.pop %v2729
        %v2731 = vmul.f32 %v2706, 1.442695
        %v2732 = vpow.pop %v2731
        %v2733 = vmul.f32 %v2707, 1.442695
        %v2734 = vpow.pop %v2733
        %v2735 = vmul.f32 %v2708, 1.442695
        %v2736 = vpow.pop %v2735
        %v2737 = vmul.f32 %v2709, 1.442695
        %v2738 = vpow.pop %v2737
        %v2739 = vmul.f32 %v2710, 1.442695
        %v2740 = vpow.pop %v2739
        %v2741 = vmul.f32 %v2711, 1.442695
        %v2742 = vpow.pop %v2741
        %v2743 = vmul.f32 %v2712, 1.442695
        %v2744 = vpow.pop %v2743
        %v2745 = vadd.f32 %v2714, %v2716
        %v2746 = vadd.f32 %v2745, %v2718
        %v2747 = vadd.f32 %v2746, %v2720
        %v2748 = vadd.f32 %v2747, %v2722
        %v2749 = vadd.f32 %v2748, %v2724
        %v2750 = vadd.f32 %v2749, %v2726
        %v2751 = vadd.f32 %v2750, %v2728
        %v2752 = vadd.f32 %v2751, %v2730
        %v2753 = vadd.f32 %v2752, %v2732
        %v2754 = vadd.f32 %v2753, %v2734
        %v2755 = vadd.f32 %v2754, %v2736
        %v2756 = vadd.f32 %v2755, %v2738
        %v2757 = vadd.f32 %v2756, %v2740
        %v2758 = vadd.f32 %v2757, %v2742
        %v2759 = vadd.f32 %v2758, %v2744
        %v2760 = vrot.slane %v2759, 4
        %v2761 = vadd.f32 %v2759, %v2760
        %v2762 = vrot.slane %v2761, 2
        %v2763 = vadd.f32 %v2761, %v2762
        %v2764 = vrot.slane %v2763, 1
        %v2765 = vadd.f32 %v2763, %v2764
        %v2766 = vrcp.pop %v2765
        %v2767 = vmul.f32 %v2714, %v2766
        %v2768 = vmul.f32 %v2716, %v2766
        %v2769 = vmul.f32 %v2718, %v2766
        %v2770 = vmul.f32 %v2720, %v2766
        %v2771 = vmul.f32 %v2722, %v2766
        %v2772 = vmul.f32 %v2724, %v2766
        %v2773 = vmul.f32 %v2726, %v2766
        %v2774 = vmul.f32 %v2728, %v2766
        %v2775 = vmul.f32 %v2730, %v2766
        %v2776 = vmul.f32 %v2732, %v2766
        %v2777 = vmul.f32 %v2734, %v2766
        %v2778 = vmul.f32 %v2736, %v2766
        %v2779 = vmul.f32 %v2738, %v2766
        %v2780 = vmul.f32 %v2740, %v2766
        %v2781 = vmul.f32 %v2742, %v2766
        %v2782 = vmul.f32 %v2744, %v2766
        %2783 = vmatpush.msra.mxu0 %v2782
        %2784 = vmatpush.msra.mxu0 %v2781
        %2785 = vmatpush.msra.mxu0 %v2780
        %2786 = vmatpush.msra.mxu0 %v2779
        %2787 = vmatpush.msra.mxu0 %v2778
        %2788 = vmatpush.msra.mxu0 %v2777
        %2789 = vmatpush.msra.mxu0 %v2776
        %2790 = vmatpush.msra.mxu0 %v2775
        %2791 = vmatpush.msra.mxu0 %v2774
        %2792 = vmatpush.msra.mxu0 %v2773
        %2793 = vmatpush.msra.mxu0 %v2772
        %2794 = vmatpush.msra.mxu0 %v2771
        %2795 = vmatpush.msra.mxu0 %v2770
        %2796 = vmatpush.msra.mxu0 %v2769
        %2797 = vmatpush.msra.mxu0 %v2768
        %2798 = vmatpush.msra.mxu0 %v2767
        %2799 = vmatmul.f32.gmra.mxu0 %v2510
        %v2800 = vpop.f32.mrf.mxu0
        %v2801 = vadd.f32 0.0, %v2800
        %2802 = vdwg.mxu0
        %s2803 = scalar_lea.vmem %s7, 20
        %v2804 = vld [vmem:[%s2803] sm:$0xf]
        %v2806 = vsel %vm405, %v2804, 0
        %v2809 = vsel %vm409, %v2801, 0
        %2811 = vmatpush.msra.mxu0 0.0
        %2812 = vmatpush.msra.mxu0 0.0
        %2813 = vmatpush.msra.mxu0 0.0
        %2814 = vmatpush.msra.mxu0 0.0
        %2815 = vmatpush.msra.mxu0 0.0
        %2816 = vmatpush.msra.mxu0 0.0
        %2817 = vmatpush.msra.mxu0 0.0
        %2818 = vmatpush.msra.mxu0 0.0
        %2819 = vmatpush.msra.mxu0 0.0
        %2820 = vmatpush.msra.mxu0 0.0
        %2821 = vmatpush.msra.mxu0 0.0
        %2822 = vmatpush.msra.mxu0 0.0
        %2823 = vmatpush.msra.mxu0 0.0
        %2824 = vmatpush.msra.mxu0 0.0
        %2825 = vmatpush.msra.mxu0 0.0
        %2826 = vmatpush.msra.mxu0 %v2809
        %2827 = vmatmul.f32.gmra.mxu0 %v2806
        %v2828 = vpop.f32.mrf.mxu0
        %v2829 = vadd.f32 0.0, %v2828
        %2830 = vdwg.mxu0
        %v2831 = vadd.f32 %v2426, %v2829
        %s2832 = scalar_lea.vmem %s3, 24
        %v2833 = vld [vmem:[%s2832] sm:$0xf]
        %s2834 = scalar_lea.vmem %s4, 24
        %v2835 = vld [vmem:[%s2834] sm:$0xf]
        %2837 = vset.pattern.permute.xlu0 0
        %2838 = vperm.xlu0 %2837, %v2835
        %v2839 = vpop.permute.xlu0 %2838
        %v2842 = vsel %vm405, %v2833, 0
        %2844 = vmatpush.msra.mxu0 0.0
        %2845 = vmatpush.msra.mxu0 0.0
        %2846 = vmatpush.msra.mxu0 0.0
        %2847 = vmatpush.msra.mxu0 0.0
        %2848 = vmatpush.msra.mxu0 0.0
        %2849 = vmatpush.msra.mxu0 0.0
        %2850 = vmatpush.msra.mxu0 0.0
        %2851 = vmatpush.msra.mxu0 0.0
        %2852 = vmatpush.msra.mxu0 0.0
        %2853 = vmatpush.msra.mxu0 0.0
        %2854 = vmatpush.msra.mxu0 0.0
        %2855 = vmatpush.msra.mxu0 0.0
        %2856 = vmatpush.msra.mxu0 0.0
        %2857 = vmatpush.msra.mxu0 0.0
        %2858 = vmatpush.msra.mxu0 0.0
        %2859 = vmatpush.msra.mxu0 %v411
        %2860 = vmatmul.f32.gmra.mxu0 %v2842
        %v2861 = vpop.f32.mrf.mxu0
        %v2862 = vadd.f32 %v2839, %v2861
        %2863 = vdwg.mxu0
        %v2864 = vmul.f32 %v2862, 0.5
        %s2865 = scalar_lea.vmem %s5, 24
        %v2866 = vld [vmem:[%s2865] sm:$0xf]
        %s2867 = scalar_lea.vmem %s6, 24
        %v2868 = vld [vmem:[%s2867] sm:$0xf]
        %2870 = vset.pattern.permute.xlu0 0
        %2871 = vperm.xlu0 %2870, %v2868
        %v2872 = vpop.permute.xlu0 %2871
        %v2875 = vsel %vm405, %v2866, 0
        %2877 = vmatpush.msra.mxu0 0.0
        %2878 = vmatpush.msra.mxu0 0.0
        %2879 = vmatpush.msra.mxu0 0.0
        %2880 = vmatpush.msra.mxu0 0.0
        %2881 = vmatpush.msra.mxu0 0.0
        %2882 = vmatpush.msra.mxu0 0.0
        %2883 = vmatpush.msra.mxu0 0.0
        %2884 = vmatpush.msra.mxu0 0.0
        %2885 = vmatpush.msra.mxu0 0.0
        %2886 = vmatpush.msra.mxu0 0.0
        %2887 = vmatpush.msra.mxu0 0.0
        %2888 = vmatpush.msra.mxu0 0.0
        %2889 = vmatpush.msra.mxu0 0.0
        %2890 = vmatpush.msra.mxu0 0.0
        %2891 = vmatpush.msra.mxu0 0.0
        %2892 = vmatpush.msra.mxu0 %v445
        %2893 = vmatmul.f32.gmra.mxu0 %v2875
        %v2894 = vpop.f32.mrf.mxu0
        %v2895 = vadd.f32 %v2872, %v2894
        %2896 = vdwg.mxu0
        %2897 = vmatpush.msra.mxu0 0.0
        %2898 = vmatpush.msra.mxu0 0.0
        %2899 = vmatpush.msra.mxu0 0.0
        %2900 = vmatpush.msra.mxu0 0.0
        %2901 = vmatpush.msra.mxu0 0.0
        %2902 = vmatpush.msra.mxu0 0.0
        %2903 = vmatpush.msra.mxu0 0.0
        %2904 = vmatpush.msra.mxu0 0.0
        %2905 = vmatpush.msra.mxu0 0.0
        %2906 = vmatpush.msra.mxu0 0.0
        %2907 = vmatpush.msra.mxu0 0.0
        %2908 = vmatpush.msra.mxu0 0.0
        %2909 = vmatpush.msra.mxu0 0.0
        %2910 = vmatpush.msra.mxu0 0.0
        %2911 = vmatpush.msra.mxu0 0.0
        %2912 = vmatpush.msra.mxu0 %v468
        %2913 = vmatmul.f32.gmra.mxu0 %v2875
        %v2914 = vpop.f32.mrf.mxu0
        %v2915 = vadd.f32 %v2872, %v2914
        %2916 = vdwg.mxu0
        %2917 = vxpose.xlu0.b32.start [1/16] %v2895, 128
        %2918 = vxpose.xlu0.b32.cont [2/16] 0.0, 128
        %2919 = vxpose.xlu0.b32.cont [3/16] 0.0, 128
        %2920 = vxpose.xlu0.b32.cont [4/16] 0.0, 128
        %2921 = vxpose.xlu0.b32.cont [5/16] 0.0, 128
        %2922 = vxpose.xlu0.b32.cont [6/16] 0.0, 128
        %2923 = vxpose.xlu0.b32.cont [7/16] 0.0, 128
        %2924 = vxpose.xlu0.b32.cont [8/16] 0.0, 128
        %2925 = vxpose.xlu0.b32.cont [9/16] 0.0, 128
        %2926 = vxpose.xlu0.b32.cont [10/16] 0.0, 128
        %2927 = vxpose.xlu0.b32.cont [11/16] 0.0, 128
        %2928 = vxpose.xlu0.b32.cont [12/16] 0.0, 128
        %2929 = vxpose.xlu0.b32.cont [13/16] 0.0, 128
        %2930 = vxpose.xlu0.b32.cont [14/16] 0.0, 128
        %2931 = vxpose.xlu0.b32.cont [15/16] 0.0, 128
        %2932 = vxpose.xlu0.b32.end [16/16] 0.0, 128
        %v2933 = vpop.trf.xlu0
        %v2934 = vpop.trf.xlu0
        %v2935 = vpop.trf.xlu0
        %v2936 = vpop.trf.xlu0
        %v2937 = vpop.trf.xlu0
        %v2938 = vpop.trf.xlu0
        %v2939 = vpop.trf.xlu0
        %v2940 = vpop.trf.xlu0
        %v2941 = vpop.trf.xlu0
        %v2942 = vpop.trf.xlu0
        %v2943 = vpop.trf.xlu0
        %v2944 = vpop.trf.xlu0
        %v2945 = vpop.trf.xlu0
        %v2946 = vpop.trf.xlu0
        %v2947 = vpop.trf.xlu0
        %v2948 = vpop.trf.xlu0
        %v2950 = vsel %vm405, %v2933, 0
        %v2953 = vsel %vm405, %v2934, 0
        %v2956 = vsel %vm405, %v2935, 0
        %v2959 = vsel %vm405, %v2936, 0
        %v2962 = vsel %vm405, %v2937, 0
        %v2965 = vsel %vm405, %v2938, 0
        %v2968 = vsel %vm405, %v2939, 0
        %v2971 = vsel %vm405, %v2940, 0
        %v2974 = vsel %vm405, %v2941, 0
        %v2977 = vsel %vm405, %v2942, 0
        %v2980 = vsel %vm405, %v2943, 0
        %v2983 = vsel %vm405, %v2944, 0
        %v2986 = vsel %vm405, %v2945, 0
        %v2989 = vsel %vm405, %v2946, 0
        %v2992 = vsel %vm405, %v2947, 0
        %v2995 = vsel %vm405, %v2948, 0
        %v2998 = vsel %vm409, %v2864, 0
        %3000 = vmatpush.msra.mxu0 0.0
        %3001 = vmatpush.msra.mxu0 0.0
        %3002 = vmatpush.msra.mxu0 0.0
        %3003 = vmatpush.msra.mxu0 0.0
        %3004 = vmatpush.msra.mxu0 0.0
        %3005 = vmatpush.msra.mxu0 0.0
        %3006 = vmatpush.msra.mxu0 0.0
        %3007 = vmatpush.msra.mxu0 0.0
        %3008 = vmatpush.msra.mxu0 0.0
        %3009 = vmatpush.msra.mxu0 0.0
        %3010 = vmatpush.msra.mxu0 0.0
        %3011 = vmatpush.msra.mxu0 0.0
        %3012 = vmatpush.msra.mxu0 0.0
        %3013 = vmatpush.msra.mxu0 0.0
        %3014 = vmatpush.msra.mxu0 0.0
        %3015 = vmatpush.msra.mxu0 %v2998
        %3016 = vmatmul.f32.gmra.mxu0 %v2950
        %v3017 = vpop.f32.mrf.mxu0
        %v3018 = vadd.f32 0.0, %v3017
        %3019 = vmatmul.f32.gmra.mxu0 %v2953
        %v3020 = vpop.f32.mrf.mxu0
        %v3021 = vadd.f32 0.0, %v3020
        %3022 = vmatmul.f32.gmra.mxu0 %v2956
        %v3023 = vpop.f32.mrf.mxu0
        %v3024 = vadd.f32 0.0, %v3023
        %3025 = vmatmul.f32.gmra.mxu0 %v2959
        %v3026 = vpop.f32.mrf.mxu0
        %v3027 = vadd.f32 0.0, %v3026
        %3028 = vmatmul.f32.gmra.mxu0 %v2962
        %v3029 = vpop.f32.mrf.mxu0
        %v3030 = vadd.f32 0.0, %v3029
        %3031 = vmatmul.f32.gmra.mxu0 %v2965
        %v3032 = vpop.f32.mrf.mxu0
        %v3033 = vadd.f32 0.0, %v3032
        %3034 = vmatmul.f32.gmra.mxu0 %v2968
        %v3035 = vpop.f32.mrf.mxu0
        %v3036 = vadd.f32 0.0, %v3035
        %3037 = vmatmul.f32.gmra.mxu0 %v2971
        %v3038 = vpop.f32.mrf.mxu0
        %v3039 = vadd.f32 0.0, %v3038
        %3040 = vmatmul.f32.gmra.mxu0 %v2974
        %v3041 = vpop.f32.mrf.mxu0
        %v3042 = vadd.f32 0.0, %v3041
        %3043 = vmatmul.f32.gmra.mxu0 %v2977
        %v3044 = vpop.f32.mrf.mxu0
        %v3045 = vadd.f32 0.0, %v3044
        %3046 = vmatmul.f32.gmra.mxu0 %v2980
        %v3047 = vpop.f32.mrf.mxu0
        %v3048 = vadd.f32 0.0, %v3047
        %3049 = vmatmul.f32.gmra.mxu0 %v2983
        %v3050 = vpop.f32.mrf.mxu0
        %v3051 = vadd.f32 0.0, %v3050
        %3052 = vmatmul.f32.gmra.mxu0 %v2986
        %v3053 = vpop.f32.mrf.mxu0
        %v3054 = vadd.f32 0.0, %v3053
        %3055 = vmatmul.f32.gmra.mxu0 %v2989
        %v3056 = vpop.f32.mrf.mxu0
        %v3057 = vadd.f32 0.0, %v3056
        %3058 = vmatmul.f32.gmra.mxu0 %v2992
        %v3059 = vpop.f32.mrf.mxu0
        %v3060 = vadd.f32 0.0, %v3059
        %3061 = vmatmul.f32.gmra.mxu0 %v2995
        %v3062 = vpop.f32.mrf.mxu0
        %v3063 = vadd.f32 0.0, %v3062
        %3064 = vdwg.mxu0
        %v3065 = vsel %vm382, -1e+30, %v3018
        %v3066 = vsel %vm383, -1e+30, %v3021
        %v3067 = vsel %vm384, -1e+30, %v3024
        %v3068 = vsel %vm385, -1e+30, %v3027
        %v3069 = vsel %vm386, -1e+30, %v3030
        %v3070 = vsel %vm387, -1e+30, %v3033
        %v3071 = vsel %vm388, -1e+30, %v3036
        %v3072 = vsel %vm389, -1e+30, %v3039
        %v3073 = vsel %vm390, -1e+30, %v3042
        %v3074 = vsel %vm391, -1e+30, %v3045
        %v3075 = vsel %vm392, -1e+30, %v3048
        %v3076 = vsel %vm393, -1e+30, %v3051
        %v3077 = vsel %vm394, -1e+30, %v3054
        %v3078 = vsel %vm395, -1e+30, %v3057
        %v3079 = vsel %vm396, -1e+30, %v3060
        %v3080 = vsel %vm397, -1e+30, %v3063
        %v3081 = vmax.f32 %v3065, %v3069
        %v3082 = vmax.f32 %v3066, %v3070
        %v3083 = vmax.f32 %v3067, %v3071
        %v3084 = vmax.f32 %v3068, %v3072
        %v3085 = vmax.f32 %v3081, %v3073
        %v3086 = vmax.f32 %v3082, %v3074
        %v3087 = vmax.f32 %v3083, %v3075
        %v3088 = vmax.f32 %v3084, %v3076
        %v3089 = vmax.f32 %v3085, %v3077
        %v3090 = vmax.f32 %v3086, %v3078
        %v3091 = vmax.f32 %v3087, %v3079
        %v3092 = vmax.f32 %v3088, %v3080
        %v3093 = vmax.f32 %v3089, %v3090
        %v3094 = vmax.f32 %v3091, %v3092
        %v3095 = vmax.f32 %v3093, %v3094
        %v3096 = vrot.slane %v3095, 4
        %v3097 = vmax.f32 %v3095, %v3096
        %v3098 = vrot.slane %v3097, 2
        %v3099 = vmax.f32 %v3097, %v3098
        %v3100 = vrot.slane %v3099, 1
        %v3101 = vmax.f32 %v3099, %v3100
        %v3102 = vsub.f32 %v3065, %v3101
        %v3103 = vsub.f32 %v3066, %v3101
        %v3104 = vsub.f32 %v3067, %v3101
        %v3105 = vsub.f32 %v3068, %v3101
        %v3106 = vsub.f32 %v3069, %v3101
        %v3107 = vsub.f32 %v3070, %v3101
        %v3108 = vsub.f32 %v3071, %v3101
        %v3109 = vsub.f32 %v3072, %v3101
        %v3110 = vsub.f32 %v3073, %v3101
        %v3111 = vsub.f32 %v3074, %v3101
        %v3112 = vsub.f32 %v3075, %v3101
        %v3113 = vsub.f32 %v3076, %v3101
        %v3114 = vsub.f32 %v3077, %v3101
        %v3115 = vsub.f32 %v3078, %v3101
        %v3116 = vsub.f32 %v3079, %v3101
        %v3117 = vsub.f32 %v3080, %v3101
        %v3118 = vmul.f32 %v3102, 1.442695
        %v3119 = vpow.pop %v3118
        %v3120 = vmul.f32 %v3103, 1.442695
        %v3121 = vpow.pop %v3120
        %v3122 = vmul.f32 %v3104, 1.442695
        %v3123 = vpow.pop %v3122
        %v3124 = vmul.f32 %v3105, 1.442695
        %v3125 = vpow.pop %v3124
        %v3126 = vmul.f32 %v3106, 1.442695
        %v3127 = vpow.pop %v3126
        %v3128 = vmul.f32 %v3107, 1.442695
        %v3129 = vpow.pop %v3128
        %v3130 = vmul.f32 %v3108, 1.442695
        %v3131 = vpow.pop %v3130
        %v3132 = vmul.f32 %v3109, 1.442695
        %v3133 = vpow.pop %v3132
        %v3134 = vmul.f32 %v3110, 1.442695
        %v3135 = vpow.pop %v3134
        %v3136 = vmul.f32 %v3111, 1.442695
        %v3137 = vpow.pop %v3136
        %v3138 = vmul.f32 %v3112, 1.442695
        %v3139 = vpow.pop %v3138
        %v3140 = vmul.f32 %v3113, 1.442695
        %v3141 = vpow.pop %v3140
        %v3142 = vmul.f32 %v3114, 1.442695
        %v3143 = vpow.pop %v3142
        %v3144 = vmul.f32 %v3115, 1.442695
        %v3145 = vpow.pop %v3144
        %v3146 = vmul.f32 %v3116, 1.442695
        %v3147 = vpow.pop %v3146
        %v3148 = vmul.f32 %v3117, 1.442695
        %v3149 = vpow.pop %v3148
        %v3150 = vadd.f32 %v3119, %v3121
        %v3151 = vadd.f32 %v3150, %v3123
        %v3152 = vadd.f32 %v3151, %v3125
        %v3153 = vadd.f32 %v3152, %v3127
        %v3154 = vadd.f32 %v3153, %v3129
        %v3155 = vadd.f32 %v3154, %v3131
        %v3156 = vadd.f32 %v3155, %v3133
        %v3157 = vadd.f32 %v3156, %v3135
        %v3158 = vadd.f32 %v3157, %v3137
        %v3159 = vadd.f32 %v3158, %v3139
        %v3160 = vadd.f32 %v3159, %v3141
        %v3161 = vadd.f32 %v3160, %v3143
        %v3162 = vadd.f32 %v3161, %v3145
        %v3163 = vadd.f32 %v3162, %v3147
        %v3164 = vadd.f32 %v3163, %v3149
        %v3165 = vrot.slane %v3164, 4
        %v3166 = vadd.f32 %v3164, %v3165
        %v3167 = vrot.slane %v3166, 2
        %v3168 = vadd.f32 %v3166, %v3167
        %v3169 = vrot.slane %v3168, 1
        %v3170 = vadd.f32 %v3168, %v3169
        %v3171 = vrcp.pop %v3170
        %v3172 = vmul.f32 %v3119, %v3171
        %v3173 = vmul.f32 %v3121, %v3171
        %v3174 = vmul.f32 %v3123, %v3171
        %v3175 = vmul.f32 %v3125, %v3171
        %v3176 = vmul.f32 %v3127, %v3171
        %v3177 = vmul.f32 %v3129, %v3171
        %v3178 = vmul.f32 %v3131, %v3171
        %v3179 = vmul.f32 %v3133, %v3171
        %v3180 = vmul.f32 %v3135, %v3171
        %v3181 = vmul.f32 %v3137, %v3171
        %v3182 = vmul.f32 %v3139, %v3171
        %v3183 = vmul.f32 %v3141, %v3171
        %v3184 = vmul.f32 %v3143, %v3171
        %v3185 = vmul.f32 %v3145, %v3171
        %v3186 = vmul.f32 %v3147, %v3171
        %v3187 = vmul.f32 %v3149, %v3171
        %3188 = vmatpush.msra.mxu0 %v3187
        %3189 = vmatpush.msra.mxu0 %v3186
        %3190 = vmatpush.msra.mxu0 %v3185
        %3191 = vmatpush.msra.mxu0 %v3184
        %3192 = vmatpush.msra.mxu0 %v3183
        %3193 = vmatpush.msra.mxu0 %v3182
        %3194 = vmatpush.msra.mxu0 %v3181
        %3195 = vmatpush.msra.mxu0 %v3180
        %3196 = vmatpush.msra.mxu0 %v3179
        %3197 = vmatpush.msra.mxu0 %v3178
        %3198 = vmatpush.msra.mxu0 %v3177
        %3199 = vmatpush.msra.mxu0 %v3176
        %3200 = vmatpush.msra.mxu0 %v3175
        %3201 = vmatpush.msra.mxu0 %v3174
        %3202 = vmatpush.msra.mxu0 %v3173
        %3203 = vmatpush.msra.mxu0 %v3172
        %3204 = vmatmul.f32.gmra.mxu0 %v2915
        %v3205 = vpop.f32.mrf.mxu0
        %v3206 = vadd.f32 0.0, %v3205
        %3207 = vdwg.mxu0
        %s3208 = scalar_lea.vmem %s7, 24
        %v3209 = vld [vmem:[%s3208] sm:$0xf]
        %v3211 = vsel %vm405, %v3209, 0
        %v3214 = vsel %vm409, %v3206, 0
        %3216 = vmatpush.msra.mxu0 0.0
        %3217 = vmatpush.msra.mxu0 0.0
        %3218 = vmatpush.msra.mxu0 0.0
        %3219 = vmatpush.msra.mxu0 0.0
        %3220 = vmatpush.msra.mxu0 0.0
        %3221 = vmatpush.msra.mxu0 0.0
        %3222 = vmatpush.msra.mxu0 0.0
        %3223 = vmatpush.msra.mxu0 0.0
        %3224 = vmatpush.msra.mxu0 0.0
        %3225 = vmatpush.msra.mxu0 0.0
        %3226 = vmatpush.msra.mxu0 0.0
        %3227 = vmatpush.msra.mxu0 0.0
        %3228 = vmatpush.msra.mxu0 0.0
        %3229 = vmatpush.msra.mxu0 0.0
        %3230 = vmatpush.msra.mxu0 0.0
        %3231 = vmatpush.msra.mxu0 %v3214
        %3232 = vmatmul.f32.gmra.mxu0 %v3211
        %v3233 = vpop.f32.mrf.mxu0
        %v3234 = vadd.f32 0.0, %v3233
        %3235 = vdwg.mxu0
        %v3236 = vadd.f32 %v2831, %v3234
        %s3237 = scalar_lea.vmem %s3, 28
        %v3238 = vld [vmem:[%s3237] sm:$0xf]
        %s3239 = scalar_lea.vmem %s4, 28
        %v3240 = vld [vmem:[%s3239] sm:$0xf]
        %3242 = vset.pattern.permute.xlu0 0
        %3243 = vperm.xlu0 %3242, %v3240
        %v3244 = vpop.permute.xlu0 %3243
        %v3247 = vsel %vm405, %v3238, 0
        %3249 = vmatpush.msra.mxu0 0.0
        %3250 = vmatpush.msra.mxu0 0.0
        %3251 = vmatpush.msra.mxu0 0.0
        %3252 = vmatpush.msra.mxu0 0.0
        %3253 = vmatpush.msra.mxu0 0.0
        %3254 = vmatpush.msra.mxu0 0.0
        %3255 = vmatpush.msra.mxu0 0.0
        %3256 = vmatpush.msra.mxu0 0.0
        %3257 = vmatpush.msra.mxu0 0.0
        %3258 = vmatpush.msra.mxu0 0.0
        %3259 = vmatpush.msra.mxu0 0.0
        %3260 = vmatpush.msra.mxu0 0.0
        %3261 = vmatpush.msra.mxu0 0.0
        %3262 = vmatpush.msra.mxu0 0.0
        %3263 = vmatpush.msra.mxu0 0.0
        %3264 = vmatpush.msra.mxu0 %v411
        %3265 = vmatmul.f32.gmra.mxu0 %v3247
        %v3266 = vpop.f32.mrf.mxu0
        %v3267 = vadd.f32 %v3244, %v3266
        %3268 = vdwg.mxu0
        %v3269 = vmul.f32 %v3267, 0.5
        %s3270 = scalar_lea.vmem %s5, 28
        %v3271 = vld [vmem:[%s3270] sm:$0xf]
        %s3272 = scalar_lea.vmem %s6, 28
        %v3273 = vld [vmem:[%s3272] sm:$0xf]
        %3275 = vset.pattern.permute.xlu0 0
        %3276 = vperm.xlu0 %3275, %v3273
        %v3277 = vpop.permute.xlu0 %3276
        %v3280 = vsel %vm405, %v3271, 0
        %3282 = vmatpush.msra.mxu0 0.0
        %3283 = vmatpush.msra.mxu0 0.0
        %3284 = vmatpush.msra.mxu0 0.0
        %3285 = vmatpush.msra.mxu0 0.0
        %3286 = vmatpush.msra.mxu0 0.0
        %3287 = vmatpush.msra.mxu0 0.0
        %3288 = vmatpush.msra.mxu0 0.0
        %3289 = vmatpush.msra.mxu0 0.0
        %3290 = vmatpush.msra.mxu0 0.0
        %3291 = vmatpush.msra.mxu0 0.0
        %3292 = vmatpush.msra.mxu0 0.0
        %3293 = vmatpush.msra.mxu0 0.0
        %3294 = vmatpush.msra.mxu0 0.0
        %3295 = vmatpush.msra.mxu0 0.0
        %3296 = vmatpush.msra.mxu0 0.0
        %3297 = vmatpush.msra.mxu0 %v445
        %3298 = vmatmul.f32.gmra.mxu0 %v3280
        %v3299 = vpop.f32.mrf.mxu0
        %v3300 = vadd.f32 %v3277, %v3299
        %3301 = vdwg.mxu0
        %3302 = vmatpush.msra.mxu0 0.0
        %3303 = vmatpush.msra.mxu0 0.0
        %3304 = vmatpush.msra.mxu0 0.0
        %3305 = vmatpush.msra.mxu0 0.0
        %3306 = vmatpush.msra.mxu0 0.0
        %3307 = vmatpush.msra.mxu0 0.0
        %3308 = vmatpush.msra.mxu0 0.0
        %3309 = vmatpush.msra.mxu0 0.0
        %3310 = vmatpush.msra.mxu0 0.0
        %3311 = vmatpush.msra.mxu0 0.0
        %3312 = vmatpush.msra.mxu0 0.0
        %3313 = vmatpush.msra.mxu0 0.0
        %3314 = vmatpush.msra.mxu0 0.0
        %3315 = vmatpush.msra.mxu0 0.0
        %3316 = vmatpush.msra.mxu0 0.0
        %3317 = vmatpush.msra.mxu0 %v468
        %3318 = vmatmul.f32.gmra.mxu0 %v3280
        %v3319 = vpop.f32.mrf.mxu0
        %v3320 = vadd.f32 %v3277, %v3319
        %3321 = vdwg.mxu0
        %3322 = vxpose.xlu0.b32.start [1/16] %v3300, 128
        %3323 = vxpose.xlu0.b32.cont [2/16] 0.0, 128
        %3324 = vxpose.xlu0.b32.cont [3/16] 0.0, 128
        %3325 = vxpose.xlu0.b32.cont [4/16] 0.0, 128
        %3326 = vxpose.xlu0.b32.cont [5/16] 0.0, 128
        %3327 = vxpose.xlu0.b32.cont [6/16] 0.0, 128
        %3328 = vxpose.xlu0.b32.cont [7/16] 0.0, 128
        %3329 = vxpose.xlu0.b32.cont [8/16] 0.0, 128
        %3330 = vxpose.xlu0.b32.cont [9/16] 0.0, 128
        %3331 = vxpose.xlu0.b32.cont [10/16] 0.0, 128
        %3332 = vxpose.xlu0.b32.cont [11/16] 0.0, 128
        %3333 = vxpose.xlu0.b32.cont [12/16] 0.0, 128
        %3334 = vxpose.xlu0.b32.cont [13/16] 0.0, 128
        %3335 = vxpose.xlu0.b32.cont [14/16] 0.0, 128
        %3336 = vxpose.xlu0.b32.cont [15/16] 0.0, 128
        %3337 = vxpose.xlu0.b32.end [16/16] 0.0, 128
        %v3338 = vpop.trf.xlu0
        %v3339 = vpop.trf.xlu0
        %v3340 = vpop.trf.xlu0
        %v3341 = vpop.trf.xlu0
        %v3342 = vpop.trf.xlu0
        %v3343 = vpop.trf.xlu0
        %v3344 = vpop.trf.xlu0
        %v3345 = vpop.trf.xlu0
        %v3346 = vpop.trf.xlu0
        %v3347 = vpop.trf.xlu0
        %v3348 = vpop.trf.xlu0
        %v3349 = vpop.trf.xlu0
        %v3350 = vpop.trf.xlu0
        %v3351 = vpop.trf.xlu0
        %v3352 = vpop.trf.xlu0
        %v3353 = vpop.trf.xlu0
        %v3355 = vsel %vm405, %v3338, 0
        %v3358 = vsel %vm405, %v3339, 0
        %v3361 = vsel %vm405, %v3340, 0
        %v3364 = vsel %vm405, %v3341, 0
        %v3367 = vsel %vm405, %v3342, 0
        %v3370 = vsel %vm405, %v3343, 0
        %v3373 = vsel %vm405, %v3344, 0
        %v3376 = vsel %vm405, %v3345, 0
        %v3379 = vsel %vm405, %v3346, 0
        %v3382 = vsel %vm405, %v3347, 0
        %v3385 = vsel %vm405, %v3348, 0
        %v3388 = vsel %vm405, %v3349, 0
        %v3391 = vsel %vm405, %v3350, 0
        %v3394 = vsel %vm405, %v3351, 0
        %v3397 = vsel %vm405, %v3352, 0
        %v3400 = vsel %vm405, %v3353, 0
        %v3403 = vsel %vm409, %v3269, 0
        %3405 = vmatpush.msra.mxu0 0.0
        %3406 = vmatpush.msra.mxu0 0.0
        %3407 = vmatpush.msra.mxu0 0.0
        %3408 = vmatpush.msra.mxu0 0.0
        %3409 = vmatpush.msra.mxu0 0.0
        %3410 = vmatpush.msra.mxu0 0.0
        %3411 = vmatpush.msra.mxu0 0.0
        %3412 = vmatpush.msra.mxu0 0.0
        %3413 = vmatpush.msra.mxu0 0.0
        %3414 = vmatpush.msra.mxu0 0.0
        %3415 = vmatpush.msra.mxu0 0.0
        %3416 = vmatpush.msra.mxu0 0.0
        %3417 = vmatpush.msra.mxu0 0.0
        %3418 = vmatpush.msra.mxu0 0.0
        %3419 = vmatpush.msra.mxu0 0.0
        %3420 = vmatpush.msra.mxu0 %v3403
        %3421 = vmatmul.f32.gmra.mxu0 %v3355
        %v3422 = vpop.f32.mrf.mxu0
        %v3423 = vadd.f32 0.0, %v3422
        %3424 = vmatmul.f32.gmra.mxu0 %v3358
        %v3425 = vpop.f32.mrf.mxu0
        %v3426 = vadd.f32 0.0, %v3425
        %3427 = vmatmul.f32.gmra.mxu0 %v3361
        %v3428 = vpop.f32.mrf.mxu0
        %v3429 = vadd.f32 0.0, %v3428
        %3430 = vmatmul.f32.gmra.mxu0 %v3364
        %v3431 = vpop.f32.mrf.mxu0
        %v3432 = vadd.f32 0.0, %v3431
        %3433 = vmatmul.f32.gmra.mxu0 %v3367
        %v3434 = vpop.f32.mrf.mxu0
        %v3435 = vadd.f32 0.0, %v3434
        %3436 = vmatmul.f32.gmra.mxu0 %v3370
        %v3437 = vpop.f32.mrf.mxu0
        %v3438 = vadd.f32 0.0, %v3437
        %3439 = vmatmul.f32.gmra.mxu0 %v3373
        %v3440 = vpop.f32.mrf.mxu0
        %v3441 = vadd.f32 0.0, %v3440
        %3442 = vmatmul.f32.gmra.mxu0 %v3376
        %v3443 = vpop.f32.mrf.mxu0
        %v3444 = vadd.f32 0.0, %v3443
        %3445 = vmatmul.f32.gmra.mxu0 %v3379
        %v3446 = vpop.f32.mrf.mxu0
        %v3447 = vadd.f32 0.0, %v3446
        %3448 = vmatmul.f32.gmra.mxu0 %v3382
        %v3449 = vpop.f32.mrf.mxu0
        %v3450 = vadd.f32 0.0, %v3449
        %3451 = vmatmul.f32.gmra.mxu0 %v3385
        %v3452 = vpop.f32.mrf.mxu0
        %v3453 = vadd.f32 0.0, %v3452
        %3454 = vmatmul.f32.gmra.mxu0 %v3388
        %v3455 = vpop.f32.mrf.mxu0
        %v3456 = vadd.f32 0.0, %v3455
        %3457 = vmatmul.f32.gmra.mxu0 %v3391
        %v3458 = vpop.f32.mrf.mxu0
        %v3459 = vadd.f32 0.0, %v3458
        %3460 = vmatmul.f32.gmra.mxu0 %v3394
        %v3461 = vpop.f32.mrf.mxu0
        %v3462 = vadd.f32 0.0, %v3461
        %3463 = vmatmul.f32.gmra.mxu0 %v3397
        %v3464 = vpop.f32.mrf.mxu0
        %v3465 = vadd.f32 0.0, %v3464
        %3466 = vmatmul.f32.gmra.mxu0 %v3400
        %v3467 = vpop.f32.mrf.mxu0
        %v3468 = vadd.f32 0.0, %v3467
        %3469 = vdwg.mxu0
        %v3470 = vsel %vm382, -1e+30, %v3423
        %v3471 = vsel %vm383, -1e+30, %v3426
        %v3472 = vsel %vm384, -1e+30, %v3429
        %v3473 = vsel %vm385, -1e+30, %v3432
        %v3474 = vsel %vm386, -1e+30, %v3435
        %v3475 = vsel %vm387, -1e+30, %v3438
        %v3476 = vsel %vm388, -1e+30, %v3441
        %v3477 = vsel %vm389, -1e+30, %v3444
        %v3478 = vsel %vm390, -1e+30, %v3447
        %v3479 = vsel %vm391, -1e+30, %v3450
        %v3480 = vsel %vm392, -1e+30, %v3453
        %v3481 = vsel %vm393, -1e+30, %v3456
        %v3482 = vsel %vm394, -1e+30, %v3459
        %v3483 = vsel %vm395, -1e+30, %v3462
        %v3484 = vsel %vm396, -1e+30, %v3465
        %v3485 = vsel %vm397, -1e+30, %v3468
        %v3486 = vmax.f32 %v3470, %v3474
        %v3487 = vmax.f32 %v3471, %v3475
        %v3488 = vmax.f32 %v3472, %v3476
        %v3489 = vmax.f32 %v3473, %v3477
        %v3490 = vmax.f32 %v3486, %v3478
        %v3491 = vmax.f32 %v3487, %v3479
        %v3492 = vmax.f32 %v3488, %v3480
        %v3493 = vmax.f32 %v3489, %v3481
        %v3494 = vmax.f32 %v3490, %v3482
        %v3495 = vmax.f32 %v3491, %v3483
        %v3496 = vmax.f32 %v3492, %v3484
        %v3497 = vmax.f32 %v3493, %v3485
        %v3498 = vmax.f32 %v3494, %v3495
        %v3499 = vmax.f32 %v3496, %v3497
        %v3500 = vmax.f32 %v3498, %v3499
        %v3501 = vrot.slane %v3500, 4
        %v3502 = vmax.f32 %v3500, %v3501
        %v3503 = vrot.slane %v3502, 2
        %v3504 = vmax.f32 %v3502, %v3503
        %v3505 = vrot.slane %v3504, 1
        %v3506 = vmax.f32 %v3504, %v3505
        %v3507 = vsub.f32 %v3470, %v3506
        %v3508 = vsub.f32 %v3471, %v3506
        %v3509 = vsub.f32 %v3472, %v3506
        %v3510 = vsub.f32 %v3473, %v3506
        %v3511 = vsub.f32 %v3474, %v3506
        %v3512 = vsub.f32 %v3475, %v3506
        %v3513 = vsub.f32 %v3476, %v3506
        %v3514 = vsub.f32 %v3477, %v3506
        %v3515 = vsub.f32 %v3478, %v3506
        %v3516 = vsub.f32 %v3479, %v3506
        %v3517 = vsub.f32 %v3480, %v3506
        %v3518 = vsub.f32 %v3481, %v3506
        %v3519 = vsub.f32 %v3482, %v3506
        %v3520 = vsub.f32 %v3483, %v3506
        %v3521 = vsub.f32 %v3484, %v3506
        %v3522 = vsub.f32 %v3485, %v3506
        %v3523 = vmul.f32 %v3507, 1.442695
        %v3524 = vpow.pop %v3523
        %v3525 = vmul.f32 %v3508, 1.442695
        %v3526 = vpow.pop %v3525
        %v3527 = vmul.f32 %v3509, 1.442695
        %v3528 = vpow.pop %v3527
        %v3529 = vmul.f32 %v3510, 1.442695
        %v3530 = vpow.pop %v3529
        %v3531 = vmul.f32 %v3511, 1.442695
        %v3532 = vpow.pop %v3531
        %v3533 = vmul.f32 %v3512, 1.442695
        %v3534 = vpow.pop %v3533
        %v3535 = vmul.f32 %v3513, 1.442695
        %v3536 = vpow.pop %v3535
        %v3537 = vmul.f32 %v3514, 1.442695
        %v3538 = vpow.pop %v3537
        %v3539 = vmul.f32 %v3515, 1.442695
        %v3540 = vpow.pop %v3539
        %v3541 = vmul.f32 %v3516, 1.442695
        %v3542 = vpow.pop %v3541
        %v3543 = vmul.f32 %v3517, 1.442695
        %v3544 = vpow.pop %v3543
        %v3545 = vmul.f32 %v3518, 1.442695
        %v3546 = vpow.pop %v3545
        %v3547 = vmul.f32 %v3519, 1.442695
        %v3548 = vpow.pop %v3547
        %v3549 = vmul.f32 %v3520, 1.442695
        %v3550 = vpow.pop %v3549
        %v3551 = vmul.f32 %v3521, 1.442695
        %v3552 = vpow.pop %v3551
        %v3553 = vmul.f32 %v3522, 1.442695
        %v3554 = vpow.pop %v3553
        %v3555 = vadd.f32 %v3524, %v3526
        %v3556 = vadd.f32 %v3555, %v3528
        %v3557 = vadd.f32 %v3556, %v3530
        %v3558 = vadd.f32 %v3557, %v3532
        %v3559 = vadd.f32 %v3558, %v3534
        %v3560 = vadd.f32 %v3559, %v3536
        %v3561 = vadd.f32 %v3560, %v3538
        %v3562 = vadd.f32 %v3561, %v3540
        %v3563 = vadd.f32 %v3562, %v3542
        %v3564 = vadd.f32 %v3563, %v3544
        %v3565 = vadd.f32 %v3564, %v3546
        %v3566 = vadd.f32 %v3565, %v3548
        %v3567 = vadd.f32 %v3566, %v3550
        %v3568 = vadd.f32 %v3567, %v3552
        %v3569 = vadd.f32 %v3568, %v3554
        %v3570 = vrot.slane %v3569, 4
        %v3571 = vadd.f32 %v3569, %v3570
        %v3572 = vrot.slane %v3571, 2
        %v3573 = vadd.f32 %v3571, %v3572
        %v3574 = vrot.slane %v3573, 1
        %v3575 = vadd.f32 %v3573, %v3574
        %v3576 = vrcp.pop %v3575
        %v3577 = vmul.f32 %v3524, %v3576
        %v3578 = vmul.f32 %v3526, %v3576
        %v3579 = vmul.f32 %v3528, %v3576
        %v3580 = vmul.f32 %v3530, %v3576
        %v3581 = vmul.f32 %v3532, %v3576
        %v3582 = vmul.f32 %v3534, %v3576
        %v3583 = vmul.f32 %v3536, %v3576
        %v3584 = vmul.f32 %v3538, %v3576
        %v3585 = vmul.f32 %v3540, %v3576
        %v3586 = vmul.f32 %v3542, %v3576
        %v3587 = vmul.f32 %v3544, %v3576
        %v3588 = vmul.f32 %v3546, %v3576
        %v3589 = vmul.f32 %v3548, %v3576
        %v3590 = vmul.f32 %v3550, %v3576
        %v3591 = vmul.f32 %v3552, %v3576
        %v3592 = vmul.f32 %v3554, %v3576
        %3593 = vmatpush.msra.mxu0 %v3592
        %3594 = vmatpush.msra.mxu0 %v3591
        %3595 = vmatpush.msra.mxu0 %v3590
        %3596 = vmatpush.msra.mxu0 %v3589
        %3597 = vmatpush.msra.mxu0 %v3588
        %3598 = vmatpush.msra.mxu0 %v3587
        %3599 = vmatpush.msra.mxu0 %v3586
        %3600 = vmatpush.msra.mxu0 %v3585
        %3601 = vmatpush.msra.mxu0 %v3584
        %3602 = vmatpush.msra.mxu0 %v3583
        %3603 = vmatpush.msra.mxu0 %v3582
        %3604 = vmatpush.msra.mxu0 %v3581
        %3605 = vmatpush.msra.mxu0 %v3580
        %3606 = vmatpush.msra.mxu0 %v3579
        %3607 = vmatpush.msra.mxu0 %v3578
        %3608 = vmatpush.msra.mxu0 %v3577
        %3609 = vmatmul.f32.gmra.mxu0 %v3320
        %v3610 = vpop.f32.mrf.mxu0
        %v3611 = vadd.f32 0.0, %v3610
        %3612 = vdwg.mxu0
        %s3613 = scalar_lea.vmem %s7, 28
        %v3614 = vld [vmem:[%s3613] sm:$0xf]
        %v3616 = vsel %vm405, %v3614, 0
        %v3619 = vsel %vm409, %v3611, 0
        %3621 = vmatpush.msra.mxu0 0.0
        %3622 = vmatpush.msra.mxu0 0.0
        %3623 = vmatpush.msra.mxu0 0.0
        %3624 = vmatpush.msra.mxu0 0.0
        %3625 = vmatpush.msra.mxu0 0.0
        %3626 = vmatpush.msra.mxu0 0.0
        %3627 = vmatpush.msra.mxu0 0.0
        %3628 = vmatpush.msra.mxu0 0.0
        %3629 = vmatpush.msra.mxu0 0.0
        %3630 = vmatpush.msra.mxu0 0.0
        %3631 = vmatpush.msra.mxu0 0.0
        %3632 = vmatpush.msra.mxu0 0.0
        %3633 = vmatpush.msra.mxu0 0.0
        %3634 = vmatpush.msra.mxu0 0.0
        %3635 = vmatpush.msra.mxu0 0.0
        %3636 = vmatpush.msra.mxu0 %v3619
        %3637 = vmatmul.f32.gmra.mxu0 %v3616
        %v3638 = vpop.f32.mrf.mxu0
        %v3639 = vadd.f32 0.0, %v3638
        %3640 = vdwg.mxu0
        %v3641 = vadd.f32 %v3236, %v3639
        %v3642 = vld [vmem:[%s8] sm:$0xf]
        %3644 = vset.pattern.permute.xlu0 0
        %3645 = vperm.xlu0 %3644, %v3642
        %v3646 = vpop.permute.xlu0 %3645
        %v3648 = vadd.f32 %v3641, %v3646
        %3649 = vst [vmem:[%s349] sm:$0xf] %v3648
        %s3650 = sand.u32 %s235, 1
        %s3651 = scalar_lea.sflag [#allocation3], %s3650
        %s3652 = sand.u32 %s235, 1
        %s3653 = smul.addr %s3652, 4
        %s3654 = scalar_lea.vmem [#allocation2], %s3653
        // Predicated region
        $region57: #{multihead_attention_forward.1} parent=55 // pred_check
          %p3655 = pneg %p245
        $region58: #{multihead_attention_forward.1} parent=55 // pred_check_branch
          %3657 = sbr.rel (%p3655) target = $region60
        $region59: #{multihead_attention_forward.1} parent=55 // pred_region
          %3659 = vsyncadd %s3651, 0
          %s3660 = smul.addr %s23, 4
          %s3661 = scalar_lea.hbm %s9, %s3660
          %s3663 = sshll.u32 %s3654, 4
          %s3664 = int_to_ptr.vmem [resolvable:$true] %s3663
          %s3665 = sshll.u32 %s3661, 4
          %s3666 = int_to_ptr.hbm [resolvable:$true] %s3665
          %3668 = dma.vmem_to_hbm [thread:$0]  %s3664, 64, %s3666, %s3651
        $region60: #{multihead_attention_forward.1} parent=55 // pred_fallthru
          _
      $region56: #{multihead_attention_forward.1} parent=5 // pred_fallthru
        _
      %p3669 = scmp.le.s32.totalorder 2, %s18
      // Predicated region
      $region61: #{multihead_attention_forward.1} parent=5 // pred_check
        %p3670 = pneg %p3669
      $region62: #{multihead_attention_forward.1} parent=5 // pred_check_branch
        %3672 = sbr.rel (%p3670) target = $region64
      $region63: #{multihead_attention_forward.1} parent=5 // pred_region
        %s3673 = ssub.s32 %s18, 2
        // Predicated region
        $region65: #{multihead_attention_forward.1} parent=63 // pred_check
          %p3674 = pneg %p251
        $region66: #{multihead_attention_forward.1} parent=63 // pred_check_branch
          %3676 = sbr.rel (%p3674) target = $region68
        $region67: #{multihead_attention_forward.1} parent=63 // pred_region
          %s3677 = sand.u32 %s236, 1
          %s3678 = scalar_lea.sflag [#allocation3], %s3677
          %s3679 = sand.u32 %s236, 1
          %s3680 = smul.addr %s3679, 4
          %s3681 = scalar_lea.vmem [#allocation2], %s3680
          %3683 = dma.done %s3678, 64
        $region68: #{multihead_attention_forward.1} parent=63 // pred_fallthru
          _
      $region64: #{multihead_attention_forward.1} parent=5 // pred_fallthru
        _
    $region6: #{multihead_attention_forward.1} parent=1 // loop_footer
      %s22 = sadd.s32 1, %s18
    $region7: #{multihead_attention_forward.1} parent=1 // loop_footer_branch
      %17 = sbr.rel target = $region3
    $region8: #{multihead_attention_forward.1} parent=1 // loop_exit
      _
    %3684 = vsyncpa [#allocation3], 1
    %s3685 = scalar_lea.sflag [#allocation3], 1
    %3686 = vsyncpa %s3685, 1

</llo_original>
